<compile_context>
chip_gen: v6e
topology: v6e:2x2x1
jax: 0.10.0
libtpu: 0.0.40
codegen_flags: <defaults>
</compile_context>

<pallas_src>
import math

import jax
import jax.numpy as jnp
from jax.experimental import pallas as pl
from jax.experimental.pallas import tpu as pltpu

# ---------------- model hyper-params (small, consistent with the module) ----------------
HIDDEN = 32                 # hidden_dim
N_LAYERS = 2                # lstm layers
N_HEADS = 2
HEAD_DIM = HIDDEN // N_HEADS
INTD = HIDDEN // 3          # embedding dim per categorical feature (=10)
N_TESTS = 50
N_QUESTIONS = 60
N_TAGS = 30
LN_EPS = 1e-12              # BertConfig default layer_norm_eps


# ----------------------------------- fused Pallas kernel --------------------------------
def lstmattn_kernel(emb_ref, bias_ref, combw_ref, combb_ref, wih1_ref,
                    lstmw_ref, lstmb_ref, w6_ref, vpk_ref,
                    out_ref,
                    xp_ref, hseq_ref, h_ref, c_ref):
    N = emb_ref.shape[0]            # B*S rows, time-major (row = t*B + b)
    B = h_ref.shape[0]
    S = N // B
    H = HIDDEN
    H4 = 4 * H
    f32 = jnp.float32

    # ---- ModelBase: comb_proj, fused with the hoisted layer-1 input projection ----
    x_tm = jnp.dot(emb_ref[...], combw_ref[...], preferred_element_type=f32) + combb_ref[...]
    xp_ref[...] = jnp.dot(x_tm, wih1_ref[...], preferred_element_type=f32) + lstmb_ref[0:1, :]

    # gate lane order inside 4H is [f, i, o, g]; block 3 (lanes >= 3H) gets tanh.
    lane4 = jax.lax.broadcasted_iota(jnp.int32, (B, H4), 1)
    g_mask = lane4 >= 3 * H

    def lstm_scan(whh_pad):
        h_ref[...] = jnp.zeros_like(h_ref)
        c_ref[...] = jnp.zeros_like(c_ref)

        def step(t, carry):
            gates = (xp_ref[pl.ds(t * B, B), :]
                     + jnp.dot(h_ref[...], whh_pad, preferred_element_type=f32))
            # single tanh per step: sigmoid(x) = 0.5*tanh(0.5*x) + 0.5 on non-g lanes.
            t_in = jnp.where(g_mask, gates, 0.5 * gates)
            t_out = jnp.tanh(t_in)
            act = jnp.where(g_mask, t_out, 0.5 * t_out + 0.5)
            # block 0 already holds f; rotate the other gates down to block 0 via the XLU.
            o_g = pltpu.roll(act, shift=2 * H, axis=1)   # block 2 -> 0 : o
            a_g = pltpu.roll(act, shift=3 * H, axis=1)   # i (or g)
            b_g = pltpu.roll(act, shift=H, axis=1)       # g (or i)  -- product is i*g either way
            c_new = act * c_ref[...] + a_g * b_g         # f*c + i*g   (lanes >= H: bounded junk)
            h_new = o_g * jnp.tanh(c_new)                # o*tanh(c)
            c_ref[...] = c_new
            h_ref[...] = h_new
            hseq_ref[pl.ds(t * B, B), :] = h_new         # contiguous B-row block per step
            return carry

        jax.lax.fori_loop(0, S, step, 0, unroll=True)

    # ---- LSTM layer 1 (time-major output into hseq) ----
    lstm_scan(lstmw_ref[0])

    # hoisted layer-2 input projection: one matmul over all timesteps.
    # (rows >= H of the padded weight are zero, so junk lanes of hseq never contribute)
    xp_ref[...] = (jnp.dot(hseq_ref[...], lstmw_ref[1], preferred_element_type=f32)
                   + lstmb_ref[1:2, :])

    # ---- LSTM layer 2 (overwrites hseq in place; xp already holds its inputs) ----
    lstm_scan(lstmw_ref[2])

    # ------------------------------ BertEncoder (1 layer) + fc --------------------------
    x_all = hseq_ref[:, 0:H]                                  # (N, H) valid lanes only

    def lin(a, w, bias):
        return jnp.dot(a, w, preferred_element_type=f32) + bias

    def layer_norm(a, gamma, beta):
        mu = jnp.mean(a, axis=-1, keepdims=True)
        var = jnp.mean((a - mu) ** 2, axis=-1, keepdims=True)
        return (a - mu) * jax.lax.rsqrt(var + LN_EPS) * gamma + beta

    inv_sqrt_d = 1.0 / math.sqrt(HEAD_DIM)
    q_all = lin(x_all, w6_ref[0], vpk_ref[0:1, :]) * inv_sqrt_d   # fold 1/sqrt(d) into Q
    k_all = lin(x_all, w6_ref[1], vpk_ref[1:2, :])
    v_all = lin(x_all, w6_ref[2], vpk_ref[2:3, :])

    # additive bias: per-column padding (-10000) + block-diagonal batch separation (-1e9)
    bias_all = bias_ref[...]                                  # (N, N)
    lane = jax.lax.broadcasted_iota(jnp.int32, (1, H), 1)
    ctx = jnp.zeros((N, H), f32)
    for hh in range(N_HEADS):
        # mask out the other head's lanes instead of slicing 16-lane sub-blocks.
        hmask = ((lane >= hh * HEAD_DIM) & (lane < (hh + 1) * HEAD_DIM)).astype(f32)
        scores = jnp.dot(q_all * hmask, k_all.T, preferred_element_type=f32) + bias_all
        scores = scores - jnp.max(scores, axis=-1, keepdims=True)
        e = jnp.exp(scores)
        probs = e * pl.reciprocal(jnp.sum(e, axis=-1, keepdims=True), approx=True)
        # TODO(synk): attention-probs dropout skipped (eval mode).
        ctx = ctx + jnp.dot(probs, v_all * hmask, preferred_element_type=f32)

    # BertSelfOutput
    attn_out = lin(ctx, w6_ref[3], vpk_ref[3:4, :])
    ln1 = layer_norm(attn_out + x_all, vpk_ref[4:5, :], vpk_ref[5:6, :])
    # BertIntermediate (exact erf GELU) + BertOutput
    inter = lin(ln1, w6_ref[4], vpk_ref[6:7, :])
    inter = 0.5 * inter * (1.0 + jax.lax.erf(inter * (1.0 / math.sqrt(2.0))))
    ffn = lin(inter, w6_ref[5], vpk_ref[7:8, :])
    ln2 = layer_norm(ffn + ln1, vpk_ref[8:9, :], vpk_ref[9:10, :])

    # final fc(hidden -> 1), emitted as one lane-dense (1, N) row (time-major).
    wfc_row = vpk_ref[10:11, :]                               # (1, H)
    bfc = vpk_ref[11:12, 0:1]                                 # (1, 1)
    out_ref[...] = jnp.dot(wfc_row, ln2.T, preferred_element_type=f32) + bfc


# ----------------------------------- parameter init -------------------------------------
def init_params(key):
    ks = jax.random.split(key, 26)

    def nrm(k, shape, scale=0.02):
        return (scale * jax.random.normal(k, shape)).astype(jnp.float32)

    H, H4 = HIDDEN, 4 * HIDDEN
    p = {}
    p["emb_interaction"] = nrm(ks[0], (3, INTD))
    p["emb_test"] = nrm(ks[1], (N_TESTS + 1, INTD))
    p["emb_question"] = nrm(ks[2], (N_QUESTIONS + 1, INTD))
    p["emb_tag"] = nrm(ks[3], (N_TAGS + 1, INTD))
    p["comb_w"] = nrm(ks[4], (4 * INTD, H))                   # stored as (in, out) = W^T
    p["comb_b"] = nrm(ks[5], (1, H))

    # LSTM weights stored transposed (in, 4H); b = b_ih + b_hh combined.
    # Gate lane order [f, i, o, g] is an internal layout choice (fresh init, not ported).
    wih1 = nrm(ks[6], (H, H4)); whh1 = nrm(ks[7], (H, H4)); b1 = nrm(ks[8], (1, H4))
    wih2 = nrm(ks[9], (H, H4)); whh2 = nrm(ks[10], (H, H4)); b2 = nrm(ks[11], (1, H4))
    zpad = jnp.zeros((H4 - H, H4), jnp.float32)
    pad_rows = lambda w: jnp.concatenate([w, zpad], axis=0)   # rows >= H are zero
    p["wih1"] = wih1
    p["lstm_pack"] = jnp.stack([pad_rows(whh1), pad_rows(wih2), pad_rows(whh2)], axis=0)
    p["lstm_b"] = jnp.concatenate([b1, b2], axis=0)           # (2, 4H)

    # Bert encoder layer + fc (packed)
    wq = nrm(ks[12], (H, H)); bq = nrm(ks[13], (1, H))
    wk = nrm(ks[14], (H, H)); bk = nrm(ks[15], (1, H))
    wv = nrm(ks[16], (H, H)); bv = nrm(ks[17], (1, H))
    wo = nrm(ks[18], (H, H)); bo = nrm(ks[19], (1, H))
    wi = nrm(ks[20], (H, H)); bi = nrm(ks[21], (1, H))
    w2 = nrm(ks[22], (H, H)); b2o = nrm(ks[23], (1, H))
    wfc = nrm(ks[24], (1, H)); bfc = nrm(ks[25], (1, 1))
    ones = jnp.ones((1, H), jnp.float32)
    zeros = jnp.zeros((1, H), jnp.float32)
    p["w6"] = jnp.stack([wq, wk, wv, wo, wi, w2], axis=0)     # (6, H, H)
    p["vpk"] = jnp.concatenate(
        [bq, bk, bv, bo, ones, zeros, bi, b2o, ones, zeros, wfc,
         jnp.broadcast_to(bfc, (1, H))], axis=0)              # (12, H)
    return p


# ----------------------------------- forward (wrapper) ----------------------------------
def lstmattn_forward(params, test, question, tag, correct, mask, interaction):
    B, S = interaction.shape
    N = B * S

    # ModelBase embeddings (plain-JAX gather glue, fused by XLA)
    e_int = jnp.take(params["emb_interaction"], interaction, axis=0)
    e_tst = jnp.take(params["emb_test"], test, axis=0)
    e_q = jnp.take(params["emb_question"], question, axis=0)
    e_tag = jnp.take(params["emb_tag"], tag, axis=0)
    embed = jnp.concatenate([e_int, e_tst, e_q, e_tag], axis=2)        # (B, S, 4*INTD)
    emb_tm = jnp.transpose(embed, (1, 0, 2)).reshape(N, 4 * INTD)      # row = t*B + b

    # combined additive attention bias on the flattened time-major rows:
    #   padding term (1-mask)*-10000 per column + block-diagonal term forbidding
    #   cross-batch attention (so one big softmax per head replaces the per-batch loop).
    extm = (1.0 - mask.astype(jnp.float32)) * -10000.0                 # (B, S)
    col_pad = extm.T.reshape(1, N)                                     # column c=t*B+b -> extm[b,t]
    bidx = jnp.arange(N, dtype=jnp.int32) % B
    block = jnp.where(bidx[:, None] != bidx[None, :], -1e9, 0.0).astype(jnp.float32)
    attn_bias = col_pad + block                                        # (N, N)

    H4 = 4 * HIDDEN
    out_row = pl.pallas_call(
        lstmattn_kernel,
        out_shape=jax.ShapeDtypeStruct((1, N), jnp.float32),
        scratch_shapes=[
            pltpu.VMEM((N, H4), jnp.float32),   # xp_ref   : hoisted input projections
            pltpu.VMEM((N, H4), jnp.float32),   # hseq_ref : per-layer LSTM output (time-major)
            pltpu.VMEM((B, H4), jnp.float32),   # h_ref
            pltpu.VMEM((B, H4), jnp.float32),   # c_ref
        ],
    )(emb_tm, attn_bias,
      params["comb_w"], params["comb_b"], params["wih1"],
      params["lstm_pack"], params["lstm_b"], params["w6"], params["vpk"])

    # kernel output is time-major (1, B*S); de-interleave to (B, S) outside (16-float glue).
    return out_row[0].reshape(S, B).T                                   # (B, S)


# --------------------------------------- driver -----------------------------------------
if __name__ == "__main__":
    key = jax.random.PRNGKey(0)
    pkey, dkey = jax.random.split(key)
    params = init_params(pkey)

    B, S = 2, 8
    ks = jax.random.split(dkey, 5)
    test = jax.random.randint(ks[0], (B, S), 0, N_TESTS + 1, dtype=jnp.int32)
    question = jax.random.randint(ks[1], (B, S), 0, N_QUESTIONS + 1, dtype=jnp.int32)
    tag = jax.random.randint(ks[2], (B, S), 0, N_TAGS + 1, dtype=jnp.int32)
    correct = jax.random.randint(ks[3], (B, S), 0, 2, dtype=jnp.int32)   # unused in forward
    interaction = jax.random.randint(ks[4], (B, S), 0, 3, dtype=jnp.int32)
    mask = jnp.ones((B, S), jnp.float32).at[1, 6:].set(0.0)              # pad last 2 of batch 1

    fwd = jax.jit(lstmattn_forward)
    out = fwd(params, test, question, tag, correct, mask, interaction)
    jax.block_until_ready(out)
    assert out.shape == (B, S) and out.dtype == jnp.float32
    assert bool(jnp.all(jnp.isfinite(out)))
    print("KERNEL_OK")
</pallas_src>

<mosaic_0001>
module attributes {stable_mosaic.version = 11 : i64} {
  func.func @lstmattn_kernel(%arg0: memref<16x40xf32, #tpu.memory_space<vmem>>, %arg1: memref<16x16xf32, #tpu.memory_space<vmem>>, %arg2: memref<40x32xf32, #tpu.memory_space<vmem>>, %arg3: memref<1x32xf32, #tpu.memory_space<vmem>>, %arg4: memref<32x128xf32, #tpu.memory_space<vmem>>, %arg5: memref<3x128x128xf32, #tpu.memory_space<vmem>>, %arg6: memref<2x128xf32, #tpu.memory_space<vmem>>, %arg7: memref<6x32x32xf32, #tpu.memory_space<vmem>>, %arg8: memref<12x32xf32, #tpu.memory_space<vmem>>, %arg9: memref<1x16xf32, #tpu.memory_space<vmem>>, %arg10: memref<16x128xf32, #tpu.memory_space<vmem>>, %arg11: memref<16x128xf32, #tpu.memory_space<vmem>>, %arg12: memref<2x128xf32, #tpu.memory_space<vmem>>, %arg13: memref<2x128xf32, #tpu.memory_space<vmem>>) attributes {dimension_semantics = [], scalar_prefetch = 0 : i64, scratch_operands = 4 : i64, tpu.core_type = #tpu.core_type<tc>} {
    %c0 = arith.constant 0 : index
    %c0_0 = arith.constant 0 : index
    %0 = vector.load %arg0[%c0, %c0_0] : memref<16x40xf32, #tpu.memory_space<vmem>>, vector<16x40xf32>
    %c0_1 = arith.constant 0 : index
    %c0_2 = arith.constant 0 : index
    %1 = vector.load %arg2[%c0_1, %c0_2] : memref<40x32xf32, #tpu.memory_space<vmem>>, vector<40x32xf32>
    %cst = arith.constant dense<0.000000e+00> : vector<16x32xf32>
    %2 = tpu.matmul %0, %1, %cst {dimension_numbers = #tpu.dot_dimension_numbers<[1], [0], [0], [1], [0, 0, 1, 1], [], []>} : vector<16x40xf32>, vector<40x32xf32>, vector<16x32xf32> -> vector<16x32xf32>
    %c0_3 = arith.constant 0 : index
    %c0_4 = arith.constant 0 : index
    %3 = vector.load %arg3[%c0_3, %c0_4] : memref<1x32xf32, #tpu.memory_space<vmem>>, vector<1x32xf32>
    %4 = vector.broadcast %3 : vector<1x32xf32> to vector<16x32xf32>
    %5 = arith.addf %2, %4 : vector<16x32xf32>
    %c0_5 = arith.constant 0 : index
    %c0_6 = arith.constant 0 : index
    %6 = vector.load %arg4[%c0_5, %c0_6] : memref<32x128xf32, #tpu.memory_space<vmem>>, vector<32x128xf32>
    %cst_7 = arith.constant dense<0.000000e+00> : vector<16x128xf32>
    %7 = tpu.matmul %5, %6, %cst_7 {dimension_numbers = #tpu.dot_dimension_numbers<[1], [0], [0], [1], [0, 0, 1, 1], [], []>} : vector<16x32xf32>, vector<32x128xf32>, vector<16x128xf32> -> vector<16x128xf32>
    %c0_8 = arith.constant 0 : index
    %c0_9 = arith.constant 0 : index
    %8 = vector.load %arg6[%c0_8, %c0_9] : memref<2x128xf32, #tpu.memory_space<vmem>>, vector<1x128xf32>
    %9 = vector.broadcast %8 : vector<1x128xf32> to vector<16x128xf32>
    %10 = arith.addf %7, %9 : vector<16x128xf32>
    %c0_10 = arith.constant 0 : index
    %c0_11 = arith.constant 0 : index
    %11 = vector.load %arg10[%c0_10, %c0_11] : memref<16x128xf32, #tpu.memory_space<vmem>>, vector<16x128xf32>
    tpu.vector_store %arg10[%c0_10, %c0_11], %10 {strides = array<i32>} : memref<16x128xf32, #tpu.memory_space<vmem>>, vector<16x128xf32>,
    %12 = tpu.iota {dimensions = array<i32: 1>} : vector<2x128xi32>
    %c96_i32 = arith.constant 96 : i32
    %13 = vector.broadcast %c96_i32 : i32 to vector<2x128xi32>
    %14 = arith.cmpi sge, %12, %13 : vector<2x128xi32>
    %c0_12 = arith.constant 0 : index
    %c0_13 = arith.constant 0 : index
    %c0_14 = arith.constant 0 : index
    %15 = vector.load %arg5[%c0_12, %c0_13, %c0_14] : memref<3x128x128xf32, #tpu.memory_space<vmem>>, vector<1x128x128xf32>
    %16 = vector.shape_cast %15 : vector<1x128x128xf32> to vector<128x128xf32>
    %cst_15 = arith.constant 0.000000e+00 : f32
    %17 = vector.broadcast %cst_15 : f32 to vector<2x128xf32>
    %c0_16 = arith.constant 0 : index
    %c0_17 = arith.constant 0 : index
    %18 = vector.load %arg12[%c0_16, %c0_17] : memref<2x128xf32, #tpu.memory_space<vmem>>, vector<2x128xf32>
    tpu.vector_store %arg12[%c0_16, %c0_17], %17 {strides = array<i32>} : memref<2x128xf32, #tpu.memory_space<vmem>>, vector<2x128xf32>,
    %cst_18 = arith.constant 0.000000e+00 : f32
    %19 = vector.broadcast %cst_18 : f32 to vector<2x128xf32>
    %c0_19 = arith.constant 0 : index
    %c0_20 = arith.constant 0 : index
    %20 = vector.load %arg13[%c0_19, %c0_20] : memref<2x128xf32, #tpu.memory_space<vmem>>, vector<2x128xf32>
    tpu.vector_store %arg13[%c0_19, %c0_20], %19 {strides = array<i32>} : memref<2x128xf32, #tpu.memory_space<vmem>>, vector<2x128xf32>,
    %c0_i32 = arith.constant 0 : i32
    %c2_i32 = arith.constant 2 : i32
    %21 = arith.muli %c0_i32, %c2_i32 : i32
    %22 = arith.index_cast %21 : i32 to index
    %c0_21 = arith.constant 0 : index
    %23 = vector.load %arg10[%22, %c0_21] : memref<16x128xf32, #tpu.memory_space<vmem>>, vector<2x128xf32>
    %c0_22 = arith.constant 0 : index
    %c0_23 = arith.constant 0 : index
    %24 = vector.load %arg12[%c0_22, %c0_23] : memref<2x128xf32, #tpu.memory_space<vmem>>, vector<2x128xf32>
    %cst_24 = arith.constant dense<0.000000e+00> : vector<2x128xf32>
    %25 = tpu.matmul %24, %16, %cst_24 {dimension_numbers = #tpu.dot_dimension_numbers<[1], [0], [0], [1], [0, 0, 1, 1], [], []>} : vector<2x128xf32>, vector<128x128xf32>, vector<2x128xf32> -> vector<2x128xf32>
    %26 = arith.addf %23, %25 : vector<2x128xf32>
    %cst_25 = arith.constant 5.000000e-01 : f32
    %27 = vector.broadcast %cst_25 : f32 to vector<2x128xf32>
    %28 = arith.mulf %27, %26 : vector<2x128xf32>
    %29 = arith.select %14, %26, %28 : vector<2x128xi1>, vector<2x128xf32>
    %30 = math.tanh %29 : vector<2x128xf32>
    %cst_26 = arith.constant 5.000000e-01 : f32
    %31 = vector.broadcast %cst_26 : f32 to vector<2x128xf32>
    %32 = arith.mulf %31, %30 : vector<2x128xf32>
    %cst_27 = arith.constant 5.000000e-01 : f32
    %33 = vector.broadcast %cst_27 : f32 to vector<2x128xf32>
    %34 = arith.addf %32, %33 : vector<2x128xf32>
    %35 = arith.select %14, %30, %34 : vector<2x128xi1>, vector<2x128xf32>
    %c64_i32 = arith.constant 64 : i32
    %36 = tpu.dynamic_rotate %35 by %c64_i32 dim 1 : vector<2x128xf32>, i32 -> vector<2x128xf32>
    %c96_i32_28 = arith.constant 96 : i32
    %37 = tpu.dynamic_rotate %35 by %c96_i32_28 dim 1 : vector<2x128xf32>, i32 -> vector<2x128xf32>
    %c32_i32 = arith.constant 32 : i32
    %38 = tpu.dynamic_rotate %35 by %c32_i32 dim 1 : vector<2x128xf32>, i32 -> vector<2x128xf32>
    %c0_29 = arith.constant 0 : index
    %c0_30 = arith.constant 0 : index
    %39 = vector.load %arg13[%c0_29, %c0_30] : memref<2x128xf32, #tpu.memory_space<vmem>>, vector<2x128xf32>
    %40 = arith.mulf %35, %39 : vector<2x128xf32>
    %41 = arith.mulf %37, %38 : vector<2x128xf32>
    %42 = arith.addf %40, %41 : vector<2x128xf32>
    %43 = math.tanh %42 : vector<2x128xf32>
    %44 = arith.mulf %36, %43 : vector<2x128xf32>
    %c0_31 = arith.constant 0 : index
    %c0_32 = arith.constant 0 : index
    %45 = vector.load %arg13[%c0_31, %c0_32] : memref<2x128xf32, #tpu.memory_space<vmem>>, vector<2x128xf32>
    tpu.vector_store %arg13[%c0_31, %c0_32], %42 {strides = array<i32>} : memref<2x128xf32, #tpu.memory_space<vmem>>, vector<2x128xf32>,
    %c0_33 = arith.constant 0 : index
    %c0_34 = arith.constant 0 : index
    %46 = vector.load %arg12[%c0_33, %c0_34] : memref<2x128xf32, #tpu.memory_space<vmem>>, vector<2x128xf32>
    tpu.vector_store %arg12[%c0_33, %c0_34], %44 {strides = array<i32>} : memref<2x128xf32, #tpu.memory_space<vmem>>, vector<2x128xf32>,
    %c2_i32_35 = arith.constant 2 : i32
    %47 = arith.muli %c0_i32, %c2_i32_35 : i32
    %48 = arith.index_cast %47 : i32 to index
    %c0_36 = arith.constant 0 : index
    %49 = vector.load %arg11[%48, %c0_36] : memref<16x128xf32, #tpu.memory_space<vmem>>, vector<2x128xf32>
    tpu.vector_store %arg11[%48, %c0_36], %44 {strides = array<i32>} : memref<16x128xf32, #tpu.memory_space<vmem>>, vector<2x128xf32>,
    %c1_i32 = arith.constant 1 : i32
    %c2_i32_37 = arith.constant 2 : i32
    %50 = arith.muli %c1_i32, %c2_i32_37 : i32
    %51 = arith.index_cast %50 : i32 to index
    %c0_38 = arith.constant 0 : index
    %52 = vector.load %arg10[%51, %c0_38] : memref<16x128xf32, #tpu.memory_space<vmem>>, vector<2x128xf32>
    %c0_39 = arith.constant 0 : index
    %c0_40 = arith.constant 0 : index
    %53 = vector.load %arg12[%c0_39, %c0_40] : memref<2x128xf32, #tpu.memory_space<vmem>>, vector<2x128xf32>
    %cst_41 = arith.constant dense<0.000000e+00> : vector<2x128xf32>
    %54 = tpu.matmul %53, %16, %cst_41 {dimension_numbers = #tpu.dot_dimension_numbers<[1], [0], [0], [1], [0, 0, 1, 1], [], []>} : vector<2x128xf32>, vector<128x128xf32>, vector<2x128xf32> -> vector<2x128xf32>
    %55 = arith.addf %52, %54 : vector<2x128xf32>
    %cst_42 = arith.constant 5.000000e-01 : f32
    %56 = vector.broadcast %cst_42 : f32 to vector<2x128xf32>
    %57 = arith.mulf %56, %55 : vector<2x128xf32>
    %58 = arith.select %14, %55, %57 : vector<2x128xi1>, vector<2x128xf32>
    %59 = math.tanh %58 : vector<2x128xf32>
    %cst_43 = arith.constant 5.000000e-01 : f32
    %60 = vector.broadcast %cst_43 : f32 to vector<2x128xf32>
    %61 = arith.mulf %60, %59 : vector<2x128xf32>
    %cst_44 = arith.constant 5.000000e-01 : f32
    %62 = vector.broadcast %cst_44 : f32 to vector<2x128xf32>
    %63 = arith.addf %61, %62 : vector<2x128xf32>
    %64 = arith.select %14, %59, %63 : vector<2x128xi1>, vector<2x128xf32>
    %c64_i32_45 = arith.constant 64 : i32
    %65 = tpu.dynamic_rotate %64 by %c64_i32_45 dim 1 : vector<2x128xf32>, i32 -> vector<2x128xf32>
    %c96_i32_46 = arith.constant 96 : i32
    %66 = tpu.dynamic_rotate %64 by %c96_i32_46 dim 1 : vector<2x128xf32>, i32 -> vector<2x128xf32>
    %c32_i32_47 = arith.constant 32 : i32
    %67 = tpu.dynamic_rotate %64 by %c32_i32_47 dim 1 : vector<2x128xf32>, i32 -> vector<2x128xf32>
    %c0_48 = arith.constant 0 : index
    %c0_49 = arith.constant 0 : index
    %68 = vector.load %arg13[%c0_48, %c0_49] : memref<2x128xf32, #tpu.memory_space<vmem>>, vector<2x128xf32>
    %69 = arith.mulf %64, %68 : vector<2x128xf32>
    %70 = arith.mulf %66, %67 : vector<2x128xf32>
    %71 = arith.addf %69, %70 : vector<2x128xf32>
    %72 = math.tanh %71 : vector<2x128xf32>
    %73 = arith.mulf %65, %72 : vector<2x128xf32>
    %c0_50 = arith.constant 0 : index
    %c0_51 = arith.constant 0 : index
    %74 = vector.load %arg13[%c0_50, %c0_51] : memref<2x128xf32, #tpu.memory_space<vmem>>, vector<2x128xf32>
    tpu.vector_store %arg13[%c0_50, %c0_51], %71 {strides = array<i32>} : memref<2x128xf32, #tpu.memory_space<vmem>>, vector<2x128xf32>,
    %c0_52 = arith.constant 0 : index
    %c0_53 = arith.constant 0 : index
    %75 = vector.load %arg12[%c0_52, %c0_53] : memref<2x128xf32, #tpu.memory_space<vmem>>, vector<2x128xf32>
    tpu.vector_store %arg12[%c0_52, %c0_53], %73 {strides = array<i32>} : memref<2x128xf32, #tpu.memory_space<vmem>>, vector<2x128xf32>,
    %c2_i32_54 = arith.constant 2 : i32
    %76 = arith.muli %c1_i32, %c2_i32_54 : i32
    %77 = arith.index_cast %76 : i32 to index
    %c0_55 = arith.constant 0 : index
    %78 = vector.load %arg11[%77, %c0_55] : memref<16x128xf32, #tpu.memory_space<vmem>>, vector<2x128xf32>
    tpu.vector_store %arg11[%77, %c0_55], %73 {strides = array<i32>} : memref<16x128xf32, #tpu.memory_space<vmem>>, vector<2x128xf32>,
    %c2_i32_56 = arith.constant 2 : i32
    %c2_i32_57 = arith.constant 2 : i32
    %79 = arith.muli %c2_i32_56, %c2_i32_57 : i32
    %80 = arith.index_cast %79 : i32 to index
    %c0_58 = arith.constant 0 : index
    %81 = vector.load %arg10[%80, %c0_58] : memref<16x128xf32, #tpu.memory_space<vmem>>, vector<2x128xf32>
    %c0_59 = arith.constant 0 : index
    %c0_60 = arith.constant 0 : index
    %82 = vector.load %arg12[%c0_59, %c0_60] : memref<2x128xf32, #tpu.memory_space<vmem>>, vector<2x128xf32>
    %cst_61 = arith.constant dense<0.000000e+00> : vector<2x128xf32>
    %83 = tpu.matmul %82, %16, %cst_61 {dimension_numbers = #tpu.dot_dimension_numbers<[1], [0], [0], [1], [0, 0, 1, 1], [], []>} : vector<2x128xf32>, vector<128x128xf32>, vector<2x128xf32> -> vector<2x128xf32>
    %84 = arith.addf %81, %83 : vector<2x128xf32>
    %cst_62 = arith.constant 5.000000e-01 : f32
    %85 = vector.broadcast %cst_62 : f32 to vector<2x128xf32>
    %86 = arith.mulf %85, %84 : vector<2x128xf32>
    %87 = arith.select %14, %84, %86 : vector<2x128xi1>, vector<2x128xf32>
    %88 = math.tanh %87 : vector<2x128xf32>
    %cst_63 = arith.constant 5.000000e-01 : f32
    %89 = vector.broadcast %cst_63 : f32 to vector<2x128xf32>
    %90 = arith.mulf %89, %88 : vector<2x128xf32>
    %cst_64 = arith.constant 5.000000e-01 : f32
    %91 = vector.broadcast %cst_64 : f32 to vector<2x128xf32>
    %92 = arith.addf %90, %91 : vector<2x128xf32>
    %93 = arith.select %14, %88, %92 : vector<2x128xi1>, vector<2x128xf32>
    %c64_i32_65 = arith.constant 64 : i32
    %94 = tpu.dynamic_rotate %93 by %c64_i32_65 dim 1 : vector<2x128xf32>, i32 -> vector<2x128xf32>
    %c96_i32_66 = arith.constant 96 : i32
    %95 = tpu.dynamic_rotate %93 by %c96_i32_66 dim 1 : vector<2x128xf32>, i32 -> vector<2x128xf32>
    %c32_i32_67 = arith.constant 32 : i32
    %96 = tpu.dynamic_rotate %93 by %c32_i32_67 dim 1 : vector<2x128xf32>, i32 -> vector<2x128xf32>
    %c0_68 = arith.constant 0 : index
    %c0_69 = arith.constant 0 : index
    %97 = vector.load %arg13[%c0_68, %c0_69] : memref<2x128xf32, #tpu.memory_space<vmem>>, vector<2x128xf32>
    %98 = arith.mulf %93, %97 : vector<2x128xf32>
    %99 = arith.mulf %95, %96 : vector<2x128xf32>
    %100 = arith.addf %98, %99 : vector<2x128xf32>
    %101 = math.tanh %100 : vector<2x128xf32>
    %102 = arith.mulf %94, %101 : vector<2x128xf32>
    %c0_70 = arith.constant 0 : index
    %c0_71 = arith.constant 0 : index
    %103 = vector.load %arg13[%c0_70, %c0_71] : memref<2x128xf32, #tpu.memory_space<vmem>>, vector<2x128xf32>
    tpu.vector_store %arg13[%c0_70, %c0_71], %100 {strides = array<i32>} : memref<2x128xf32, #tpu.memory_space<vmem>>, vector<2x128xf32>,
    %c0_72 = arith.constant 0 : index
    %c0_73 = arith.constant 0 : index
    %104 = vector.load %arg12[%c0_72, %c0_73] : memref<2x128xf32, #tpu.memory_space<vmem>>, vector<2x128xf32>
    tpu.vector_store %arg12[%c0_72, %c0_73], %102 {strides = array<i32>} : memref<2x128xf32, #tpu.memory_space<vmem>>, vector<2x128xf32>,
    %c2_i32_74 = arith.constant 2 : i32
    %105 = arith.muli %c2_i32_56, %c2_i32_74 : i32
    %106 = arith.index_cast %105 : i32 to index
    %c0_75 = arith.constant 0 : index
    %107 = vector.load %arg11[%106, %c0_75] : memref<16x128xf32, #tpu.memory_space<vmem>>, vector<2x128xf32>
    tpu.vector_store %arg11[%106, %c0_75], %102 {strides = array<i32>} : memref<16x128xf32, #tpu.memory_space<vmem>>, vector<2x128xf32>,
    %c3_i32 = arith.constant 3 : i32
    %c2_i32_76 = arith.constant 2 : i32
    %108 = arith.muli %c3_i32, %c2_i32_76 : i32
    %109 = arith.index_cast %108 : i32 to index
    %c0_77 = arith.constant 0 : index
    %110 = vector.load %arg10[%109, %c0_77] : memref<16x128xf32, #tpu.memory_space<vmem>>, vector<2x128xf32>
    %c0_78 = arith.constant 0 : index
    %c0_79 = arith.constant 0 : index
    %111 = vector.load %arg12[%c0_78, %c0_79] : memref<2x128xf32, #tpu.memory_space<vmem>>, vector<2x128xf32>
    %cst_80 = arith.constant dense<0.000000e+00> : vector<2x128xf32>
    %112 = tpu.matmul %111, %16, %cst_80 {dimension_numbers = #tpu.dot_dimension_numbers<[1], [0], [0], [1], [0, 0, 1, 1], [], []>} : vector<2x128xf32>, vector<128x128xf32>, vector<2x128xf32> -> vector<2x128xf32>
    %113 = arith.addf %110, %112 : vector<2x128xf32>
    %cst_81 = arith.constant 5.000000e-01 : f32
    %114 = vector.broadcast %cst_81 : f32 to vector<2x128xf32>
    %115 = arith.mulf %114, %113 : vector<2x128xf32>
    %116 = arith.select %14, %113, %115 : vector<2x128xi1>, vector<2x128xf32>
    %117 = math.tanh %116 : vector<2x128xf32>
    %cst_82 = arith.constant 5.000000e-01 : f32
    %118 = vector.broadcast %cst_82 : f32 to vector<2x128xf32>
    %119 = arith.mulf %118, %117 : vector<2x128xf32>
    %cst_83 = arith.constant 5.000000e-01 : f32
    %120 = vector.broadcast %cst_83 : f32 to vector<2x128xf32>
    %121 = arith.addf %119, %120 : vector<2x128xf32>
    %122 = arith.select %14, %117, %121 : vector<2x128xi1>, vector<2x128xf32>
    %c64_i32_84 = arith.constant 64 : i32
    %123 = tpu.dynamic_rotate %122 by %c64_i32_84 dim 1 : vector<2x128xf32>, i32 -> vector<2x128xf32>
    %c96_i32_85 = arith.constant 96 : i32
    %124 = tpu.dynamic_rotate %122 by %c96_i32_85 dim 1 : vector<2x128xf32>, i32 -> vector<2x128xf32>
    %c32_i32_86 = arith.constant 32 : i32
    %125 = tpu.dynamic_rotate %122 by %c32_i32_86 dim 1 : vector<2x128xf32>, i32 -> vector<2x128xf32>
    %c0_87 = arith.constant 0 : index
    %c0_88 = arith.constant 0 : index
    %126 = vector.load %arg13[%c0_87, %c0_88] : memref<2x128xf32, #tpu.memory_space<vmem>>, vector<2x128xf32>
    %127 = arith.mulf %122, %126 : vector<2x128xf32>
    %128 = arith.mulf %124, %125 : vector<2x128xf32>
    %129 = arith.addf %127, %128 : vector<2x128xf32>
    %130 = math.tanh %129 : vector<2x128xf32>
    %131 = arith.mulf %123, %130 : vector<2x128xf32>
    %c0_89 = arith.constant 0 : index
    %c0_90 = arith.constant 0 : index
    %132 = vector.load %arg13[%c0_89, %c0_90] : memref<2x128xf32, #tpu.memory_space<vmem>>, vector<2x128xf32>
    tpu.vector_store %arg13[%c0_89, %c0_90], %129 {strides = array<i32>} : memref<2x128xf32, #tpu.memory_space<vmem>>, vector<2x128xf32>,
    %c0_91 = arith.constant 0 : index
    %c0_92 = arith.constant 0 : index
    %133 = vector.load %arg12[%c0_91, %c0_92] : memref<2x128xf32, #tpu.memory_space<vmem>>, vector<2x128xf32>
    tpu.vector_store %arg12[%c0_91, %c0_92], %131 {strides = array<i32>} : memref<2x128xf32, #tpu.memory_space<vmem>>, vector<2x128xf32>,
    %c2_i32_93 = arith.constant 2 : i32
    %134 = arith.muli %c3_i32, %c2_i32_93 : i32
    %135 = arith.index_cast %134 : i32 to index
    %c0_94 = arith.constant 0 : index
    %136 = vector.load %arg11[%135, %c0_94] : memref<16x128xf32, #tpu.memory_space<vmem>>, vector<2x128xf32>
    tpu.vector_store %arg11[%135, %c0_94], %131 {strides = array<i32>} : memref<16x128xf32, #tpu.memory_space<vmem>>, vector<2x128xf32>,
    %c4_i32 = arith.constant 4 : i32
    %c2_i32_95 = arith.constant 2 : i32
    %137 = arith.muli %c4_i32, %c2_i32_95 : i32
    %138 = arith.index_cast %137 : i32 to index
    %c0_96 = arith.constant 0 : index
    %139 = vector.load %arg10[%138, %c0_96] : memref<16x128xf32, #tpu.memory_space<vmem>>, vector<2x128xf32>
    %c0_97 = arith.constant 0 : index
    %c0_98 = arith.constant 0 : index
    %140 = vector.load %arg12[%c0_97, %c0_98] : memref<2x128xf32, #tpu.memory_space<vmem>>, vector<2x128xf32>
    %cst_99 = arith.constant dense<0.000000e+00> : vector<2x128xf32>
    %141 = tpu.matmul %140, %16, %cst_99 {dimension_numbers = #tpu.dot_dimension_numbers<[1], [0], [0], [1], [0, 0, 1, 1], [], []>} : vector<2x128xf32>, vector<128x128xf32>, vector<2x128xf32> -> vector<2x128xf32>
    %142 = arith.addf %139, %141 : vector<2x128xf32>
    %cst_100 = arith.constant 5.000000e-01 : f32
    %143 = vector.broadcast %cst_100 : f32 to vector<2x128xf32>
    %144 = arith.mulf %143, %142 : vector<2x128xf32>
    %145 = arith.select %14, %142, %144 : vector<2x128xi1>, vector<2x128xf32>
    %146 = math.tanh %145 : vector<2x128xf32>
    %cst_101 = arith.constant 5.000000e-01 : f32
    %147 = vector.broadcast %cst_101 : f32 to vector<2x128xf32>
    %148 = arith.mulf %147, %146 : vector<2x128xf32>
    %cst_102 = arith.constant 5.000000e-01 : f32
    %149 = vector.broadcast %cst_102 : f32 to vector<2x128xf32>
    %150 = arith.addf %148, %149 : vector<2x128xf32>
    %151 = arith.select %14, %146, %150 : vector<2x128xi1>, vector<2x128xf32>
    %c64_i32_103 = arith.constant 64 : i32
    %152 = tpu.dynamic_rotate %151 by %c64_i32_103 dim 1 : vector<2x128xf32>, i32 -> vector<2x128xf32>
    %c96_i32_104 = arith.constant 96 : i32
    %153 = tpu.dynamic_rotate %151 by %c96_i32_104 dim 1 : vector<2x128xf32>, i32 -> vector<2x128xf32>
    %c32_i32_105 = arith.constant 32 : i32
    %154 = tpu.dynamic_rotate %151 by %c32_i32_105 dim 1 : vector<2x128xf32>, i32 -> vector<2x128xf32>
    %c0_106 = arith.constant 0 : index
    %c0_107 = arith.constant 0 : index
    %155 = vector.load %arg13[%c0_106, %c0_107] : memref<2x128xf32, #tpu.memory_space<vmem>>, vector<2x128xf32>
    %156 = arith.mulf %151, %155 : vector<2x128xf32>
    %157 = arith.mulf %153, %154 : vector<2x128xf32>
    %158 = arith.addf %156, %157 : vector<2x128xf32>
    %159 = math.tanh %158 : vector<2x128xf32>
    %160 = arith.mulf %152, %159 : vector<2x128xf32>
    %c0_108 = arith.constant 0 : index
    %c0_109 = arith.constant 0 : index
    %161 = vector.load %arg13[%c0_108, %c0_109] : memref<2x128xf32, #tpu.memory_space<vmem>>, vector<2x128xf32>
    tpu.vector_store %arg13[%c0_108, %c0_109], %158 {strides = array<i32>} : memref<2x128xf32, #tpu.memory_space<vmem>>, vector<2x128xf32>,
    %c0_110 = arith.constant 0 : index
    %c0_111 = arith.constant 0 : index
    %162 = vector.load %arg12[%c0_110, %c0_111] : memref<2x128xf32, #tpu.memory_space<vmem>>, vector<2x128xf32>
    tpu.vector_store %arg12[%c0_110, %c0_111], %160 {strides = array<i32>} : memref<2x128xf32, #tpu.memory_space<vmem>>, vector<2x128xf32>,
    %c2_i32_112 = arith.constant 2 : i32
    %163 = arith.muli %c4_i32, %c2_i32_112 : i32
    %164 = arith.index_cast %163 : i32 to index
    %c0_113 = arith.constant 0 : index
    %165 = vector.load %arg11[%164, %c0_113] : memref<16x128xf32, #tpu.memory_space<vmem>>, vector<2x128xf32>
    tpu.vector_store %arg11[%164, %c0_113], %160 {strides = array<i32>} : memref<16x128xf32, #tpu.memory_space<vmem>>, vector<2x128xf32>,
    %c5_i32 = arith.constant 5 : i32
    %c2_i32_114 = arith.constant 2 : i32
    %166 = arith.muli %c5_i32, %c2_i32_114 : i32
    %167 = arith.index_cast %166 : i32 to index
    %c0_115 = arith.constant 0 : index
    %168 = vector.load %arg10[%167, %c0_115] : memref<16x128xf32, #tpu.memory_space<vmem>>, vector<2x128xf32>
    %c0_116 = arith.constant 0 : index
    %c0_117 = arith.constant 0 : index
    %169 = vector.load %arg12[%c0_116, %c0_117] : memref<2x128xf32, #tpu.memory_space<vmem>>, vector<2x128xf32>
    %cst_118 = arith.constant dense<0.000000e+00> : vector<2x128xf32>
    %170 = tpu.matmul %169, %16, %cst_118 {dimension_numbers = #tpu.dot_dimension_numbers<[1], [0], [0], [1], [0, 0, 1, 1], [], []>} : vector<2x128xf32>, vector<128x128xf32>, vector<2x128xf32> -> vector<2x128xf32>
    %171 = arith.addf %168, %170 : vector<2x128xf32>
    %cst_119 = arith.constant 5.000000e-01 : f32
    %172 = vector.broadcast %cst_119 : f32 to vector<2x128xf32>
    %173 = arith.mulf %172, %171 : vector<2x128xf32>
    %174 = arith.select %14, %171, %173 : vector<2x128xi1>, vector<2x128xf32>
    %175 = math.tanh %174 : vector<2x128xf32>
    %cst_120 = arith.constant 5.000000e-01 : f32
    %176 = vector.broadcast %cst_120 : f32 to vector<2x128xf32>
    %177 = arith.mulf %176, %175 : vector<2x128xf32>
    %cst_121 = arith.constant 5.000000e-01 : f32
    %178 = vector.broadcast %cst_121 : f32 to vector<2x128xf32>
    %179 = arith.addf %177, %178 : vector<2x128xf32>
    %180 = arith.select %14, %175, %179 : vector<2x128xi1>, vector<2x128xf32>
    %c64_i32_122 = arith.constant 64 : i32
    %181 = tpu.dynamic_rotate %180 by %c64_i32_122 dim 1 : vector<2x128xf32>, i32 -> vector<2x128xf32>
    %c96_i32_123 = arith.constant 96 : i32
    %182 = tpu.dynamic_rotate %180 by %c96_i32_123 dim 1 : vector<2x128xf32>, i32 -> vector<2x128xf32>
    %c32_i32_124 = arith.constant 32 : i32
    %183 = tpu.dynamic_rotate %180 by %c32_i32_124 dim 1 : vector<2x128xf32>, i32 -> vector<2x128xf32>
    %c0_125 = arith.constant 0 : index
    %c0_126 = arith.constant 0 : index
    %184 = vector.load %arg13[%c0_125, %c0_126] : memref<2x128xf32, #tpu.memory_space<vmem>>, vector<2x128xf32>
    %185 = arith.mulf %180, %184 : vector<2x128xf32>
    %186 = arith.mulf %182, %183 : vector<2x128xf32>
    %187 = arith.addf %185, %186 : vector<2x128xf32>
    %188 = math.tanh %187 : vector<2x128xf32>
    %189 = arith.mulf %181, %188 : vector<2x128xf32>
    %c0_127 = arith.constant 0 : index
    %c0_128 = arith.constant 0 : index
    %190 = vector.load %arg13[%c0_127, %c0_128] : memref<2x128xf32, #tpu.memory_space<vmem>>, vector<2x128xf32>
    tpu.vector_store %arg13[%c0_127, %c0_128], %187 {strides = array<i32>} : memref<2x128xf32, #tpu.memory_space<vmem>>, vector<2x128xf32>,
    %c0_129 = arith.constant 0 : index
    %c0_130 = arith.constant 0 : index
    %191 = vector.load %arg12[%c0_129, %c0_130] : memref<2x128xf32, #tpu.memory_space<vmem>>, vector<2x128xf32>
    tpu.vector_store %arg12[%c0_129, %c0_130], %189 {strides = array<i32>} : memref<2x128xf32, #tpu.memory_space<vmem>>, vector<2x128xf32>,
    %c2_i32_131 = arith.constant 2 : i32
    %192 = arith.muli %c5_i32, %c2_i32_131 : i32
    %193 = arith.index_cast %192 : i32 to index
    %c0_132 = arith.constant 0 : index
    %194 = vector.load %arg11[%193, %c0_132] : memref<16x128xf32, #tpu.memory_space<vmem>>, vector<2x128xf32>
    tpu.vector_store %arg11[%193, %c0_132], %189 {strides = array<i32>} : memref<16x128xf32, #tpu.memory_space<vmem>>, vector<2x128xf32>,
    %c6_i32 = arith.constant 6 : i32
    %c2_i32_133 = arith.constant 2 : i32
    %195 = arith.muli %c6_i32, %c2_i32_133 : i32
    %196 = arith.index_cast %195 : i32 to index
    %c0_134 = arith.constant 0 : index
    %197 = vector.load %arg10[%196, %c0_134] : memref<16x128xf32, #tpu.memory_space<vmem>>, vector<2x128xf32>
    %c0_135 = arith.constant 0 : index
    %c0_136 = arith.constant 0 : index
    %198 = vector.load %arg12[%c0_135, %c0_136] : memref<2x128xf32, #tpu.memory_space<vmem>>, vector<2x128xf32>
    %cst_137 = arith.constant dense<0.000000e+00> : vector<2x128xf32>
    %199 = tpu.matmul %198, %16, %cst_137 {dimension_numbers = #tpu.dot_dimension_numbers<[1], [0], [0], [1], [0, 0, 1, 1], [], []>} : vector<2x128xf32>, vector<128x128xf32>, vector<2x128xf32> -> vector<2x128xf32>
    %200 = arith.addf %197, %199 : vector<2x128xf32>
    %cst_138 = arith.constant 5.000000e-01 : f32
    %201 = vector.broadcast %cst_138 : f32 to vector<2x128xf32>
    %202 = arith.mulf %201, %200 : vector<2x128xf32>
    %203 = arith.select %14, %200, %202 : vector<2x128xi1>, vector<2x128xf32>
    %204 = math.tanh %203 : vector<2x128xf32>
    %cst_139 = arith.constant 5.000000e-01 : f32
    %205 = vector.broadcast %cst_139 : f32 to vector<2x128xf32>
    %206 = arith.mulf %205, %204 : vector<2x128xf32>
    %cst_140 = arith.constant 5.000000e-01 : f32
    %207 = vector.broadcast %cst_140 : f32 to vector<2x128xf32>
    %208 = arith.addf %206, %207 : vector<2x128xf32>
    %209 = arith.select %14, %204, %208 : vector<2x128xi1>, vector<2x128xf32>
    %c64_i32_141 = arith.constant 64 : i32
    %210 = tpu.dynamic_rotate %209 by %c64_i32_141 dim 1 : vector<2x128xf32>, i32 -> vector<2x128xf32>
    %c96_i32_142 = arith.constant 96 : i32
    %211 = tpu.dynamic_rotate %209 by %c96_i32_142 dim 1 : vector<2x128xf32>, i32 -> vector<2x128xf32>
    %c32_i32_143 = arith.constant 32 : i32
    %212 = tpu.dynamic_rotate %209 by %c32_i32_143 dim 1 : vector<2x128xf32>, i32 -> vector<2x128xf32>
    %c0_144 = arith.constant 0 : index
    %c0_145 = arith.constant 0 : index
    %213 = vector.load %arg13[%c0_144, %c0_145] : memref<2x128xf32, #tpu.memory_space<vmem>>, vector<2x128xf32>
    %214 = arith.mulf %209, %213 : vector<2x128xf32>
    %215 = arith.mulf %211, %212 : vector<2x128xf32>
    %216 = arith.addf %214, %215 : vector<2x128xf32>
    %217 = math.tanh %216 : vector<2x128xf32>
    %218 = arith.mulf %210, %217 : vector<2x128xf32>
    %c0_146 = arith.constant 0 : index
    %c0_147 = arith.constant 0 : index
    %219 = vector.load %arg13[%c0_146, %c0_147] : memref<2x128xf32, #tpu.memory_space<vmem>>, vector<2x128xf32>
    tpu.vector_store %arg13[%c0_146, %c0_147], %216 {strides = array<i32>} : memref<2x128xf32, #tpu.memory_space<vmem>>, vector<2x128xf32>,
    %c0_148 = arith.constant 0 : index
    %c0_149 = arith.constant 0 : index
    %220 = vector.load %arg12[%c0_148, %c0_149] : memref<2x128xf32, #tpu.memory_space<vmem>>, vector<2x128xf32>
    tpu.vector_store %arg12[%c0_148, %c0_149], %218 {strides = array<i32>} : memref<2x128xf32, #tpu.memory_space<vmem>>, vector<2x128xf32>,
    %c2_i32_150 = arith.constant 2 : i32
    %221 = arith.muli %c6_i32, %c2_i32_150 : i32
    %222 = arith.index_cast %221 : i32 to index
    %c0_151 = arith.constant 0 : index
    %223 = vector.load %arg11[%222, %c0_151] : memref<16x128xf32, #tpu.memory_space<vmem>>, vector<2x128xf32>
    tpu.vector_store %arg11[%222, %c0_151], %218 {strides = array<i32>} : memref<16x128xf32, #tpu.memory_space<vmem>>, vector<2x128xf32>,
    %c7_i32 = arith.constant 7 : i32
    %c2_i32_152 = arith.constant 2 : i32
    %224 = arith.muli %c7_i32, %c2_i32_152 : i32
    %225 = arith.index_cast %224 : i32 to index
    %c0_153 = arith.constant 0 : index
    %226 = vector.load %arg10[%225, %c0_153] : memref<16x128xf32, #tpu.memory_space<vmem>>, vector<2x128xf32>
    %c0_154 = arith.constant 0 : index
    %c0_155 = arith.constant 0 : index
    %227 = vector.load %arg12[%c0_154, %c0_155] : memref<2x128xf32, #tpu.memory_space<vmem>>, vector<2x128xf32>
    %cst_156 = arith.constant dense<0.000000e+00> : vector<2x128xf32>
    %228 = tpu.matmul %227, %16, %cst_156 {dimension_numbers = #tpu.dot_dimension_numbers<[1], [0], [0], [1], [0, 0, 1, 1], [], []>} : vector<2x128xf32>, vector<128x128xf32>, vector<2x128xf32> -> vector<2x128xf32>
    %229 = arith.addf %226, %228 : vector<2x128xf32>
    %cst_157 = arith.constant 5.000000e-01 : f32
    %230 = vector.broadcast %cst_157 : f32 to vector<2x128xf32>
    %231 = arith.mulf %230, %229 : vector<2x128xf32>
    %232 = arith.select %14, %229, %231 : vector<2x128xi1>, vector<2x128xf32>
    %233 = math.tanh %232 : vector<2x128xf32>
    %cst_158 = arith.constant 5.000000e-01 : f32
    %234 = vector.broadcast %cst_158 : f32 to vector<2x128xf32>
    %235 = arith.mulf %234, %233 : vector<2x128xf32>
    %cst_159 = arith.constant 5.000000e-01 : f32
    %236 = vector.broadcast %cst_159 : f32 to vector<2x128xf32>
    %237 = arith.addf %235, %236 : vector<2x128xf32>
    %238 = arith.select %14, %233, %237 : vector<2x128xi1>, vector<2x128xf32>
    %c64_i32_160 = arith.constant 64 : i32
    %239 = tpu.dynamic_rotate %238 by %c64_i32_160 dim 1 : vector<2x128xf32>, i32 -> vector<2x128xf32>
    %c96_i32_161 = arith.constant 96 : i32
    %240 = tpu.dynamic_rotate %238 by %c96_i32_161 dim 1 : vector<2x128xf32>, i32 -> vector<2x128xf32>
    %c32_i32_162 = arith.constant 32 : i32
    %241 = tpu.dynamic_rotate %238 by %c32_i32_162 dim 1 : vector<2x128xf32>, i32 -> vector<2x128xf32>
    %c0_163 = arith.constant 0 : index
    %c0_164 = arith.constant 0 : index
    %242 = vector.load %arg13[%c0_163, %c0_164] : memref<2x128xf32, #tpu.memory_space<vmem>>, vector<2x128xf32>
    %243 = arith.mulf %238, %242 : vector<2x128xf32>
    %244 = arith.mulf %240, %241 : vector<2x128xf32>
    %245 = arith.addf %243, %244 : vector<2x128xf32>
    %246 = math.tanh %245 : vector<2x128xf32>
    %247 = arith.mulf %239, %246 : vector<2x128xf32>
    %c0_165 = arith.constant 0 : index
    %c0_166 = arith.constant 0 : index
    %248 = vector.load %arg13[%c0_165, %c0_166] : memref<2x128xf32, #tpu.memory_space<vmem>>, vector<2x128xf32>
    tpu.vector_store %arg13[%c0_165, %c0_166], %245 {strides = array<i32>} : memref<2x128xf32, #tpu.memory_space<vmem>>, vector<2x128xf32>,
    %c0_167 = arith.constant 0 : index
    %c0_168 = arith.constant 0 : index
    %249 = vector.load %arg12[%c0_167, %c0_168] : memref<2x128xf32, #tpu.memory_space<vmem>>, vector<2x128xf32>
    tpu.vector_store %arg12[%c0_167, %c0_168], %247 {strides = array<i32>} : memref<2x128xf32, #tpu.memory_space<vmem>>, vector<2x128xf32>,
    %c2_i32_169 = arith.constant 2 : i32
    %250 = arith.muli %c7_i32, %c2_i32_169 : i32
    %251 = arith.index_cast %250 : i32 to index
    %c0_170 = arith.constant 0 : index
    %252 = vector.load %arg11[%251, %c0_170] : memref<16x128xf32, #tpu.memory_space<vmem>>, vector<2x128xf32>
    tpu.vector_store %arg11[%251, %c0_170], %247 {strides = array<i32>} : memref<16x128xf32, #tpu.memory_space<vmem>>, vector<2x128xf32>,
    %c8_i32 = arith.constant 8 : i32
    %c0_171 = arith.constant 0 : index
    %c0_172 = arith.constant 0 : index
    %253 = vector.load %arg11[%c0_171, %c0_172] : memref<16x128xf32, #tpu.memory_space<vmem>>, vector<16x128xf32>
    %c1 = arith.constant 1 : index
    %c0_173 = arith.constant 0 : index
    %c0_174 = arith.constant 0 : index
    %254 = vector.load %arg5[%c1, %c0_173, %c0_174] : memref<3x128x128xf32, #tpu.memory_space<vmem>>, vector<1x128x128xf32>
    %255 = vector.shape_cast %254 : vector<1x128x128xf32> to vector<128x128xf32>
    %cst_175 = arith.constant dense<0.000000e+00> : vector<16x128xf32>
    %256 = tpu.matmul %253, %255, %cst_175 {dimension_numbers = #tpu.dot_dimension_numbers<[1], [0], [0], [1], [0, 0, 1, 1], [], []>} : vector<16x128xf32>, vector<128x128xf32>, vector<16x128xf32> -> vector<16x128xf32>
    %c1_176 = arith.constant 1 : index
    %c0_177 = arith.constant 0 : index
    %257 = vector.load %arg6[%c1_176, %c0_177] : memref<2x128xf32, #tpu.memory_space<vmem>>, vector<1x128xf32>
    %258 = vector.broadcast %257 : vector<1x128xf32> to vector<16x128xf32>
    %259 = arith.addf %256, %258 : vector<16x128xf32>
    %c0_178 = arith.constant 0 : index
    %c0_179 = arith.constant 0 : index
    %260 = vector.load %arg10[%c0_178, %c0_179] : memref<16x128xf32, #tpu.memory_space<vmem>>, vector<16x128xf32>
    tpu.vector_store %arg10[%c0_178, %c0_179], %259 {strides = array<i32>} : memref<16x128xf32, #tpu.memory_space<vmem>>, vector<16x128xf32>,
    %c2 = arith.constant 2 : index
    %c0_180 = arith.constant 0 : index
    %c0_181 = arith.constant 0 : index
    %261 = vector.load %arg5[%c2, %c0_180, %c0_181] : memref<3x128x128xf32, #tpu.memory_space<vmem>>, vector<1x128x128xf32>
    %262 = vector.shape_cast %261 : vector<1x128x128xf32> to vector<128x128xf32>
    %cst_182 = arith.constant 0.000000e+00 : f32
    %263 = vector.broadcast %cst_182 : f32 to vector<2x128xf32>
    %c0_183 = arith.constant 0 : index
    %c0_184 = arith.constant 0 : index
    %264 = vector.load %arg12[%c0_183, %c0_184] : memref<2x128xf32, #tpu.memory_space<vmem>>, vector<2x128xf32>
    tpu.vector_store %arg12[%c0_183, %c0_184], %263 {strides = array<i32>} : memref<2x128xf32, #tpu.memory_space<vmem>>, vector<2x128xf32>,
    %cst_185 = arith.constant 0.000000e+00 : f32
    %265 = vector.broadcast %cst_185 : f32 to vector<2x128xf32>
    %c0_186 = arith.constant 0 : index
    %c0_187 = arith.constant 0 : index
    %266 = vector.load %arg13[%c0_186, %c0_187] : memref<2x128xf32, #tpu.memory_space<vmem>>, vector<2x128xf32>
    tpu.vector_store %arg13[%c0_186, %c0_187], %265 {strides = array<i32>} : memref<2x128xf32, #tpu.memory_space<vmem>>, vector<2x128xf32>,
    %c0_i32_188 = arith.constant 0 : i32
    %c2_i32_189 = arith.constant 2 : i32
    %267 = arith.muli %c0_i32_188, %c2_i32_189 : i32
    %268 = arith.index_cast %267 : i32 to index
    %c0_190 = arith.constant 0 : index
    %269 = vector.load %arg10[%268, %c0_190] : memref<16x128xf32, #tpu.memory_space<vmem>>, vector<2x128xf32>
    %c0_191 = arith.constant 0 : index
    %c0_192 = arith.constant 0 : index
    %270 = vector.load %arg12[%c0_191, %c0_192] : memref<2x128xf32, #tpu.memory_space<vmem>>, vector<2x128xf32>
    %cst_193 = arith.constant dense<0.000000e+00> : vector<2x128xf32>
    %271 = tpu.matmul %270, %262, %cst_193 {dimension_numbers = #tpu.dot_dimension_numbers<[1], [0], [0], [1], [0, 0, 1, 1], [], []>} : vector<2x128xf32>, vector<128x128xf32>, vector<2x128xf32> -> vector<2x128xf32>
    %272 = arith.addf %269, %271 : vector<2x128xf32>
    %cst_194 = arith.constant 5.000000e-01 : f32
    %273 = vector.broadcast %cst_194 : f32 to vector<2x128xf32>
    %274 = arith.mulf %273, %272 : vector<2x128xf32>
    %275 = arith.select %14, %272, %274 : vector<2x128xi1>, vector<2x128xf32>
    %276 = math.tanh %275 : vector<2x128xf32>
    %cst_195 = arith.constant 5.000000e-01 : f32
    %277 = vector.broadcast %cst_195 : f32 to vector<2x128xf32>
    %278 = arith.mulf %277, %276 : vector<2x128xf32>
    %cst_196 = arith.constant 5.000000e-01 : f32
    %279 = vector.broadcast %cst_196 : f32 to vector<2x128xf32>
    %280 = arith.addf %278, %279 : vector<2x128xf32>
    %281 = arith.select %14, %276, %280 : vector<2x128xi1>, vector<2x128xf32>
    %c64_i32_197 = arith.constant 64 : i32
    %282 = tpu.dynamic_rotate %281 by %c64_i32_197 dim 1 : vector<2x128xf32>, i32 -> vector<2x128xf32>
    %c96_i32_198 = arith.constant 96 : i32
    %283 = tpu.dynamic_rotate %281 by %c96_i32_198 dim 1 : vector<2x128xf32>, i32 -> vector<2x128xf32>
    %c32_i32_199 = arith.constant 32 : i32
    %284 = tpu.dynamic_rotate %281 by %c32_i32_199 dim 1 : vector<2x128xf32>, i32 -> vector<2x128xf32>
    %c0_200 = arith.constant 0 : index
    %c0_201 = arith.constant 0 : index
    %285 = vector.load %arg13[%c0_200, %c0_201] : memref<2x128xf32, #tpu.memory_space<vmem>>, vector<2x128xf32>
    %286 = arith.mulf %281, %285 : vector<2x128xf32>
    %287 = arith.mulf %283, %284 : vector<2x128xf32>
    %288 = arith.addf %286, %287 : vector<2x128xf32>
    %289 = math.tanh %288 : vector<2x128xf32>
    %290 = arith.mulf %282, %289 : vector<2x128xf32>
    %c0_202 = arith.constant 0 : index
    %c0_203 = arith.constant 0 : index
    %291 = vector.load %arg13[%c0_202, %c0_203] : memref<2x128xf32, #tpu.memory_space<vmem>>, vector<2x128xf32>
    tpu.vector_store %arg13[%c0_202, %c0_203], %288 {strides = array<i32>} : memref<2x128xf32, #tpu.memory_space<vmem>>, vector<2x128xf32>,
    %c0_204 = arith.constant 0 : index
    %c0_205 = arith.constant 0 : index
    %292 = vector.load %arg12[%c0_204, %c0_205] : memref<2x128xf32, #tpu.memory_space<vmem>>, vector<2x128xf32>
    tpu.vector_store %arg12[%c0_204, %c0_205], %290 {strides = array<i32>} : memref<2x128xf32, #tpu.memory_space<vmem>>, vector<2x128xf32>,
    %c2_i32_206 = arith.constant 2 : i32
    %293 = arith.muli %c0_i32_188, %c2_i32_206 : i32
    %294 = arith.index_cast %293 : i32 to index
    %c0_207 = arith.constant 0 : index
    %295 = vector.load %arg11[%294, %c0_207] : memref<16x128xf32, #tpu.memory_space<vmem>>, vector<2x128xf32>
    tpu.vector_store %arg11[%294, %c0_207], %290 {strides = array<i32>} : memref<16x128xf32, #tpu.memory_space<vmem>>, vector<2x128xf32>,
    %c1_i32_208 = arith.constant 1 : i32
    %c2_i32_209 = arith.constant 2 : i32
    %296 = arith.muli %c1_i32_208, %c2_i32_209 : i32
    %297 = arith.index_cast %296 : i32 to index
    %c0_210 = arith.constant 0 : index
    %298 = vector.load %arg10[%297, %c0_210] : memref<16x128xf32, #tpu.memory_space<vmem>>, vector<2x128xf32>
    %c0_211 = arith.constant 0 : index
    %c0_212 = arith.constant 0 : index
    %299 = vector.load %arg12[%c0_211, %c0_212] : memref<2x128xf32, #tpu.memory_space<vmem>>, vector<2x128xf32>
    %cst_213 = arith.constant dense<0.000000e+00> : vector<2x128xf32>
    %300 = tpu.matmul %299, %262, %cst_213 {dimension_numbers = #tpu.dot_dimension_numbers<[1], [0], [0], [1], [0, 0, 1, 1], [], []>} : vector<2x128xf32>, vector<128x128xf32>, vector<2x128xf32> -> vector<2x128xf32>
    %301 = arith.addf %298, %300 : vector<2x128xf32>
    %cst_214 = arith.constant 5.000000e-01 : f32
    %302 = vector.broadcast %cst_214 : f32 to vector<2x128xf32>
    %303 = arith.mulf %302, %301 : vector<2x128xf32>
    %304 = arith.select %14, %301, %303 : vector<2x128xi1>, vector<2x128xf32>
    %305 = math.tanh %304 : vector<2x128xf32>
    %cst_215 = arith.constant 5.000000e-01 : f32
    %306 = vector.broadcast %cst_215 : f32 to vector<2x128xf32>
    %307 = arith.mulf %306, %305 : vector<2x128xf32>
    %cst_216 = arith.constant 5.000000e-01 : f32
    %308 = vector.broadcast %cst_216 : f32 to vector<2x128xf32>
    %309 = arith.addf %307, %308 : vector<2x128xf32>
    %310 = arith.select %14, %305, %309 : vector<2x128xi1>, vector<2x128xf32>
    %c64_i32_217 = arith.constant 64 : i32
    %311 = tpu.dynamic_rotate %310 by %c64_i32_217 dim 1 : vector<2x128xf32>, i32 -> vector<2x128xf32>
    %c96_i32_218 = arith.constant 96 : i32
    %312 = tpu.dynamic_rotate %310 by %c96_i32_218 dim 1 : vector<2x128xf32>, i32 -> vector<2x128xf32>
    %c32_i32_219 = arith.constant 32 : i32
    %313 = tpu.dynamic_rotate %310 by %c32_i32_219 dim 1 : vector<2x128xf32>, i32 -> vector<2x128xf32>
    %c0_220 = arith.constant 0 : index
    %c0_221 = arith.constant 0 : index
    %314 = vector.load %arg13[%c0_220, %c0_221] : memref<2x128xf32, #tpu.memory_space<vmem>>, vector<2x128xf32>
    %315 = arith.mulf %310, %314 : vector<2x128xf32>
    %316 = arith.mulf %312, %313 : vector<2x128xf32>
    %317 = arith.addf %315, %316 : vector<2x128xf32>
    %318 = math.tanh %317 : vector<2x128xf32>
    %319 = arith.mulf %311, %318 : vector<2x128xf32>
    %c0_222 = arith.constant 0 : index
    %c0_223 = arith.constant 0 : index
    %320 = vector.load %arg13[%c0_222, %c0_223] : memref<2x128xf32, #tpu.memory_space<vmem>>, vector<2x128xf32>
    tpu.vector_store %arg13[%c0_222, %c0_223], %317 {strides = array<i32>} : memref<2x128xf32, #tpu.memory_space<vmem>>, vector<2x128xf32>,
    %c0_224 = arith.constant 0 : index
    %c0_225 = arith.constant 0 : index
    %321 = vector.load %arg12[%c0_224, %c0_225] : memref<2x128xf32, #tpu.memory_space<vmem>>, vector<2x128xf32>
    tpu.vector_store %arg12[%c0_224, %c0_225], %319 {strides = array<i32>} : memref<2x128xf32, #tpu.memory_space<vmem>>, vector<2x128xf32>,
    %c2_i32_226 = arith.constant 2 : i32
    %322 = arith.muli %c1_i32_208, %c2_i32_226 : i32
    %323 = arith.index_cast %322 : i32 to index
    %c0_227 = arith.constant 0 : index
    %324 = vector.load %arg11[%323, %c0_227] : memref<16x128xf32, #tpu.memory_space<vmem>>, vector<2x128xf32>
    tpu.vector_store %arg11[%323, %c0_227], %319 {strides = array<i32>} : memref<16x128xf32, #tpu.memory_space<vmem>>, vector<2x128xf32>,
    %c2_i32_228 = arith.constant 2 : i32
    %c2_i32_229 = arith.constant 2 : i32
    %325 = arith.muli %c2_i32_228, %c2_i32_229 : i32
    %326 = arith.index_cast %325 : i32 to index
    %c0_230 = arith.constant 0 : index
    %327 = vector.load %arg10[%326, %c0_230] : memref<16x128xf32, #tpu.memory_space<vmem>>, vector<2x128xf32>
    %c0_231 = arith.constant 0 : index
    %c0_232 = arith.constant 0 : index
    %328 = vector.load %arg12[%c0_231, %c0_232] : memref<2x128xf32, #tpu.memory_space<vmem>>, vector<2x128xf32>
    %cst_233 = arith.constant dense<0.000000e+00> : vector<2x128xf32>
    %329 = tpu.matmul %328, %262, %cst_233 {dimension_numbers = #tpu.dot_dimension_numbers<[1], [0], [0], [1], [0, 0, 1, 1], [], []>} : vector<2x128xf32>, vector<128x128xf32>, vector<2x128xf32> -> vector<2x128xf32>
    %330 = arith.addf %327, %329 : vector<2x128xf32>
    %cst_234 = arith.constant 5.000000e-01 : f32
    %331 = vector.broadcast %cst_234 : f32 to vector<2x128xf32>
    %332 = arith.mulf %331, %330 : vector<2x128xf32>
    %333 = arith.select %14, %330, %332 : vector<2x128xi1>, vector<2x128xf32>
    %334 = math.tanh %333 : vector<2x128xf32>
    %cst_235 = arith.constant 5.000000e-01 : f32
    %335 = vector.broadcast %cst_235 : f32 to vector<2x128xf32>
    %336 = arith.mulf %335, %334 : vector<2x128xf32>
    %cst_236 = arith.constant 5.000000e-01 : f32
    %337 = vector.broadcast %cst_236 : f32 to vector<2x128xf32>
    %338 = arith.addf %336, %337 : vector<2x128xf32>
    %339 = arith.select %14, %334, %338 : vector<2x128xi1>, vector<2x128xf32>
    %c64_i32_237 = arith.constant 64 : i32
    %340 = tpu.dynamic_rotate %339 by %c64_i32_237 dim 1 : vector<2x128xf32>, i32 -> vector<2x128xf32>
    %c96_i32_238 = arith.constant 96 : i32
    %341 = tpu.dynamic_rotate %339 by %c96_i32_238 dim 1 : vector<2x128xf32>, i32 -> vector<2x128xf32>
    %c32_i32_239 = arith.constant 32 : i32
    %342 = tpu.dynamic_rotate %339 by %c32_i32_239 dim 1 : vector<2x128xf32>, i32 -> vector<2x128xf32>
    %c0_240 = arith.constant 0 : index
    %c0_241 = arith.constant 0 : index
    %343 = vector.load %arg13[%c0_240, %c0_241] : memref<2x128xf32, #tpu.memory_space<vmem>>, vector<2x128xf32>
    %344 = arith.mulf %339, %343 : vector<2x128xf32>
    %345 = arith.mulf %341, %342 : vector<2x128xf32>
    %346 = arith.addf %344, %345 : vector<2x128xf32>
    %347 = math.tanh %346 : vector<2x128xf32>
    %348 = arith.mulf %340, %347 : vector<2x128xf32>
    %c0_242 = arith.constant 0 : index
    %c0_243 = arith.constant 0 : index
    %349 = vector.load %arg13[%c0_242, %c0_243] : memref<2x128xf32, #tpu.memory_space<vmem>>, vector<2x128xf32>
    tpu.vector_store %arg13[%c0_242, %c0_243], %346 {strides = array<i32>} : memref<2x128xf32, #tpu.memory_space<vmem>>, vector<2x128xf32>,
    %c0_244 = arith.constant 0 : index
    %c0_245 = arith.constant 0 : index
    %350 = vector.load %arg12[%c0_244, %c0_245] : memref<2x128xf32, #tpu.memory_space<vmem>>, vector<2x128xf32>
    tpu.vector_store %arg12[%c0_244, %c0_245], %348 {strides = array<i32>} : memref<2x128xf32, #tpu.memory_space<vmem>>, vector<2x128xf32>,
    %c2_i32_246 = arith.constant 2 : i32
    %351 = arith.muli %c2_i32_228, %c2_i32_246 : i32
    %352 = arith.index_cast %351 : i32 to index
    %c0_247 = arith.constant 0 : index
    %353 = vector.load %arg11[%352, %c0_247] : memref<16x128xf32, #tpu.memory_space<vmem>>, vector<2x128xf32>
    tpu.vector_store %arg11[%352, %c0_247], %348 {strides = array<i32>} : memref<16x128xf32, #tpu.memory_space<vmem>>, vector<2x128xf32>,
    %c3_i32_248 = arith.constant 3 : i32
    %c2_i32_249 = arith.constant 2 : i32
    %354 = arith.muli %c3_i32_248, %c2_i32_249 : i32
    %355 = arith.index_cast %354 : i32 to index
    %c0_250 = arith.constant 0 : index
    %356 = vector.load %arg10[%355, %c0_250] : memref<16x128xf32, #tpu.memory_space<vmem>>, vector<2x128xf32>
    %c0_251 = arith.constant 0 : index
    %c0_252 = arith.constant 0 : index
    %357 = vector.load %arg12[%c0_251, %c0_252] : memref<2x128xf32, #tpu.memory_space<vmem>>, vector<2x128xf32>
    %cst_253 = arith.constant dense<0.000000e+00> : vector<2x128xf32>
    %358 = tpu.matmul %357, %262, %cst_253 {dimension_numbers = #tpu.dot_dimension_numbers<[1], [0], [0], [1], [0, 0, 1, 1], [], []>} : vector<2x128xf32>, vector<128x128xf32>, vector<2x128xf32> -> vector<2x128xf32>
    %359 = arith.addf %356, %358 : vector<2x128xf32>
    %cst_254 = arith.constant 5.000000e-01 : f32
    %360 = vector.broadcast %cst_254 : f32 to vector<2x128xf32>
    %361 = arith.mulf %360, %359 : vector<2x128xf32>
    %362 = arith.select %14, %359, %361 : vector<2x128xi1>, vector<2x128xf32>
    %363 = math.tanh %362 : vector<2x128xf32>
    %cst_255 = arith.constant 5.000000e-01 : f32
    %364 = vector.broadcast %cst_255 : f32 to vector<2x128xf32>
    %365 = arith.mulf %364, %363 : vector<2x128xf32>
    %cst_256 = arith.constant 5.000000e-01 : f32
    %366 = vector.broadcast %cst_256 : f32 to vector<2x128xf32>
    %367 = arith.addf %365, %366 : vector<2x128xf32>
    %368 = arith.select %14, %363, %367 : vector<2x128xi1>, vector<2x128xf32>
    %c64_i32_257 = arith.constant 64 : i32
    %369 = tpu.dynamic_rotate %368 by %c64_i32_257 dim 1 : vector<2x128xf32>, i32 -> vector<2x128xf32>
    %c96_i32_258 = arith.constant 96 : i32
    %370 = tpu.dynamic_rotate %368 by %c96_i32_258 dim 1 : vector<2x128xf32>, i32 -> vector<2x128xf32>
    %c32_i32_259 = arith.constant 32 : i32
    %371 = tpu.dynamic_rotate %368 by %c32_i32_259 dim 1 : vector<2x128xf32>, i32 -> vector<2x128xf32>
    %c0_260 = arith.constant 0 : index
    %c0_261 = arith.constant 0 : index
    %372 = vector.load %arg13[%c0_260, %c0_261] : memref<2x128xf32, #tpu.memory_space<vmem>>, vector<2x128xf32>
    %373 = arith.mulf %368, %372 : vector<2x128xf32>
    %374 = arith.mulf %370, %371 : vector<2x128xf32>
    %375 = arith.addf %373, %374 : vector<2x128xf32>
    %376 = math.tanh %375 : vector<2x128xf32>
    %377 = arith.mulf %369, %376 : vector<2x128xf32>
    %c0_262 = arith.constant 0 : index
    %c0_263 = arith.constant 0 : index
    %378 = vector.load %arg13[%c0_262, %c0_263] : memref<2x128xf32, #tpu.memory_space<vmem>>, vector<2x128xf32>
    tpu.vector_store %arg13[%c0_262, %c0_263], %375 {strides = array<i32>} : memref<2x128xf32, #tpu.memory_space<vmem>>, vector<2x128xf32>,
    %c0_264 = arith.constant 0 : index
    %c0_265 = arith.constant 0 : index
    %379 = vector.load %arg12[%c0_264, %c0_265] : memref<2x128xf32, #tpu.memory_space<vmem>>, vector<2x128xf32>
    tpu.vector_store %arg12[%c0_264, %c0_265], %377 {strides = array<i32>} : memref<2x128xf32, #tpu.memory_space<vmem>>, vector<2x128xf32>,
    %c2_i32_266 = arith.constant 2 : i32
    %380 = arith.muli %c3_i32_248, %c2_i32_266 : i32
    %381 = arith.index_cast %380 : i32 to index
    %c0_267 = arith.constant 0 : index
    %382 = vector.load %arg11[%381, %c0_267] : memref<16x128xf32, #tpu.memory_space<vmem>>, vector<2x128xf32>
    tpu.vector_store %arg11[%381, %c0_267], %377 {strides = array<i32>} : memref<16x128xf32, #tpu.memory_space<vmem>>, vector<2x128xf32>,
    %c4_i32_268 = arith.constant 4 : i32
    %c2_i32_269 = arith.constant 2 : i32
    %383 = arith.muli %c4_i32_268, %c2_i32_269 : i32
    %384 = arith.index_cast %383 : i32 to index
    %c0_270 = arith.constant 0 : index
    %385 = vector.load %arg10[%384, %c0_270] : memref<16x128xf32, #tpu.memory_space<vmem>>, vector<2x128xf32>
    %c0_271 = arith.constant 0 : index
    %c0_272 = arith.constant 0 : index
    %386 = vector.load %arg12[%c0_271, %c0_272] : memref<2x128xf32, #tpu.memory_space<vmem>>, vector<2x128xf32>
    %cst_273 = arith.constant dense<0.000000e+00> : vector<2x128xf32>
    %387 = tpu.matmul %386, %262, %cst_273 {dimension_numbers = #tpu.dot_dimension_numbers<[1], [0], [0], [1], [0, 0, 1, 1], [], []>} : vector<2x128xf32>, vector<128x128xf32>, vector<2x128xf32> -> vector<2x128xf32>
    %388 = arith.addf %385, %387 : vector<2x128xf32>
    %cst_274 = arith.constant 5.000000e-01 : f32
    %389 = vector.broadcast %cst_274 : f32 to vector<2x128xf32>
    %390 = arith.mulf %389, %388 : vector<2x128xf32>
    %391 = arith.select %14, %388, %390 : vector<2x128xi1>, vector<2x128xf32>
    %392 = math.tanh %391 : vector<2x128xf32>
    %cst_275 = arith.constant 5.000000e-01 : f32
    %393 = vector.broadcast %cst_275 : f32 to vector<2x128xf32>
    %394 = arith.mulf %393, %392 : vector<2x128xf32>
    %cst_276 = arith.constant 5.000000e-01 : f32
    %395 = vector.broadcast %cst_276 : f32 to vector<2x128xf32>
    %396 = arith.addf %394, %395 : vector<2x128xf32>
    %397 = arith.select %14, %392, %396 : vector<2x128xi1>, vector<2x128xf32>
    %c64_i32_277 = arith.constant 64 : i32
    %398 = tpu.dynamic_rotate %397 by %c64_i32_277 dim 1 : vector<2x128xf32>, i32 -> vector<2x128xf32>
    %c96_i32_278 = arith.constant 96 : i32
    %399 = tpu.dynamic_rotate %397 by %c96_i32_278 dim 1 : vector<2x128xf32>, i32 -> vector<2x128xf32>
    %c32_i32_279 = arith.constant 32 : i32
    %400 = tpu.dynamic_rotate %397 by %c32_i32_279 dim 1 : vector<2x128xf32>, i32 -> vector<2x128xf32>
    %c0_280 = arith.constant 0 : index
    %c0_281 = arith.constant 0 : index
    %401 = vector.load %arg13[%c0_280, %c0_281] : memref<2x128xf32, #tpu.memory_space<vmem>>, vector<2x128xf32>
    %402 = arith.mulf %397, %401 : vector<2x128xf32>
    %403 = arith.mulf %399, %400 : vector<2x128xf32>
    %404 = arith.addf %402, %403 : vector<2x128xf32>
    %405 = math.tanh %404 : vector<2x128xf32>
    %406 = arith.mulf %398, %405 : vector<2x128xf32>
    %c0_282 = arith.constant 0 : index
    %c0_283 = arith.constant 0 : index
    %407 = vector.load %arg13[%c0_282, %c0_283] : memref<2x128xf32, #tpu.memory_space<vmem>>, vector<2x128xf32>
    tpu.vector_store %arg13[%c0_282, %c0_283], %404 {strides = array<i32>} : memref<2x128xf32, #tpu.memory_space<vmem>>, vector<2x128xf32>,
    %c0_284 = arith.constant 0 : index
    %c0_285 = arith.constant 0 : index
    %408 = vector.load %arg12[%c0_284, %c0_285] : memref<2x128xf32, #tpu.memory_space<vmem>>, vector<2x128xf32>
    tpu.vector_store %arg12[%c0_284, %c0_285], %406 {strides = array<i32>} : memref<2x128xf32, #tpu.memory_space<vmem>>, vector<2x128xf32>,
    %c2_i32_286 = arith.constant 2 : i32
    %409 = arith.muli %c4_i32_268, %c2_i32_286 : i32
    %410 = arith.index_cast %409 : i32 to index
    %c0_287 = arith.constant 0 : index
    %411 = vector.load %arg11[%410, %c0_287] : memref<16x128xf32, #tpu.memory_space<vmem>>, vector<2x128xf32>
    tpu.vector_store %arg11[%410, %c0_287], %406 {strides = array<i32>} : memref<16x128xf32, #tpu.memory_space<vmem>>, vector<2x128xf32>,
    %c5_i32_288 = arith.constant 5 : i32
    %c2_i32_289 = arith.constant 2 : i32
    %412 = arith.muli %c5_i32_288, %c2_i32_289 : i32
    %413 = arith.index_cast %412 : i32 to index
    %c0_290 = arith.constant 0 : index
    %414 = vector.load %arg10[%413, %c0_290] : memref<16x128xf32, #tpu.memory_space<vmem>>, vector<2x128xf32>
    %c0_291 = arith.constant 0 : index
    %c0_292 = arith.constant 0 : index
    %415 = vector.load %arg12[%c0_291, %c0_292] : memref<2x128xf32, #tpu.memory_space<vmem>>, vector<2x128xf32>
    %cst_293 = arith.constant dense<0.000000e+00> : vector<2x128xf32>
    %416 = tpu.matmul %415, %262, %cst_293 {dimension_numbers = #tpu.dot_dimension_numbers<[1], [0], [0], [1], [0, 0, 1, 1], [], []>} : vector<2x128xf32>, vector<128x128xf32>, vector<2x128xf32> -> vector<2x128xf32>
    %417 = arith.addf %414, %416 : vector<2x128xf32>
    %cst_294 = arith.constant 5.000000e-01 : f32
    %418 = vector.broadcast %cst_294 : f32 to vector<2x128xf32>
    %419 = arith.mulf %418, %417 : vector<2x128xf32>
    %420 = arith.select %14, %417, %419 : vector<2x128xi1>, vector<2x128xf32>
    %421 = math.tanh %420 : vector<2x128xf32>
    %cst_295 = arith.constant 5.000000e-01 : f32
    %422 = vector.broadcast %cst_295 : f32 to vector<2x128xf32>
    %423 = arith.mulf %422, %421 : vector<2x128xf32>
    %cst_296 = arith.constant 5.000000e-01 : f32
    %424 = vector.broadcast %cst_296 : f32 to vector<2x128xf32>
    %425 = arith.addf %423, %424 : vector<2x128xf32>
    %426 = arith.select %14, %421, %425 : vector<2x128xi1>, vector<2x128xf32>
    %c64_i32_297 = arith.constant 64 : i32
    %427 = tpu.dynamic_rotate %426 by %c64_i32_297 dim 1 : vector<2x128xf32>, i32 -> vector<2x128xf32>
    %c96_i32_298 = arith.constant 96 : i32
    %428 = tpu.dynamic_rotate %426 by %c96_i32_298 dim 1 : vector<2x128xf32>, i32 -> vector<2x128xf32>
    %c32_i32_299 = arith.constant 32 : i32
    %429 = tpu.dynamic_rotate %426 by %c32_i32_299 dim 1 : vector<2x128xf32>, i32 -> vector<2x128xf32>
    %c0_300 = arith.constant 0 : index
    %c0_301 = arith.constant 0 : index
    %430 = vector.load %arg13[%c0_300, %c0_301] : memref<2x128xf32, #tpu.memory_space<vmem>>, vector<2x128xf32>
    %431 = arith.mulf %426, %430 : vector<2x128xf32>
    %432 = arith.mulf %428, %429 : vector<2x128xf32>
    %433 = arith.addf %431, %432 : vector<2x128xf32>
    %434 = math.tanh %433 : vector<2x128xf32>
    %435 = arith.mulf %427, %434 : vector<2x128xf32>
    %c0_302 = arith.constant 0 : index
    %c0_303 = arith.constant 0 : index
    %436 = vector.load %arg13[%c0_302, %c0_303] : memref<2x128xf32, #tpu.memory_space<vmem>>, vector<2x128xf32>
    tpu.vector_store %arg13[%c0_302, %c0_303], %433 {strides = array<i32>} : memref<2x128xf32, #tpu.memory_space<vmem>>, vector<2x128xf32>,
    %c0_304 = arith.constant 0 : index
    %c0_305 = arith.constant 0 : index
    %437 = vector.load %arg12[%c0_304, %c0_305] : memref<2x128xf32, #tpu.memory_space<vmem>>, vector<2x128xf32>
    tpu.vector_store %arg12[%c0_304, %c0_305], %435 {strides = array<i32>} : memref<2x128xf32, #tpu.memory_space<vmem>>, vector<2x128xf32>,
    %c2_i32_306 = arith.constant 2 : i32
    %438 = arith.muli %c5_i32_288, %c2_i32_306 : i32
    %439 = arith.index_cast %438 : i32 to index
    %c0_307 = arith.constant 0 : index
    %440 = vector.load %arg11[%439, %c0_307] : memref<16x128xf32, #tpu.memory_space<vmem>>, vector<2x128xf32>
    tpu.vector_store %arg11[%439, %c0_307], %435 {strides = array<i32>} : memref<16x128xf32, #tpu.memory_space<vmem>>, vector<2x128xf32>,
    %c6_i32_308 = arith.constant 6 : i32
    %c2_i32_309 = arith.constant 2 : i32
    %441 = arith.muli %c6_i32_308, %c2_i32_309 : i32
    %442 = arith.index_cast %441 : i32 to index
    %c0_310 = arith.constant 0 : index
    %443 = vector.load %arg10[%442, %c0_310] : memref<16x128xf32, #tpu.memory_space<vmem>>, vector<2x128xf32>
    %c0_311 = arith.constant 0 : index
    %c0_312 = arith.constant 0 : index
    %444 = vector.load %arg12[%c0_311, %c0_312] : memref<2x128xf32, #tpu.memory_space<vmem>>, vector<2x128xf32>
    %cst_313 = arith.constant dense<0.000000e+00> : vector<2x128xf32>
    %445 = tpu.matmul %444, %262, %cst_313 {dimension_numbers = #tpu.dot_dimension_numbers<[1], [0], [0], [1], [0, 0, 1, 1], [], []>} : vector<2x128xf32>, vector<128x128xf32>, vector<2x128xf32> -> vector<2x128xf32>
    %446 = arith.addf %443, %445 : vector<2x128xf32>
    %cst_314 = arith.constant 5.000000e-01 : f32
    %447 = vector.broadcast %cst_314 : f32 to vector<2x128xf32>
    %448 = arith.mulf %447, %446 : vector<2x128xf32>
    %449 = arith.select %14, %446, %448 : vector<2x128xi1>, vector<2x128xf32>
    %450 = math.tanh %449 : vector<2x128xf32>
    %cst_315 = arith.constant 5.000000e-01 : f32
    %451 = vector.broadcast %cst_315 : f32 to vector<2x128xf32>
    %452 = arith.mulf %451, %450 : vector<2x128xf32>
    %cst_316 = arith.constant 5.000000e-01 : f32
    %453 = vector.broadcast %cst_316 : f32 to vector<2x128xf32>
    %454 = arith.addf %452, %453 : vector<2x128xf32>
    %455 = arith.select %14, %450, %454 : vector<2x128xi1>, vector<2x128xf32>
    %c64_i32_317 = arith.constant 64 : i32
    %456 = tpu.dynamic_rotate %455 by %c64_i32_317 dim 1 : vector<2x128xf32>, i32 -> vector<2x128xf32>
    %c96_i32_318 = arith.constant 96 : i32
    %457 = tpu.dynamic_rotate %455 by %c96_i32_318 dim 1 : vector<2x128xf32>, i32 -> vector<2x128xf32>
    %c32_i32_319 = arith.constant 32 : i32
    %458 = tpu.dynamic_rotate %455 by %c32_i32_319 dim 1 : vector<2x128xf32>, i32 -> vector<2x128xf32>
    %c0_320 = arith.constant 0 : index
    %c0_321 = arith.constant 0 : index
    %459 = vector.load %arg13[%c0_320, %c0_321] : memref<2x128xf32, #tpu.memory_space<vmem>>, vector<2x128xf32>
    %460 = arith.mulf %455, %459 : vector<2x128xf32>
    %461 = arith.mulf %457, %458 : vector<2x128xf32>
    %462 = arith.addf %460, %461 : vector<2x128xf32>
    %463 = math.tanh %462 : vector<2x128xf32>
    %464 = arith.mulf %456, %463 : vector<2x128xf32>
    %c0_322 = arith.constant 0 : index
    %c0_323 = arith.constant 0 : index
    %465 = vector.load %arg13[%c0_322, %c0_323] : memref<2x128xf32, #tpu.memory_space<vmem>>, vector<2x128xf32>
    tpu.vector_store %arg13[%c0_322, %c0_323], %462 {strides = array<i32>} : memref<2x128xf32, #tpu.memory_space<vmem>>, vector<2x128xf32>,
    %c0_324 = arith.constant 0 : index
    %c0_325 = arith.constant 0 : index
    %466 = vector.load %arg12[%c0_324, %c0_325] : memref<2x128xf32, #tpu.memory_space<vmem>>, vector<2x128xf32>
    tpu.vector_store %arg12[%c0_324, %c0_325], %464 {strides = array<i32>} : memref<2x128xf32, #tpu.memory_space<vmem>>, vector<2x128xf32>,
    %c2_i32_326 = arith.constant 2 : i32
    %467 = arith.muli %c6_i32_308, %c2_i32_326 : i32
    %468 = arith.index_cast %467 : i32 to index
    %c0_327 = arith.constant 0 : index
    %469 = vector.load %arg11[%468, %c0_327] : memref<16x128xf32, #tpu.memory_space<vmem>>, vector<2x128xf32>
    tpu.vector_store %arg11[%468, %c0_327], %464 {strides = array<i32>} : memref<16x128xf32, #tpu.memory_space<vmem>>, vector<2x128xf32>,
    %c7_i32_328 = arith.constant 7 : i32
    %c2_i32_329 = arith.constant 2 : i32
    %470 = arith.muli %c7_i32_328, %c2_i32_329 : i32
    %471 = arith.index_cast %470 : i32 to index
    %c0_330 = arith.constant 0 : index
    %472 = vector.load %arg10[%471, %c0_330] : memref<16x128xf32, #tpu.memory_space<vmem>>, vector<2x128xf32>
    %c0_331 = arith.constant 0 : index
    %c0_332 = arith.constant 0 : index
    %473 = vector.load %arg12[%c0_331, %c0_332] : memref<2x128xf32, #tpu.memory_space<vmem>>, vector<2x128xf32>
    %cst_333 = arith.constant dense<0.000000e+00> : vector<2x128xf32>
    %474 = tpu.matmul %473, %262, %cst_333 {dimension_numbers = #tpu.dot_dimension_numbers<[1], [0], [0], [1], [0, 0, 1, 1], [], []>} : vector<2x128xf32>, vector<128x128xf32>, vector<2x128xf32> -> vector<2x128xf32>
    %475 = arith.addf %472, %474 : vector<2x128xf32>
    %cst_334 = arith.constant 5.000000e-01 : f32
    %476 = vector.broadcast %cst_334 : f32 to vector<2x128xf32>
    %477 = arith.mulf %476, %475 : vector<2x128xf32>
    %478 = arith.select %14, %475, %477 : vector<2x128xi1>, vector<2x128xf32>
    %479 = math.tanh %478 : vector<2x128xf32>
    %cst_335 = arith.constant 5.000000e-01 : f32
    %480 = vector.broadcast %cst_335 : f32 to vector<2x128xf32>
    %481 = arith.mulf %480, %479 : vector<2x128xf32>
    %cst_336 = arith.constant 5.000000e-01 : f32
    %482 = vector.broadcast %cst_336 : f32 to vector<2x128xf32>
    %483 = arith.addf %481, %482 : vector<2x128xf32>
    %484 = arith.select %14, %479, %483 : vector<2x128xi1>, vector<2x128xf32>
    %c64_i32_337 = arith.constant 64 : i32
    %485 = tpu.dynamic_rotate %484 by %c64_i32_337 dim 1 : vector<2x128xf32>, i32 -> vector<2x128xf32>
    %c96_i32_338 = arith.constant 96 : i32
    %486 = tpu.dynamic_rotate %484 by %c96_i32_338 dim 1 : vector<2x128xf32>, i32 -> vector<2x128xf32>
    %c32_i32_339 = arith.constant 32 : i32
    %487 = tpu.dynamic_rotate %484 by %c32_i32_339 dim 1 : vector<2x128xf32>, i32 -> vector<2x128xf32>
    %c0_340 = arith.constant 0 : index
    %c0_341 = arith.constant 0 : index
    %488 = vector.load %arg13[%c0_340, %c0_341] : memref<2x128xf32, #tpu.memory_space<vmem>>, vector<2x128xf32>
    %489 = arith.mulf %484, %488 : vector<2x128xf32>
    %490 = arith.mulf %486, %487 : vector<2x128xf32>
    %491 = arith.addf %489, %490 : vector<2x128xf32>
    %492 = math.tanh %491 : vector<2x128xf32>
    %493 = arith.mulf %485, %492 : vector<2x128xf32>
    %c0_342 = arith.constant 0 : index
    %c0_343 = arith.constant 0 : index
    %494 = vector.load %arg13[%c0_342, %c0_343] : memref<2x128xf32, #tpu.memory_space<vmem>>, vector<2x128xf32>
    tpu.vector_store %arg13[%c0_342, %c0_343], %491 {strides = array<i32>} : memref<2x128xf32, #tpu.memory_space<vmem>>, vector<2x128xf32>,
    %c0_344 = arith.constant 0 : index
    %c0_345 = arith.constant 0 : index
    %495 = vector.load %arg12[%c0_344, %c0_345] : memref<2x128xf32, #tpu.memory_space<vmem>>, vector<2x128xf32>
    tpu.vector_store %arg12[%c0_344, %c0_345], %493 {strides = array<i32>} : memref<2x128xf32, #tpu.memory_space<vmem>>, vector<2x128xf32>,
    %c2_i32_346 = arith.constant 2 : i32
    %496 = arith.muli %c7_i32_328, %c2_i32_346 : i32
    %497 = arith.index_cast %496 : i32 to index
    %c0_347 = arith.constant 0 : index
    %498 = vector.load %arg11[%497, %c0_347] : memref<16x128xf32, #tpu.memory_space<vmem>>, vector<2x128xf32>
    tpu.vector_store %arg11[%497, %c0_347], %493 {strides = array<i32>} : memref<16x128xf32, #tpu.memory_space<vmem>>, vector<2x128xf32>,
    %c8_i32_348 = arith.constant 8 : i32
    %c0_349 = arith.constant 0 : index
    %c0_350 = arith.constant 0 : index
    %499 = vector.load %arg11[%c0_349, %c0_350] : memref<16x128xf32, #tpu.memory_space<vmem>>, vector<16x32xf32>
    %c0_351 = arith.constant 0 : index
    %c0_352 = arith.constant 0 : index
    %c0_353 = arith.constant 0 : index
    %500 = vector.load %arg7[%c0_351, %c0_352, %c0_353] : memref<6x32x32xf32, #tpu.memory_space<vmem>>, vector<1x32x32xf32>
    %501 = vector.shape_cast %500 : vector<1x32x32xf32> to vector<32x32xf32>
    %c0_354 = arith.constant 0 : index
    %c0_355 = arith.constant 0 : index
    %502 = vector.load %arg8[%c0_354, %c0_355] : memref<12x32xf32, #tpu.memory_space<vmem>>, vector<1x32xf32>
    %cst_356 = arith.constant dense<0.000000e+00> : vector<16x32xf32>
    %503 = tpu.matmul %499, %501, %cst_356 {dimension_numbers = #tpu.dot_dimension_numbers<[1], [0], [0], [1], [0, 0, 1, 1], [], []>} : vector<16x32xf32>, vector<32x32xf32>, vector<16x32xf32> -> vector<16x32xf32>
    %504 = vector.broadcast %502 : vector<1x32xf32> to vector<16x32xf32>
    %505 = arith.addf %503, %504 : vector<16x32xf32>
    %cst_357 = arith.constant 2.500000e-01 : f32
    %506 = vector.broadcast %cst_357 : f32 to vector<16x32xf32>
    %507 = arith.mulf %505, %506 : vector<16x32xf32>
    %c1_358 = arith.constant 1 : index
    %c0_359 = arith.constant 0 : index
    %c0_360 = arith.constant 0 : index
    %508 = vector.load %arg7[%c1_358, %c0_359, %c0_360] : memref<6x32x32xf32, #tpu.memory_space<vmem>>, vector<1x32x32xf32>
    %509 = vector.shape_cast %508 : vector<1x32x32xf32> to vector<32x32xf32>
    %c1_361 = arith.constant 1 : index
    %c0_362 = arith.constant 0 : index
    %510 = vector.load %arg8[%c1_361, %c0_362] : memref<12x32xf32, #tpu.memory_space<vmem>>, vector<1x32xf32>
    %cst_363 = arith.constant dense<0.000000e+00> : vector<16x32xf32>
    %511 = tpu.matmul %499, %509, %cst_363 {dimension_numbers = #tpu.dot_dimension_numbers<[1], [0], [0], [1], [0, 0, 1, 1], [], []>} : vector<16x32xf32>, vector<32x32xf32>, vector<16x32xf32> -> vector<16x32xf32>
    %512 = vector.broadcast %510 : vector<1x32xf32> to vector<16x32xf32>
    %513 = arith.addf %511, %512 : vector<16x32xf32>
    %c2_364 = arith.constant 2 : index
    %c0_365 = arith.constant 0 : index
    %c0_366 = arith.constant 0 : index
    %514 = vector.load %arg7[%c2_364, %c0_365, %c0_366] : memref<6x32x32xf32, #tpu.memory_space<vmem>>, vector<1x32x32xf32>
    %515 = vector.shape_cast %514 : vector<1x32x32xf32> to vector<32x32xf32>
    %c2_367 = arith.constant 2 : index
    %c0_368 = arith.constant 0 : index
    %516 = vector.load %arg8[%c2_367, %c0_368] : memref<12x32xf32, #tpu.memory_space<vmem>>, vector<1x32xf32>
    %cst_369 = arith.constant dense<0.000000e+00> : vector<16x32xf32>
    %517 = tpu.matmul %499, %515, %cst_369 {dimension_numbers = #tpu.dot_dimension_numbers<[1], [0], [0], [1], [0, 0, 1, 1], [], []>} : vector<16x32xf32>, vector<32x32xf32>, vector<16x32xf32> -> vector<16x32xf32>
    %518 = vector.broadcast %516 : vector<1x32xf32> to vector<16x32xf32>
    %519 = arith.addf %517, %518 : vector<16x32xf32>
    %c0_370 = arith.constant 0 : index
    %c0_371 = arith.constant 0 : index
    %520 = vector.load %arg1[%c0_370, %c0_371] : memref<16x16xf32, #tpu.memory_space<vmem>>, vector<16x16xf32>
    %521 = tpu.iota {dimensions = array<i32: 1>} : vector<1x32xi32>
    %cst_372 = arith.constant 0.000000e+00 : f32
    %522 = vector.broadcast %cst_372 : f32 to vector<16x32xf32>
    %c0_i32_373 = arith.constant 0 : i32
    %523 = vector.broadcast %c0_i32_373 : i32 to vector<1x32xi32>
    %524 = arith.cmpi sge, %521, %523 : vector<1x32xi32>
    %c16_i32 = arith.constant 16 : i32
    %525 = vector.broadcast %c16_i32 : i32 to vector<1x32xi32>
    %526 = arith.cmpi slt, %521, %525 : vector<1x32xi32>
    %527 = arith.andi %524, %526 : vector<1x32xi1>
    %528 = arith.extui %527 : vector<1x32xi1> to vector<1x32xi32>
    %529 = arith.sitofp %528 : vector<1x32xi32> to vector<1x32xf32>
    %530 = vector.broadcast %529 : vector<1x32xf32> to vector<16x32xf32>
    %531 = arith.mulf %507, %530 : vector<16x32xf32>
    %532 = tpu.transpose %513, [1, 0] : vector<16x32xf32> -> vector<32x16xf32>
    %cst_374 = arith.constant dense<0.000000e+00> : vector<16x16xf32>
    %533 = tpu.matmul %531, %532, %cst_374 {dimension_numbers = #tpu.dot_dimension_numbers<[1], [0], [0], [1], [0, 0, 1, 1], [], []>} : vector<16x32xf32>, vector<32x16xf32>, vector<16x16xf32> -> vector<16x16xf32>
    %534 = arith.addf %533, %520 : vector<16x16xf32>
    %cst_375 = arith.constant dense<0xFF800000> : vector<16xf32>
    %535 = vector.multi_reduction <maximumf>, %534, %cst_375 [1] : vector<16x16xf32> to vector<16xf32>
    %536 = vector.shape_cast %535 : vector<16xf32> to vector<16x1xf32>
    %537 = vector.broadcast %536 : vector<16x1xf32> to vector<16x16xf32>
    %538 = arith.subf %534, %537 : vector<16x16xf32>
    %539 = math.exp %538 : vector<16x16xf32>
    %cst_376 = arith.constant dense<0.000000e+00> : vector<16xf32>
    %540 = vector.multi_reduction <add>, %539, %cst_376 [1] : vector<16x16xf32> to vector<16xf32>
    %541 = vector.shape_cast %540 : vector<16xf32> to vector<16x1xf32>
    %542 = tpu.reciprocal %541 {approx = true} : vector<16x1xf32> -> vector<16x1xf32>
    %543 = vector.broadcast %542 : vector<16x1xf32> to vector<16x16xf32>
    %544 = arith.mulf %539, %543 : vector<16x16xf32>
    %545 = vector.broadcast %529 : vector<1x32xf32> to vector<16x32xf32>
    %546 = arith.mulf %519, %545 : vector<16x32xf32>
    %cst_377 = arith.constant dense<0.000000e+00> : vector<16x32xf32>
    %547 = tpu.matmul %544, %546, %cst_377 {dimension_numbers = #tpu.dot_dimension_numbers<[1], [0], [0], [1], [0, 0, 1, 1], [], []>} : vector<16x16xf32>, vector<16x32xf32>, vector<16x32xf32> -> vector<16x32xf32>
    %548 = arith.addf %522, %547 : vector<16x32xf32>
    %c16_i32_378 = arith.constant 16 : i32
    %549 = vector.broadcast %c16_i32_378 : i32 to vector<1x32xi32>
    %550 = arith.cmpi sge, %521, %549 : vector<1x32xi32>
    %c32_i32_379 = arith.constant 32 : i32
    %551 = vector.broadcast %c32_i32_379 : i32 to vector<1x32xi32>
    %552 = arith.cmpi slt, %521, %551 : vector<1x32xi32>
    %553 = arith.andi %550, %552 : vector<1x32xi1>
    %554 = arith.extui %553 : vector<1x32xi1> to vector<1x32xi32>
    %555 = arith.sitofp %554 : vector<1x32xi32> to vector<1x32xf32>
    %556 = vector.broadcast %555 : vector<1x32xf32> to vector<16x32xf32>
    %557 = arith.mulf %507, %556 : vector<16x32xf32>
    %558 = tpu.transpose %513, [1, 0] : vector<16x32xf32> -> vector<32x16xf32>
    %cst_380 = arith.constant dense<0.000000e+00> : vector<16x16xf32>
    %559 = tpu.matmul %557, %558, %cst_380 {dimension_numbers = #tpu.dot_dimension_numbers<[1], [0], [0], [1], [0, 0, 1, 1], [], []>} : vector<16x32xf32>, vector<32x16xf32>, vector<16x16xf32> -> vector<16x16xf32>
    %560 = arith.addf %559, %520 : vector<16x16xf32>
    %cst_381 = arith.constant dense<0xFF800000> : vector<16xf32>
    %561 = vector.multi_reduction <maximumf>, %560, %cst_381 [1] : vector<16x16xf32> to vector<16xf32>
    %562 = vector.shape_cast %561 : vector<16xf32> to vector<16x1xf32>
    %563 = vector.broadcast %562 : vector<16x1xf32> to vector<16x16xf32>
    %564 = arith.subf %560, %563 : vector<16x16xf32>
    %565 = math.exp %564 : vector<16x16xf32>
    %cst_382 = arith.constant dense<0.000000e+00> : vector<16xf32>
    %566 = vector.multi_reduction <add>, %565, %cst_382 [1] : vector<16x16xf32> to vector<16xf32>
    %567 = vector.shape_cast %566 : vector<16xf32> to vector<16x1xf32>
    %568 = tpu.reciprocal %567 {approx = true} : vector<16x1xf32> -> vector<16x1xf32>
    %569 = vector.broadcast %568 : vector<16x1xf32> to vector<16x16xf32>
    %570 = arith.mulf %565, %569 : vector<16x16xf32>
    %571 = vector.broadcast %555 : vector<1x32xf32> to vector<16x32xf32>
    %572 = arith.mulf %519, %571 : vector<16x32xf32>
    %cst_383 = arith.constant dense<0.000000e+00> : vector<16x32xf32>
    %573 = tpu.matmul %570, %572, %cst_383 {dimension_numbers = #tpu.dot_dimension_numbers<[1], [0], [0], [1], [0, 0, 1, 1], [], []>} : vector<16x16xf32>, vector<16x32xf32>, vector<16x32xf32> -> vector<16x32xf32>
    %574 = arith.addf %548, %573 : vector<16x32xf32>
    %c3 = arith.constant 3 : index
    %c0_384 = arith.constant 0 : index
    %c0_385 = arith.constant 0 : index
    %575 = vector.load %arg7[%c3, %c0_384, %c0_385] : memref<6x32x32xf32, #tpu.memory_space<vmem>>, vector<1x32x32xf32>
    %576 = vector.shape_cast %575 : vector<1x32x32xf32> to vector<32x32xf32>
    %c3_386 = arith.constant 3 : index
    %c0_387 = arith.constant 0 : index
    %577 = vector.load %arg8[%c3_386, %c0_387] : memref<12x32xf32, #tpu.memory_space<vmem>>, vector<1x32xf32>
    %cst_388 = arith.constant dense<0.000000e+00> : vector<16x32xf32>
    %578 = tpu.matmul %574, %576, %cst_388 {dimension_numbers = #tpu.dot_dimension_numbers<[1], [0], [0], [1], [0, 0, 1, 1], [], []>} : vector<16x32xf32>, vector<32x32xf32>, vector<16x32xf32> -> vector<16x32xf32>
    %579 = vector.broadcast %577 : vector<1x32xf32> to vector<16x32xf32>
    %580 = arith.addf %578, %579 : vector<16x32xf32>
    %581 = arith.addf %580, %499 : vector<16x32xf32>
    %c4 = arith.constant 4 : index
    %c0_389 = arith.constant 0 : index
    %582 = vector.load %arg8[%c4, %c0_389] : memref<12x32xf32, #tpu.memory_space<vmem>>, vector<1x32xf32>
    %c5 = arith.constant 5 : index
    %c0_390 = arith.constant 0 : index
    %583 = vector.load %arg8[%c5, %c0_390] : memref<12x32xf32, #tpu.memory_space<vmem>>, vector<1x32xf32>
    %cst_391 = arith.constant dense<0.000000e+00> : vector<16xf32>
    %584 = vector.multi_reduction <add>, %581, %cst_391 [1] : vector<16x32xf32> to vector<16xf32>
    %585 = vector.shape_cast %584 : vector<16xf32> to vector<16x1xf32>
    %cst_392 = arith.constant 3.200000e+01 : f32
    %586 = vector.broadcast %cst_392 : f32 to vector<16x1xf32>
    %587 = arith.divf %585, %586 : vector<16x1xf32>
    %588 = vector.broadcast %587 : vector<16x1xf32> to vector<16x32xf32>
    %589 = arith.subf %581, %588 : vector<16x32xf32>
    %590 = arith.mulf %589, %589 : vector<16x32xf32>
    %cst_393 = arith.constant dense<0.000000e+00> : vector<16xf32>
    %591 = vector.multi_reduction <add>, %590, %cst_393 [1] : vector<16x32xf32> to vector<16xf32>
    %592 = vector.shape_cast %591 : vector<16xf32> to vector<16x1xf32>
    %cst_394 = arith.constant 3.200000e+01 : f32
    %593 = vector.broadcast %cst_394 : f32 to vector<16x1xf32>
    %594 = arith.divf %592, %593 : vector<16x1xf32>
    %595 = vector.broadcast %587 : vector<16x1xf32> to vector<16x32xf32>
    %596 = arith.subf %581, %595 : vector<16x32xf32>
    %cst_395 = arith.constant 9.99999996E-13 : f32
    %597 = vector.broadcast %cst_395 : f32 to vector<16x1xf32>
    %598 = arith.addf %594, %597 : vector<16x1xf32>
    %599 = math.rsqrt %598 : vector<16x1xf32>
    %600 = vector.broadcast %599 : vector<16x1xf32> to vector<16x32xf32>
    %601 = arith.mulf %596, %600 : vector<16x32xf32>
    %602 = vector.broadcast %582 : vector<1x32xf32> to vector<16x32xf32>
    %603 = arith.mulf %601, %602 : vector<16x32xf32>
    %604 = vector.broadcast %583 : vector<1x32xf32> to vector<16x32xf32>
    %605 = arith.addf %603, %604 : vector<16x32xf32>
    %c4_396 = arith.constant 4 : index
    %c0_397 = arith.constant 0 : index
    %c0_398 = arith.constant 0 : index
    %606 = vector.load %arg7[%c4_396, %c0_397, %c0_398] : memref<6x32x32xf32, #tpu.memory_space<vmem>>, vector<1x32x32xf32>
    %607 = vector.shape_cast %606 : vector<1x32x32xf32> to vector<32x32xf32>
    %c6 = arith.constant 6 : index
    %c0_399 = arith.constant 0 : index
    %608 = vector.load %arg8[%c6, %c0_399] : memref<12x32xf32, #tpu.memory_space<vmem>>, vector<1x32xf32>
    %cst_400 = arith.constant dense<0.000000e+00> : vector<16x32xf32>
    %609 = tpu.matmul %605, %607, %cst_400 {dimension_numbers = #tpu.dot_dimension_numbers<[1], [0], [0], [1], [0, 0, 1, 1], [], []>} : vector<16x32xf32>, vector<32x32xf32>, vector<16x32xf32> -> vector<16x32xf32>
    %610 = vector.broadcast %608 : vector<1x32xf32> to vector<16x32xf32>
    %611 = arith.addf %609, %610 : vector<16x32xf32>
    %cst_401 = arith.constant 5.000000e-01 : f32
    %612 = vector.broadcast %cst_401 : f32 to vector<16x32xf32>
    %613 = arith.mulf %612, %611 : vector<16x32xf32>
    %cst_402 = arith.constant 0.707106769 : f32
    %614 = vector.broadcast %cst_402 : f32 to vector<16x32xf32>
    %615 = arith.mulf %611, %614 : vector<16x32xf32>
    %616 = math.erf %615 : vector<16x32xf32>
    %cst_403 = arith.constant 1.000000e+00 : f32
    %617 = vector.broadcast %cst_403 : f32 to vector<16x32xf32>
    %618 = arith.addf %617, %616 : vector<16x32xf32>
    %619 = arith.mulf %613, %618 : vector<16x32xf32>
    %c5_404 = arith.constant 5 : index
    %c0_405 = arith.constant 0 : index
    %c0_406 = arith.constant 0 : index
    %620 = vector.load %arg7[%c5_404, %c0_405, %c0_406] : memref<6x32x32xf32, #tpu.memory_space<vmem>>, vector<1x32x32xf32>
    %621 = vector.shape_cast %620 : vector<1x32x32xf32> to vector<32x32xf32>
    %c7 = arith.constant 7 : index
    %c0_407 = arith.constant 0 : index
    %622 = vector.load %arg8[%c7, %c0_407] : memref<12x32xf32, #tpu.memory_space<vmem>>, vector<1x32xf32>
    %cst_408 = arith.constant dense<0.000000e+00> : vector<16x32xf32>
    %623 = tpu.matmul %619, %621, %cst_408 {dimension_numbers = #tpu.dot_dimension_numbers<[1], [0], [0], [1], [0, 0, 1, 1], [], []>} : vector<16x32xf32>, vector<32x32xf32>, vector<16x32xf32> -> vector<16x32xf32>
    %624 = vector.broadcast %622 : vector<1x32xf32> to vector<16x32xf32>
    %625 = arith.addf %623, %624 : vector<16x32xf32>
    %626 = arith.addf %625, %605 : vector<16x32xf32>
    %c8 = arith.constant 8 : index
    %c0_409 = arith.constant 0 : index
    %627 = vector.load %arg8[%c8, %c0_409] : memref<12x32xf32, #tpu.memory_space<vmem>>, vector<1x32xf32>
    %c9 = arith.constant 9 : index
    %c0_410 = arith.constant 0 : index
    %628 = vector.load %arg8[%c9, %c0_410] : memref<12x32xf32, #tpu.memory_space<vmem>>, vector<1x32xf32>
    %cst_411 = arith.constant dense<0.000000e+00> : vector<16xf32>
    %629 = vector.multi_reduction <add>, %626, %cst_411 [1] : vector<16x32xf32> to vector<16xf32>
    %630 = vector.shape_cast %629 : vector<16xf32> to vector<16x1xf32>
    %cst_412 = arith.constant 3.200000e+01 : f32
    %631 = vector.broadcast %cst_412 : f32 to vector<16x1xf32>
    %632 = arith.divf %630, %631 : vector<16x1xf32>
    %633 = vector.broadcast %632 : vector<16x1xf32> to vector<16x32xf32>
    %634 = arith.subf %626, %633 : vector<16x32xf32>
    %635 = arith.mulf %634, %634 : vector<16x32xf32>
    %cst_413 = arith.constant dense<0.000000e+00> : vector<16xf32>
    %636 = vector.multi_reduction <add>, %635, %cst_413 [1] : vector<16x32xf32> to vector<16xf32>
    %637 = vector.shape_cast %636 : vector<16xf32> to vector<16x1xf32>
    %cst_414 = arith.constant 3.200000e+01 : f32
    %638 = vector.broadcast %cst_414 : f32 to vector<16x1xf32>
    %639 = arith.divf %637, %638 : vector<16x1xf32>
    %640 = vector.broadcast %632 : vector<16x1xf32> to vector<16x32xf32>
    %641 = arith.subf %626, %640 : vector<16x32xf32>
    %cst_415 = arith.constant 9.99999996E-13 : f32
    %642 = vector.broadcast %cst_415 : f32 to vector<16x1xf32>
    %643 = arith.addf %639, %642 : vector<16x1xf32>
    %644 = math.rsqrt %643 : vector<16x1xf32>
    %645 = vector.broadcast %644 : vector<16x1xf32> to vector<16x32xf32>
    %646 = arith.mulf %641, %645 : vector<16x32xf32>
    %647 = vector.broadcast %627 : vector<1x32xf32> to vector<16x32xf32>
    %648 = arith.mulf %646, %647 : vector<16x32xf32>
    %649 = vector.broadcast %628 : vector<1x32xf32> to vector<16x32xf32>
    %650 = arith.addf %648, %649 : vector<16x32xf32>
    %c10 = arith.constant 10 : index
    %c0_416 = arith.constant 0 : index
    %651 = vector.load %arg8[%c10, %c0_416] : memref<12x32xf32, #tpu.memory_space<vmem>>, vector<1x32xf32>
    %c11 = arith.constant 11 : index
    %c0_417 = arith.constant 0 : index
    %652 = vector.load %arg8[%c11, %c0_417] : memref<12x32xf32, #tpu.memory_space<vmem>>, vector<1x1xf32>
    %653 = tpu.transpose %650, [1, 0] : vector<16x32xf32> -> vector<32x16xf32>
    %cst_418 = arith.constant dense<0.000000e+00> : vector<1x16xf32>
    %654 = tpu.matmul %651, %653, %cst_418 {dimension_numbers = #tpu.dot_dimension_numbers<[1], [0], [0], [1], [0, 0, 1, 1], [], []>} : vector<1x32xf32>, vector<32x16xf32>, vector<1x16xf32> -> vector<1x16xf32>
    %655 = vector.broadcast %652 : vector<1x1xf32> to vector<1x16xf32>
    %656 = arith.addf %654, %655 : vector<1x16xf32>
    %c0_419 = arith.constant 0 : index
    %c0_420 = arith.constant 0 : index
    %657 = vector.load %arg9[%c0_419, %c0_420] : memref<1x16xf32, #tpu.memory_space<vmem>>, vector<1x16xf32>
    tpu.vector_store %arg9[%c0_419, %c0_420], %656 {strides = array<i32>} : memref<1x16xf32, #tpu.memory_space<vmem>>, vector<1x16xf32>,
    return
  }
}

</mosaic_0001>

<llo_original>
// kernel: squeeze.1
$region0: #{squeeze.1}
  %s0 = inlined_call_operand.vmem [shape: f32[16], index: 0, kind: input, shape index: {}]
  %s1 = inlined_call_operand.vmem [shape: f32[8,2], index: 1, kind: output, shape index: {}]
  $region1: #{squeeze.1} parent=0
    #allocation0 [shape = 'u8[4096]{0}', space=vmem, size = 0x1000, scoped, tag = 'scoped mem for input reshape']
    %s3 = sshll.u32 1, 1
    %s4 = ssub.s32 %s3, 1
    %v5 = vld [vmem:[%s0] sm:%s4]
    %6 = vst [vmem:[#allocation0] sm:%s4] %v5
    %v7 = vld [vmem:[#allocation0] sm:$0x1]
    %vm8 = vcmask 15360
    %9 = vst.msk [vmem:[%s1] sm:$0x1] %vm8, %v7
    %v10 = vld [vmem:[#allocation0] sm:$0x1]
    %11 = vrot.lane.b32.xlu0 %v10, 126
    %v12 = vpop.permute.xlu0 %11
    %vm13 = vcmask 15360
    %s14 = scalar_lea.vmem %s1, 1
    %15 = vst.msk [vmem:[%s14] sm:$0x1] %vm13, %v12
    %v16 = vld [vmem:[#allocation0] sm:$0x1]
    %17 = vrot.lane.b32.xlu0 %v16, 124
    %v18 = vpop.permute.xlu0 %17
    %vm19 = vcmask 15360
    %s20 = scalar_lea.vmem %s1, 2
    %21 = vst.msk [vmem:[%s20] sm:$0x1] %vm19, %v18
    %v22 = vld [vmem:[#allocation0] sm:$0x1]
    %23 = vrot.lane.b32.xlu0 %v22, 122
    %v24 = vpop.permute.xlu0 %23
    %vm25 = vcmask 15360
    %s26 = scalar_lea.vmem %s1, 3
    %27 = vst.msk [vmem:[%s26] sm:$0x1] %vm25, %v24
    %v28 = vld [vmem:[#allocation0] sm:$0x1]
    %29 = vrot.lane.b32.xlu0 %v28, 120
    %v30 = vpop.permute.xlu0 %29
    %vm31 = vcmask 15360
    %s32 = scalar_lea.vmem %s1, 4
    %33 = vst.msk [vmem:[%s32] sm:$0x1] %vm31, %v30
    %v34 = vld [vmem:[#allocation0] sm:$0x1]
    %35 = vrot.lane.b32.xlu0 %v34, 118
    %v36 = vpop.permute.xlu0 %35
    %vm37 = vcmask 15360
    %s38 = scalar_lea.vmem %s1, 5
    %39 = vst.msk [vmem:[%s38] sm:$0x1] %vm37, %v36
    %v40 = vld [vmem:[#allocation0] sm:$0x1]
    %41 = vrot.lane.b32.xlu0 %v40, 116
    %v42 = vpop.permute.xlu0 %41
    %vm43 = vcmask 15360
    %s44 = scalar_lea.vmem %s1, 6
    %45 = vst.msk [vmem:[%s44] sm:$0x1] %vm43, %v42
    %v46 = vld [vmem:[#allocation0] sm:$0x1]
    %47 = vrot.lane.b32.xlu0 %v46, 114
    %v48 = vpop.permute.xlu0 %47
    %vm49 = vcmask 15360
    %s50 = scalar_lea.vmem %s1, 7
    %51 = vst.msk [vmem:[%s50] sm:$0x1] %vm49, %v48

// kernel: lstmattn_forward.1
$region0: #{lstmattn_forward.1}
  #allocation0 [shape = 'u32[]', space=smem, size = 0x4, offset = 0x4, fixed_abs, tag = 'smem constant byte address 0x4 - core index']
  #allocation1 [shape = 'u32[144,128]{1,0:T(1,128)}', space=vmem, size = 0x12000, scoped, tag = 'internal scratch']
  #allocation2 [shape = 'f32[16,128]{1,0:T(8,128)}', space=vmem, size = 0x2000, scoped, tag = 'scratch operand']
  #allocation3 [shape = 'f32[16,128]{1,0:T(8,128)}', space=vmem, size = 0x2000, scoped, tag = 'scratch operand']
  #allocation4 [shape = 'f32[2,128]{1,0:T(2,128)}', space=vmem, size = 0x400, scoped, tag = 'scratch operand']
  #allocation5 [shape = 'f32[2,128]{1,0:T(2,128)}', space=vmem, size = 0x400, scoped, tag = 'scratch operand']
  %s0 = inlined_call_operand.vmem [shape: f32[16,40], index: 0, kind: input, shape index: {}]
  %s1 = inlined_call_operand.vmem [shape: f32[16,16], index: 1, kind: input, shape index: {}]
  %s2 = inlined_call_operand.vmem [shape: f32[40,32], index: 2, kind: input, shape index: {}]
  %s3 = inlined_call_operand.vmem [shape: f32[1,32], index: 3, kind: input, shape index: {}]
  %s4 = inlined_call_operand.vmem [shape: f32[32,128], index: 4, kind: input, shape index: {}]
  %s5 = inlined_call_operand.vmem [shape: f32[3,128,128], index: 5, kind: input, shape index: {}]
  %s6 = inlined_call_operand.vmem [shape: f32[2,128], index: 6, kind: input, shape index: {}]
  %s7 = inlined_call_operand.vmem [shape: f32[6,32,32], index: 7, kind: input, shape index: {}]
  %s8 = inlined_call_operand.vmem [shape: f32[12,32], index: 8, kind: input, shape index: {}]
  %s9 = inlined_call_operand.vmem [shape: f32[1,16], index: 9, kind: output, shape index: {}]
  %s10 = sld [smem:[#allocation0]]
  $region46: #{lstmattn_forward.1} parent=0
    _
  %s12 = ssub.s32 1, %s10
  %s13 = scalar_select 0, %s12, %s10
  // Predicated region
  $region2: #{lstmattn_forward.1} parent=0 // pred_check
    _
  $region3: #{lstmattn_forward.1} parent=0 // pred_check_branch
    %15 = sbr.rel (0) target = $region5
  $region4: #{lstmattn_forward.1} parent=0 // pred_region
    _
  $region5: #{lstmattn_forward.1} parent=0 // pred_fallthru
    _
  // Predicated region
  $region6: #{lstmattn_forward.1} parent=0 // pred_check
    _
  $region7: #{lstmattn_forward.1} parent=0 // pred_check_branch
    %17 = sbr.rel (0) target = $region9
  $region8: #{lstmattn_forward.1} parent=0 // pred_region
    _
  $region9: #{lstmattn_forward.1} parent=0 // pred_fallthru
    _
  // Predicated region
  $region10: #{lstmattn_forward.1} parent=0 // pred_check
    _
  $region11: #{lstmattn_forward.1} parent=0 // pred_check_branch
    %19 = sbr.rel (0) target = $region13
  $region12: #{lstmattn_forward.1} parent=0 // pred_region
    _
  $region13: #{lstmattn_forward.1} parent=0 // pred_fallthru
    _
  // Predicated region
  $region14: #{lstmattn_forward.1} parent=0 // pred_check
    _
  $region15: #{lstmattn_forward.1} parent=0 // pred_check_branch
    %21 = sbr.rel (0) target = $region17
  $region16: #{lstmattn_forward.1} parent=0 // pred_region
    _
  $region17: #{lstmattn_forward.1} parent=0 // pred_fallthru
    _
  // Predicated region
  $region18: #{lstmattn_forward.1} parent=0 // pred_check
    _
  $region19: #{lstmattn_forward.1} parent=0 // pred_check_branch
    %23 = sbr.rel (0) target = $region21
  $region20: #{lstmattn_forward.1} parent=0 // pred_region
    _
  $region21: #{lstmattn_forward.1} parent=0 // pred_fallthru
    _
  // Predicated region
  $region22: #{lstmattn_forward.1} parent=0 // pred_check
    _
  $region23: #{lstmattn_forward.1} parent=0 // pred_check_branch
    %25 = sbr.rel (0) target = $region25
  $region24: #{lstmattn_forward.1} parent=0 // pred_region
    _
  $region25: #{lstmattn_forward.1} parent=0 // pred_fallthru
    _
  // Predicated region
  $region26: #{lstmattn_forward.1} parent=0 // pred_check
    _
  $region27: #{lstmattn_forward.1} parent=0 // pred_check_branch
    %27 = sbr.rel (0) target = $region29
  $region28: #{lstmattn_forward.1} parent=0 // pred_region
    _
  $region29: #{lstmattn_forward.1} parent=0 // pred_fallthru
    _
  // Predicated region
  $region30: #{lstmattn_forward.1} parent=0 // pred_check
    _
  $region31: #{lstmattn_forward.1} parent=0 // pred_check_branch
    %29 = sbr.rel (0) target = $region33
  $region32: #{lstmattn_forward.1} parent=0 // pred_region
    _
  $region33: #{lstmattn_forward.1} parent=0 // pred_fallthru
    _
  // Predicated region
  $region34: #{lstmattn_forward.1} parent=0 // pred_check
    _
  $region35: #{lstmattn_forward.1} parent=0 // pred_check_branch
    %31 = sbr.rel (0) target = $region37
  $region36: #{lstmattn_forward.1} parent=0 // pred_region
    _
  $region37: #{lstmattn_forward.1} parent=0 // pred_fallthru
    _
  %v32 = vld [vmem:[%s0] sm:$0xff]
  %v33 = vld [vmem:[%s0 + $0x8] sm:$0xff]
  %v34 = vld [vmem:[%s2] sm:$0xff]
  %v35 = vld [vmem:[%s2 + $0x8] sm:$0xff]
  %v36 = vld [vmem:[%s2 + $0x10] sm:$0xff]
  %v37 = vld [vmem:[%s2 + $0x18] sm:$0xff]
  %v38 = vld [vmem:[%s2 + $0x20] sm:$0xff]
  %v39 = vld [vmem:[%s3] sm:$0x1]
  %v41 = vlaneseq
  %v42 = vshrl.u32 %v41, 7
  %v43 = vsub.s32 0, %v42
  %v44 = vrot.slane %v39, %v43
  %vm46 = vcmask 326656
  %v48 = vsel %vm46, %v32, 0
  %v51 = vsel %vm46, %v33, 0
  %53 = vmatprep.subr.mxu0 0.0
  %54 = vmatpush1.msra.mxu0 0.0
  %55 = vmatprep.subr.mxu0 0.0
  %56 = vmatpush1.msra.mxu0 0.0
  %57 = vmatprep.subr.mxu0 0.0
  %58 = vmatpush1.msra.mxu0 0.0
  %59 = vmatprep.subr.mxu0 0.0
  %60 = vmatpush1.msra.mxu0 0.0
  %61 = vmatprep.subr.mxu0 0.0
  %62 = vmatpush1.msra.mxu0 0.0
  %63 = vmatprep.subr.mxu0 0.0
  %64 = vmatpush1.msra.mxu0 0.0
  %65 = vmatprep.subr.mxu0 0.0
  %66 = vmatpush1.msra.mxu0 0.0
  %67 = vmatprep.subr.mxu0 0.0
  %68 = vmatpush1.msra.mxu0 0.0
  %69 = vmatprep.subr.mxu0 0.0
  %70 = vmatpush1.msra.mxu0 0.0
  %71 = vmatprep.subr.mxu0 0.0
  %72 = vmatpush1.msra.mxu0 0.0
  %73 = vmatprep.subr.mxu0 0.0
  %74 = vmatpush1.msra.mxu0 0.0
  %75 = vmatprep.subr.mxu0 0.0
  %76 = vmatpush1.msra.mxu0 %v38
  %77 = vmatprep.subr.mxu0 0.0
  %78 = vmatpush1.msra.mxu0 %v37
  %79 = vmatprep.subr.mxu0 0.0
  %80 = vmatpush1.msra.mxu0 %v36
  %81 = vmatprep.subr.mxu0 0.0
  %82 = vmatpush1.msra.mxu0 %v35
  %83 = vmatprep.subr.mxu0 0.0
  %84 = vmatpush1.msra.mxu0 %v34
  %85 = vmatprep.subr.mxu0 0.0
  %86 = vmatpush2.msra.mxu0 0.0
  %87 = vmatprep.subr.mxu0 0.0
  %88 = vmatpush2.msra.mxu0 0.0
  %89 = vmatprep.subr.mxu0 0.0
  %90 = vmatpush2.msra.mxu0 0.0
  %91 = vmatprep.subr.mxu0 0.0
  %92 = vmatpush2.msra.mxu0 0.0
  %93 = vmatprep.subr.mxu0 0.0
  %94 = vmatpush2.msra.mxu0 0.0
  %95 = vmatprep.subr.mxu0 0.0
  %96 = vmatpush2.msra.mxu0 0.0
  %97 = vmatprep.subr.mxu0 0.0
  %98 = vmatpush2.msra.mxu0 0.0
  %99 = vmatprep.subr.mxu0 0.0
  %100 = vmatpush2.msra.mxu0 0.0
  %101 = vmatprep.subr.mxu0 0.0
  %102 = vmatpush2.msra.mxu0 0.0
  %103 = vmatprep.subr.mxu0 0.0
  %104 = vmatpush2.msra.mxu0 0.0
  %105 = vmatprep.subr.mxu0 0.0
  %106 = vmatpush2.msra.mxu0 0.0
  %107 = vmatprep.subr.mxu0 0.0
  %108 = vmatpush2.msra.mxu0 0.0
  %109 = vmatprep.subr.mxu0 0.0
  %110 = vmatpush2.msra.mxu0 0.0
  %111 = vmatprep.subr.mxu0 0.0
  %112 = vmatpush2.msra.mxu0 0.0
  %113 = vmatprep.subr.mxu0 0.0
  %114 = vmatpush2.msra.mxu0 0.0
  %115 = vmatprep.subr.mxu0 0.0
  %116 = vmatpush2.msra.mxu0 0.0
  %117 = vmatprep.mubr.f32.mxu0 0.0
  %118 = vmatmul.mubr.f32.gmra.mxu0 %v48
  %v119 = vpop.f32.mrf.mxu0
  %v120 = vadd.f32 %v44, %v119
  %v121 = vpop.f32.mrf.mxu0
  %122 = vmatprep.mubr.f32.mxu0 0.0
  %123 = vmatmul.mubr.f32.gmra.mxu0 %v51
  %v124 = vpop.f32.mrf.mxu0
  %v125 = vadd.f32 %v44, %v124
  %v126 = vpop.f32.mrf.mxu0
  %127 = vdwg.mxu0
  %v128 = vld [vmem:[%s4] sm:$0xff]
  %v129 = vld [vmem:[%s4 + $0x8] sm:$0xff]
  %v130 = vld [vmem:[%s4 + $0x10] sm:$0xff]
  %v131 = vld [vmem:[%s4 + $0x18] sm:$0xff]
  %v132 = vld [vmem:[%s6] sm:$0x1]
  %v133 = vlaneseq
  %v134 = vshrl.u32 %v133, 7
  %v135 = vsub.s32 0, %v134
  %v136 = vrot.slane %v132, %v135
  %vm137 = vcmask 261120
  %v139 = vsel %vm137, %v120, 0
  %v142 = vsel %vm137, %v125, 0
  %144 = vmatprep.subr.mxu0 0.0
  %145 = vmatpush1.msra.mxu0 0.0
  %146 = vmatprep.subr.mxu0 0.0
  %147 = vmatpush1.msra.mxu0 0.0
  %148 = vmatprep.subr.mxu0 0.0
  %149 = vmatpush1.msra.mxu0 0.0
  %150 = vmatprep.subr.mxu0 0.0
  %151 = vmatpush1.msra.mxu0 0.0
  %152 = vmatprep.subr.mxu0 0.0
  %153 = vmatpush1.msra.mxu0 0.0
  %154 = vmatprep.subr.mxu0 0.0
  %155 = vmatpush1.msra.mxu0 0.0
  %156 = vmatprep.subr.mxu0 0.0
  %157 = vmatpush1.msra.mxu0 0.0
  %158 = vmatprep.subr.mxu0 0.0
  %159 = vmatpush1.msra.mxu0 0.0
  %160 = vmatprep.subr.mxu0 0.0
  %161 = vmatpush1.msra.mxu0 0.0
  %162 = vmatprep.subr.mxu0 0.0
  %163 = vmatpush1.msra.mxu0 0.0
  %164 = vmatprep.subr.mxu0 0.0
  %165 = vmatpush1.msra.mxu0 0.0
  %166 = vmatprep.subr.mxu0 0.0
  %167 = vmatpush1.msra.mxu0 0.0
  %168 = vmatprep.subr.mxu0 0.0
  %169 = vmatpush1.msra.mxu0 %v131
  %170 = vmatprep.subr.mxu0 0.0
  %171 = vmatpush1.msra.mxu0 %v130
  %172 = vmatprep.subr.mxu0 0.0
  %173 = vmatpush1.msra.mxu0 %v129
  %174 = vmatprep.subr.mxu0 0.0
  %175 = vmatpush1.msra.mxu0 %v128
  %176 = vmatprep.subr.mxu0 0.0
  %177 = vmatpush2.msra.mxu0 0.0
  %178 = vmatprep.subr.mxu0 0.0
  %179 = vmatpush2.msra.mxu0 0.0
  %180 = vmatprep.subr.mxu0 0.0
  %181 = vmatpush2.msra.mxu0 0.0
  %182 = vmatprep.subr.mxu0 0.0
  %183 = vmatpush2.msra.mxu0 0.0
  %184 = vmatprep.subr.mxu0 0.0
  %185 = vmatpush2.msra.mxu0 0.0
  %186 = vmatprep.subr.mxu0 0.0
  %187 = vmatpush2.msra.mxu0 0.0
  %188 = vmatprep.subr.mxu0 0.0
  %189 = vmatpush2.msra.mxu0 0.0
  %190 = vmatprep.subr.mxu0 0.0
  %191 = vmatpush2.msra.mxu0 0.0
  %192 = vmatprep.subr.mxu0 0.0
  %193 = vmatpush2.msra.mxu0 0.0
  %194 = vmatprep.subr.mxu0 0.0
  %195 = vmatpush2.msra.mxu0 0.0
  %196 = vmatprep.subr.mxu0 0.0
  %197 = vmatpush2.msra.mxu0 0.0
  %198 = vmatprep.subr.mxu0 0.0
  %199 = vmatpush2.msra.mxu0 0.0
  %200 = vmatprep.subr.mxu0 0.0
  %201 = vmatpush2.msra.mxu0 0.0
  %202 = vmatprep.subr.mxu0 0.0
  %203 = vmatpush2.msra.mxu0 0.0
  %204 = vmatprep.subr.mxu0 0.0
  %205 = vmatpush2.msra.mxu0 0.0
  %206 = vmatprep.subr.mxu0 0.0
  %207 = vmatpush2.msra.mxu0 0.0
  %208 = vmatprep.mubr.f32.mxu0 0.0
  %209 = vmatmul.mubr.f32.gmra.mxu0 %v139
  %v210 = vpop.f32.mrf.mxu0
  %v211 = vadd.f32 %v136, %v210
  %v212 = vpop.f32.mrf.mxu0
  %213 = vmatprep.mubr.f32.mxu0 0.0
  %214 = vmatmul.mubr.f32.gmra.mxu0 %v142
  %v215 = vpop.f32.mrf.mxu0
  %v216 = vadd.f32 %v136, %v215
  %v217 = vpop.f32.mrf.mxu0
  %218 = vdwg.mxu0
  %219 = vst [vmem:[#allocation2] sm:$0xff] %v211
  %220 = vst [vmem:[#allocation2 + $0x8] sm:$0xff] %v216
  %v221 = vlaneseq
  %v222 = vand.u32 %v221, 127
  %vm223 = vcmp.ge.s32.totalorder %v222, 96
  %v224 = vld [vmem:[%s5] sm:$0xff]
  %v225 = vld [vmem:[%s5 + $0x8] sm:$0xff]
  %v226 = vld [vmem:[%s5 + $0x10] sm:$0xff]
  %v227 = vld [vmem:[%s5 + $0x18] sm:$0xff]
  %v228 = vld [vmem:[%s5 + $0x20] sm:$0xff]
  %v229 = vld [vmem:[%s5 + $0x28] sm:$0xff]
  %v230 = vld [vmem:[%s5 + $0x30] sm:$0xff]
  %v231 = vld [vmem:[%s5 + $0x38] sm:$0xff]
  %v232 = vld [vmem:[%s5 + $0x40] sm:$0xff]
  %v233 = vld [vmem:[%s5 + $0x48] sm:$0xff]
  %v234 = vld [vmem:[%s5 + $0x50] sm:$0xff]
  %v235 = vld [vmem:[%s5 + $0x58] sm:$0xff]
  %v236 = vld [vmem:[%s5 + $0x60] sm:$0xff]
  %v237 = vld [vmem:[%s5 + $0x68] sm:$0xff]
  %v238 = vld [vmem:[%s5 + $0x70] sm:$0xff]
  %v239 = vld [vmem:[%s5 + $0x78] sm:$0xff]
  %240 = vst [vmem:[#allocation4] sm:$0x3] 0.0
  %241 = vst [vmem:[#allocation5] sm:$0x3] 0.0
  %v242 = vld [vmem:[#allocation2] sm:$0x3]
  %v243 = vld [vmem:[#allocation4] sm:$0x3]
  %244 = vmatprep.subr.mxu0 0.0
  %245 = vmatpush1.msra.mxu0 %v239
  %246 = vmatprep.subr.mxu0 0.0
  %247 = vmatpush1.msra.mxu0 %v238
  %248 = vmatprep.subr.mxu0 0.0
  %249 = vmatpush1.msra.mxu0 %v237
  %250 = vmatprep.subr.mxu0 0.0
  %251 = vmatpush1.msra.mxu0 %v236
  %252 = vmatprep.subr.mxu0 0.0
  %253 = vmatpush1.msra.mxu0 %v235
  %254 = vmatprep.subr.mxu0 0.0
  %255 = vmatpush1.msra.mxu0 %v234
  %256 = vmatprep.subr.mxu0 0.0
  %257 = vmatpush1.msra.mxu0 %v233
  %258 = vmatprep.subr.mxu0 0.0
  %259 = vmatpush1.msra.mxu0 %v232
  %260 = vmatprep.subr.mxu0 0.0
  %261 = vmatpush1.msra.mxu0 %v231
  %262 = vmatprep.subr.mxu0 0.0
  %263 = vmatpush1.msra.mxu0 %v230
  %264 = vmatprep.subr.mxu0 0.0
  %265 = vmatpush1.msra.mxu0 %v229
  %266 = vmatprep.subr.mxu0 0.0
  %267 = vmatpush1.msra.mxu0 %v228
  %268 = vmatprep.subr.mxu0 0.0
  %269 = vmatpush1.msra.mxu0 %v227
  %270 = vmatprep.subr.mxu0 0.0
  %271 = vmatpush1.msra.mxu0 %v226
  %272 = vmatprep.subr.mxu0 0.0
  %273 = vmatpush1.msra.mxu0 %v225
  %274 = vmatprep.subr.mxu0 0.0
  %275 = vmatpush1.msra.mxu0 %v224
  %276 = vmatprep.subr.mxu0 0.0
  %277 = vmatpush2.msra.mxu0 0.0
  %278 = vmatprep.subr.mxu0 0.0
  %279 = vmatpush2.msra.mxu0 0.0
  %280 = vmatprep.subr.mxu0 0.0
  %281 = vmatpush2.msra.mxu0 0.0
  %282 = vmatprep.subr.mxu0 0.0
  %283 = vmatpush2.msra.mxu0 0.0
  %284 = vmatprep.subr.mxu0 0.0
  %285 = vmatpush2.msra.mxu0 0.0
  %286 = vmatprep.subr.mxu0 0.0
  %287 = vmatpush2.msra.mxu0 0.0
  %288 = vmatprep.subr.mxu0 0.0
  %289 = vmatpush2.msra.mxu0 0.0
  %290 = vmatprep.subr.mxu0 0.0
  %291 = vmatpush2.msra.mxu0 0.0
  %292 = vmatprep.subr.mxu0 0.0
  %293 = vmatpush2.msra.mxu0 0.0
  %294 = vmatprep.subr.mxu0 0.0
  %295 = vmatpush2.msra.mxu0 0.0
  %296 = vmatprep.subr.mxu0 0.0
  %297 = vmatpush2.msra.mxu0 0.0
  %298 = vmatprep.subr.mxu0 0.0
  %299 = vmatpush2.msra.mxu0 0.0
  %300 = vmatprep.subr.mxu0 0.0
  %301 = vmatpush2.msra.mxu0 0.0
  %302 = vmatprep.subr.mxu0 0.0
  %303 = vmatpush2.msra.mxu0 0.0
  %304 = vmatprep.subr.mxu0 0.0
  %305 = vmatpush2.msra.mxu0 0.0
  %306 = vmatprep.subr.mxu0 0.0
  %307 = vmatpush2.msra.mxu0 0.0
  %308 = vmatprep.mubr.f32.mxu0 0.0
  %309 = vmatmul.mubr.f32.gmra.mxu0 %v243
  %v310 = vpop.f32.mrf.mxu0
  %v311 = vadd.f32 0.0, %v310
  %v312 = vpop.f32.mrf.mxu0
  %313 = vdwg.mxu0
  %v314 = vadd.f32 %v242, %v311
  %v315 = vmul.f32 %v314, 0.5
  %v316 = vsel %vm223, %v314, %v315
  %v317 = vtanh.pop %v316
  %v318 = vmul.f32 %v317, 0.5
  %v319 = vadd.f32 %v318, 0.5
  %v320 = vsel %vm223, %v317, %v319
  %321 = vrot.lane.b32.xlu0 %v320, 64
  %v322 = vpop.permute.xlu0 %321
  %323 = vrot.lane.b32.xlu0 %v320, 96
  %v324 = vpop.permute.xlu0 %323
  %325 = vrot.lane.b32.xlu0 %v320, 32
  %v326 = vpop.permute.xlu0 %325
  %v327 = vld [vmem:[#allocation5] sm:$0x3]
  %v328 = vmul.f32 %v320, %v327
  %v329 = vmul.f32 %v324, %v326
  %v330 = vadd.f32 %v328, %v329
  %v331 = vtanh.pop %v330
  %v332 = vmul.f32 %v322, %v331
  %333 = vst [vmem:[#allocation5] sm:$0x3] %v330
  %334 = vst [vmem:[#allocation4] sm:$0x3] %v332
  %335 = vst [vmem:[#allocation3] sm:$0x3] %v332
  %v336 = vld [vmem:[#allocation2 + $0x2] sm:$0x3]
  %v337 = vld [vmem:[#allocation4] sm:$0x3]
  %338 = vmatprep.subr.mxu0 0.0
  %339 = vmatpush1.msra.mxu0 %v239
  %340 = vmatprep.subr.mxu0 0.0
  %341 = vmatpush1.msra.mxu0 %v238
  %342 = vmatprep.subr.mxu0 0.0
  %343 = vmatpush1.msra.mxu0 %v237
  %344 = vmatprep.subr.mxu0 0.0
  %345 = vmatpush1.msra.mxu0 %v236
  %346 = vmatprep.subr.mxu0 0.0
  %347 = vmatpush1.msra.mxu0 %v235
  %348 = vmatprep.subr.mxu0 0.0
  %349 = vmatpush1.msra.mxu0 %v234
  %350 = vmatprep.subr.mxu0 0.0
  %351 = vmatpush1.msra.mxu0 %v233
  %352 = vmatprep.subr.mxu0 0.0
  %353 = vmatpush1.msra.mxu0 %v232
  %354 = vmatprep.subr.mxu0 0.0
  %355 = vmatpush1.msra.mxu0 %v231
  %356 = vmatprep.subr.mxu0 0.0
  %357 = vmatpush1.msra.mxu0 %v230
  %358 = vmatprep.subr.mxu0 0.0
  %359 = vmatpush1.msra.mxu0 %v229
  %360 = vmatprep.subr.mxu0 0.0
  %361 = vmatpush1.msra.mxu0 %v228
  %362 = vmatprep.subr.mxu0 0.0
  %363 = vmatpush1.msra.mxu0 %v227
  %364 = vmatprep.subr.mxu0 0.0
  %365 = vmatpush1.msra.mxu0 %v226
  %366 = vmatprep.subr.mxu0 0.0
  %367 = vmatpush1.msra.mxu0 %v225
  %368 = vmatprep.subr.mxu0 0.0
  %369 = vmatpush1.msra.mxu0 %v224
  %370 = vmatprep.subr.mxu0 0.0
  %371 = vmatpush2.msra.mxu0 0.0
  %372 = vmatprep.subr.mxu0 0.0
  %373 = vmatpush2.msra.mxu0 0.0
  %374 = vmatprep.subr.mxu0 0.0
  %375 = vmatpush2.msra.mxu0 0.0
  %376 = vmatprep.subr.mxu0 0.0
  %377 = vmatpush2.msra.mxu0 0.0
  %378 = vmatprep.subr.mxu0 0.0
  %379 = vmatpush2.msra.mxu0 0.0
  %380 = vmatprep.subr.mxu0 0.0
  %381 = vmatpush2.msra.mxu0 0.0
  %382 = vmatprep.subr.mxu0 0.0
  %383 = vmatpush2.msra.mxu0 0.0
  %384 = vmatprep.subr.mxu0 0.0
  %385 = vmatpush2.msra.mxu0 0.0
  %386 = vmatprep.subr.mxu0 0.0
  %387 = vmatpush2.msra.mxu0 0.0
  %388 = vmatprep.subr.mxu0 0.0
  %389 = vmatpush2.msra.mxu0 0.0
  %390 = vmatprep.subr.mxu0 0.0
  %391 = vmatpush2.msra.mxu0 0.0
  %392 = vmatprep.subr.mxu0 0.0
  %393 = vmatpush2.msra.mxu0 0.0
  %394 = vmatprep.subr.mxu0 0.0
  %395 = vmatpush2.msra.mxu0 0.0
  %396 = vmatprep.subr.mxu0 0.0
  %397 = vmatpush2.msra.mxu0 0.0
  %398 = vmatprep.subr.mxu0 0.0
  %399 = vmatpush2.msra.mxu0 0.0
  %400 = vmatprep.subr.mxu0 0.0
  %401 = vmatpush2.msra.mxu0 0.0
  %402 = vmatprep.mubr.f32.mxu0 0.0
  %403 = vmatmul.mubr.f32.gmra.mxu0 %v337
  %v404 = vpop.f32.mrf.mxu0
  %v405 = vadd.f32 0.0, %v404
  %v406 = vpop.f32.mrf.mxu0
  %407 = vdwg.mxu0
  %v408 = vadd.f32 %v336, %v405
  %v409 = vmul.f32 %v408, 0.5
  %v410 = vsel %vm223, %v408, %v409
  %v411 = vtanh.pop %v410
  %v412 = vmul.f32 %v411, 0.5
  %v413 = vadd.f32 %v412, 0.5
  %v414 = vsel %vm223, %v411, %v413
  %415 = vrot.lane.b32.xlu0 %v414, 64
  %v416 = vpop.permute.xlu0 %415
  %417 = vrot.lane.b32.xlu0 %v414, 96
  %v418 = vpop.permute.xlu0 %417
  %419 = vrot.lane.b32.xlu0 %v414, 32
  %v420 = vpop.permute.xlu0 %419
  %v421 = vld [vmem:[#allocation5] sm:$0x3]
  %v422 = vmul.f32 %v414, %v421
  %v423 = vmul.f32 %v418, %v420
  %v424 = vadd.f32 %v422, %v423
  %v425 = vtanh.pop %v424
  %v426 = vmul.f32 %v416, %v425
  %427 = vst [vmem:[#allocation5] sm:$0x3] %v424
  %428 = vst [vmem:[#allocation4] sm:$0x3] %v426
  %429 = vst [vmem:[#allocation3 + $0x2] sm:$0x3] %v426
  %v430 = vld [vmem:[#allocation2 + $0x4] sm:$0x3]
  %v431 = vld [vmem:[#allocation4] sm:$0x3]
  %432 = vmatprep.subr.mxu0 0.0
  %433 = vmatpush1.msra.mxu0 %v239
  %434 = vmatprep.subr.mxu0 0.0
  %435 = vmatpush1.msra.mxu0 %v238
  %436 = vmatprep.subr.mxu0 0.0
  %437 = vmatpush1.msra.mxu0 %v237
  %438 = vmatprep.subr.mxu0 0.0
  %439 = vmatpush1.msra.mxu0 %v236
  %440 = vmatprep.subr.mxu0 0.0
  %441 = vmatpush1.msra.mxu0 %v235
  %442 = vmatprep.subr.mxu0 0.0
  %443 = vmatpush1.msra.mxu0 %v234
  %444 = vmatprep.subr.mxu0 0.0
  %445 = vmatpush1.msra.mxu0 %v233
  %446 = vmatprep.subr.mxu0 0.0
  %447 = vmatpush1.msra.mxu0 %v232
  %448 = vmatprep.subr.mxu0 0.0
  %449 = vmatpush1.msra.mxu0 %v231
  %450 = vmatprep.subr.mxu0 0.0
  %451 = vmatpush1.msra.mxu0 %v230
  %452 = vmatprep.subr.mxu0 0.0
  %453 = vmatpush1.msra.mxu0 %v229
  %454 = vmatprep.subr.mxu0 0.0
  %455 = vmatpush1.msra.mxu0 %v228
  %456 = vmatprep.subr.mxu0 0.0
  %457 = vmatpush1.msra.mxu0 %v227
  %458 = vmatprep.subr.mxu0 0.0
  %459 = vmatpush1.msra.mxu0 %v226
  %460 = vmatprep.subr.mxu0 0.0
  %461 = vmatpush1.msra.mxu0 %v225
  %462 = vmatprep.subr.mxu0 0.0
  %463 = vmatpush1.msra.mxu0 %v224
  %464 = vmatprep.subr.mxu0 0.0
  %465 = vmatpush2.msra.mxu0 0.0
  %466 = vmatprep.subr.mxu0 0.0
  %467 = vmatpush2.msra.mxu0 0.0
  %468 = vmatprep.subr.mxu0 0.0
  %469 = vmatpush2.msra.mxu0 0.0
  %470 = vmatprep.subr.mxu0 0.0
  %471 = vmatpush2.msra.mxu0 0.0
  %472 = vmatprep.subr.mxu0 0.0
  %473 = vmatpush2.msra.mxu0 0.0
  %474 = vmatprep.subr.mxu0 0.0
  %475 = vmatpush2.msra.mxu0 0.0
  %476 = vmatprep.subr.mxu0 0.0
  %477 = vmatpush2.msra.mxu0 0.0
  %478 = vmatprep.subr.mxu0 0.0
  %479 = vmatpush2.msra.mxu0 0.0
  %480 = vmatprep.subr.mxu0 0.0
  %481 = vmatpush2.msra.mxu0 0.0
  %482 = vmatprep.subr.mxu0 0.0
  %483 = vmatpush2.msra.mxu0 0.0
  %484 = vmatprep.subr.mxu0 0.0
  %485 = vmatpush2.msra.mxu0 0.0
  %486 = vmatprep.subr.mxu0 0.0
  %487 = vmatpush2.msra.mxu0 0.0
  %488 = vmatprep.subr.mxu0 0.0
  %489 = vmatpush2.msra.mxu0 0.0
  %490 = vmatprep.subr.mxu0 0.0
  %491 = vmatpush2.msra.mxu0 0.0
  %492 = vmatprep.subr.mxu0 0.0
  %493 = vmatpush2.msra.mxu0 0.0
  %494 = vmatprep.subr.mxu0 0.0
  %495 = vmatpush2.msra.mxu0 0.0
  %496 = vmatprep.mubr.f32.mxu0 0.0
  %497 = vmatmul.mubr.f32.gmra.mxu0 %v431
  %v498 = vpop.f32.mrf.mxu0
  %v499 = vadd.f32 0.0, %v498
  %v500 = vpop.f32.mrf.mxu0
  %501 = vdwg.mxu0
  %v502 = vadd.f32 %v430, %v499
  %v503 = vmul.f32 %v502, 0.5
  %v504 = vsel %vm223, %v502, %v503
  %v505 = vtanh.pop %v504
  %v506 = vmul.f32 %v505, 0.5
  %v507 = vadd.f32 %v506, 0.5
  %v508 = vsel %vm223, %v505, %v507
  %509 = vrot.lane.b32.xlu0 %v508, 64
  %v510 = vpop.permute.xlu0 %509
  %511 = vrot.lane.b32.xlu0 %v508, 96
  %v512 = vpop.permute.xlu0 %511
  %513 = vrot.lane.b32.xlu0 %v508, 32
  %v514 = vpop.permute.xlu0 %513
  %v515 = vld [vmem:[#allocation5] sm:$0x3]
  %v516 = vmul.f32 %v508, %v515
  %v517 = vmul.f32 %v512, %v514
  %v518 = vadd.f32 %v516, %v517
  %v519 = vtanh.pop %v518
  %v520 = vmul.f32 %v510, %v519
  %521 = vst [vmem:[#allocation5] sm:$0x3] %v518
  %522 = vst [vmem:[#allocation4] sm:$0x3] %v520
  %523 = vst [vmem:[#allocation3 + $0x4] sm:$0x3] %v520
  %v524 = vld [vmem:[#allocation2 + $0x6] sm:$0x3]
  %v525 = vld [vmem:[#allocation4] sm:$0x3]
  %526 = vmatprep.subr.mxu0 0.0
  %527 = vmatpush1.msra.mxu0 %v239
  %528 = vmatprep.subr.mxu0 0.0
  %529 = vmatpush1.msra.mxu0 %v238
  %530 = vmatprep.subr.mxu0 0.0
  %531 = vmatpush1.msra.mxu0 %v237
  %532 = vmatprep.subr.mxu0 0.0
  %533 = vmatpush1.msra.mxu0 %v236
  %534 = vmatprep.subr.mxu0 0.0
  %535 = vmatpush1.msra.mxu0 %v235
  %536 = vmatprep.subr.mxu0 0.0
  %537 = vmatpush1.msra.mxu0 %v234
  %538 = vmatprep.subr.mxu0 0.0
  %539 = vmatpush1.msra.mxu0 %v233
  %540 = vmatprep.subr.mxu0 0.0
  %541 = vmatpush1.msra.mxu0 %v232
  %542 = vmatprep.subr.mxu0 0.0
  %543 = vmatpush1.msra.mxu0 %v231
  %544 = vmatprep.subr.mxu0 0.0
  %545 = vmatpush1.msra.mxu0 %v230
  %546 = vmatprep.subr.mxu0 0.0
  %547 = vmatpush1.msra.mxu0 %v229
  %548 = vmatprep.subr.mxu0 0.0
  %549 = vmatpush1.msra.mxu0 %v228
  %550 = vmatprep.subr.mxu0 0.0
  %551 = vmatpush1.msra.mxu0 %v227
  %552 = vmatprep.subr.mxu0 0.0
  %553 = vmatpush1.msra.mxu0 %v226
  %554 = vmatprep.subr.mxu0 0.0
  %555 = vmatpush1.msra.mxu0 %v225
  %556 = vmatprep.subr.mxu0 0.0
  %557 = vmatpush1.msra.mxu0 %v224
  %558 = vmatprep.subr.mxu0 0.0
  %559 = vmatpush2.msra.mxu0 0.0
  %560 = vmatprep.subr.mxu0 0.0
  %561 = vmatpush2.msra.mxu0 0.0
  %562 = vmatprep.subr.mxu0 0.0
  %563 = vmatpush2.msra.mxu0 0.0
  %564 = vmatprep.subr.mxu0 0.0
  %565 = vmatpush2.msra.mxu0 0.0
  %566 = vmatprep.subr.mxu0 0.0
  %567 = vmatpush2.msra.mxu0 0.0
  %568 = vmatprep.subr.mxu0 0.0
  %569 = vmatpush2.msra.mxu0 0.0
  %570 = vmatprep.subr.mxu0 0.0
  %571 = vmatpush2.msra.mxu0 0.0
  %572 = vmatprep.subr.mxu0 0.0
  %573 = vmatpush2.msra.mxu0 0.0
  %574 = vmatprep.subr.mxu0 0.0
  %575 = vmatpush2.msra.mxu0 0.0
  %576 = vmatprep.subr.mxu0 0.0
  %577 = vmatpush2.msra.mxu0 0.0
  %578 = vmatprep.subr.mxu0 0.0
  %579 = vmatpush2.msra.mxu0 0.0
  %580 = vmatprep.subr.mxu0 0.0
  %581 = vmatpush2.msra.mxu0 0.0
  %582 = vmatprep.subr.mxu0 0.0
  %583 = vmatpush2.msra.mxu0 0.0
  %584 = vmatprep.subr.mxu0 0.0
  %585 = vmatpush2.msra.mxu0 0.0
  %586 = vmatprep.subr.mxu0 0.0
  %587 = vmatpush2.msra.mxu0 0.0
  %588 = vmatprep.subr.mxu0 0.0
  %589 = vmatpush2.msra.mxu0 0.0
  %590 = vmatprep.mubr.f32.mxu0 0.0
  %591 = vmatmul.mubr.f32.gmra.mxu0 %v525
  %v592 = vpop.f32.mrf.mxu0
  %v593 = vadd.f32 0.0, %v592
  %v594 = vpop.f32.mrf.mxu0
  %595 = vdwg.mxu0
  %v596 = vadd.f32 %v524, %v593
  %v597 = vmul.f32 %v596, 0.5
  %v598 = vsel %vm223, %v596, %v597
  %v599 = vtanh.pop %v598
  %v600 = vmul.f32 %v599, 0.5
  %v601 = vadd.f32 %v600, 0.5
  %v602 = vsel %vm223, %v599, %v601
  %603 = vrot.lane.b32.xlu0 %v602, 64
  %v604 = vpop.permute.xlu0 %603
  %605 = vrot.lane.b32.xlu0 %v602, 96
  %v606 = vpop.permute.xlu0 %605
  %607 = vrot.lane.b32.xlu0 %v602, 32
  %v608 = vpop.permute.xlu0 %607
  %v609 = vld [vmem:[#allocation5] sm:$0x3]
  %v610 = vmul.f32 %v602, %v609
  %v611 = vmul.f32 %v606, %v608
  %v612 = vadd.f32 %v610, %v611
  %v613 = vtanh.pop %v612
  %v614 = vmul.f32 %v604, %v613
  %615 = vst [vmem:[#allocation5] sm:$0x3] %v612
  %616 = vst [vmem:[#allocation4] sm:$0x3] %v614
  %617 = vst [vmem:[#allocation3 + $0x6] sm:$0x3] %v614
  %v618 = vld [vmem:[#allocation2 + $0x8] sm:$0x3]
  %v619 = vld [vmem:[#allocation4] sm:$0x3]
  %620 = vmatprep.subr.mxu0 0.0
  %621 = vmatpush1.msra.mxu0 %v239
  %622 = vmatprep.subr.mxu0 0.0
  %623 = vmatpush1.msra.mxu0 %v238
  %624 = vmatprep.subr.mxu0 0.0
  %625 = vmatpush1.msra.mxu0 %v237
  %626 = vmatprep.subr.mxu0 0.0
  %627 = vmatpush1.msra.mxu0 %v236
  %628 = vmatprep.subr.mxu0 0.0
  %629 = vmatpush1.msra.mxu0 %v235
  %630 = vmatprep.subr.mxu0 0.0
  %631 = vmatpush1.msra.mxu0 %v234
  %632 = vmatprep.subr.mxu0 0.0
  %633 = vmatpush1.msra.mxu0 %v233
  %634 = vmatprep.subr.mxu0 0.0
  %635 = vmatpush1.msra.mxu0 %v232
  %636 = vmatprep.subr.mxu0 0.0
  %637 = vmatpush1.msra.mxu0 %v231
  %638 = vmatprep.subr.mxu0 0.0
  %639 = vmatpush1.msra.mxu0 %v230
  %640 = vmatprep.subr.mxu0 0.0
  %641 = vmatpush1.msra.mxu0 %v229
  %642 = vmatprep.subr.mxu0 0.0
  %643 = vmatpush1.msra.mxu0 %v228
  %644 = vmatprep.subr.mxu0 0.0
  %645 = vmatpush1.msra.mxu0 %v227
  %646 = vmatprep.subr.mxu0 0.0
  %647 = vmatpush1.msra.mxu0 %v226
  %648 = vmatprep.subr.mxu0 0.0
  %649 = vmatpush1.msra.mxu0 %v225
  %650 = vmatprep.subr.mxu0 0.0
  %651 = vmatpush1.msra.mxu0 %v224
  %652 = vmatprep.subr.mxu0 0.0
  %653 = vmatpush2.msra.mxu0 0.0
  %654 = vmatprep.subr.mxu0 0.0
  %655 = vmatpush2.msra.mxu0 0.0
  %656 = vmatprep.subr.mxu0 0.0
  %657 = vmatpush2.msra.mxu0 0.0
  %658 = vmatprep.subr.mxu0 0.0
  %659 = vmatpush2.msra.mxu0 0.0
  %660 = vmatprep.subr.mxu0 0.0
  %661 = vmatpush2.msra.mxu0 0.0
  %662 = vmatprep.subr.mxu0 0.0
  %663 = vmatpush2.msra.mxu0 0.0
  %664 = vmatprep.subr.mxu0 0.0
  %665 = vmatpush2.msra.mxu0 0.0
  %666 = vmatprep.subr.mxu0 0.0
  %667 = vmatpush2.msra.mxu0 0.0
  %668 = vmatprep.subr.mxu0 0.0
  %669 = vmatpush2.msra.mxu0 0.0
  %670 = vmatprep.subr.mxu0 0.0
  %671 = vmatpush2.msra.mxu0 0.0
  %672 = vmatprep.subr.mxu0 0.0
  %673 = vmatpush2.msra.mxu0 0.0
  %674 = vmatprep.subr.mxu0 0.0
  %675 = vmatpush2.msra.mxu0 0.0
  %676 = vmatprep.subr.mxu0 0.0
  %677 = vmatpush2.msra.mxu0 0.0
  %678 = vmatprep.subr.mxu0 0.0
  %679 = vmatpush2.msra.mxu0 0.0
  %680 = vmatprep.subr.mxu0 0.0
  %681 = vmatpush2.msra.mxu0 0.0
  %682 = vmatprep.subr.mxu0 0.0
  %683 = vmatpush2.msra.mxu0 0.0
  %684 = vmatprep.mubr.f32.mxu0 0.0
  %685 = vmatmul.mubr.f32.gmra.mxu0 %v619
  %v686 = vpop.f32.mrf.mxu0
  %v687 = vadd.f32 0.0, %v686
  %v688 = vpop.f32.mrf.mxu0
  %689 = vdwg.mxu0
  %v690 = vadd.f32 %v618, %v687
  %v691 = vmul.f32 %v690, 0.5
  %v692 = vsel %vm223, %v690, %v691
  %v693 = vtanh.pop %v692
  %v694 = vmul.f32 %v693, 0.5
  %v695 = vadd.f32 %v694, 0.5
  %v696 = vsel %vm223, %v693, %v695
  %697 = vrot.lane.b32.xlu0 %v696, 64
  %v698 = vpop.permute.xlu0 %697
  %699 = vrot.lane.b32.xlu0 %v696, 96
  %v700 = vpop.permute.xlu0 %699
  %701 = vrot.lane.b32.xlu0 %v696, 32
  %v702 = vpop.permute.xlu0 %701
  %v703 = vld [vmem:[#allocation5] sm:$0x3]
  %v704 = vmul.f32 %v696, %v703
  %v705 = vmul.f32 %v700, %v702
  %v706 = vadd.f32 %v704, %v705
  %v707 = vtanh.pop %v706
  %v708 = vmul.f32 %v698, %v707
  %709 = vst [vmem:[#allocation5] sm:$0x3] %v706
  %710 = vst [vmem:[#allocation4] sm:$0x3] %v708
  %711 = vst [vmem:[#allocation3 + $0x8] sm:$0x3] %v708
  %v712 = vld [vmem:[#allocation2 + $0xa] sm:$0x3]
  %v713 = vld [vmem:[#allocation4] sm:$0x3]
  %714 = vmatprep.subr.mxu0 0.0
  %715 = vmatpush1.msra.mxu0 %v239
  %716 = vmatprep.subr.mxu0 0.0
  %717 = vmatpush1.msra.mxu0 %v238
  %718 = vmatprep.subr.mxu0 0.0
  %719 = vmatpush1.msra.mxu0 %v237
  %720 = vmatprep.subr.mxu0 0.0
  %721 = vmatpush1.msra.mxu0 %v236
  %722 = vmatprep.subr.mxu0 0.0
  %723 = vmatpush1.msra.mxu0 %v235
  %724 = vmatprep.subr.mxu0 0.0
  %725 = vmatpush1.msra.mxu0 %v234
  %726 = vmatprep.subr.mxu0 0.0
  %727 = vmatpush1.msra.mxu0 %v233
  %728 = vmatprep.subr.mxu0 0.0
  %729 = vmatpush1.msra.mxu0 %v232
  %730 = vmatprep.subr.mxu0 0.0
  %731 = vmatpush1.msra.mxu0 %v231
  %732 = vmatprep.subr.mxu0 0.0
  %733 = vmatpush1.msra.mxu0 %v230
  %734 = vmatprep.subr.mxu0 0.0
  %735 = vmatpush1.msra.mxu0 %v229
  %736 = vmatprep.subr.mxu0 0.0
  %737 = vmatpush1.msra.mxu0 %v228
  %738 = vmatprep.subr.mxu0 0.0
  %739 = vmatpush1.msra.mxu0 %v227
  %740 = vmatprep.subr.mxu0 0.0
  %741 = vmatpush1.msra.mxu0 %v226
  %742 = vmatprep.subr.mxu0 0.0
  %743 = vmatpush1.msra.mxu0 %v225
  %744 = vmatprep.subr.mxu0 0.0
  %745 = vmatpush1.msra.mxu0 %v224
  %746 = vmatprep.subr.mxu0 0.0
  %747 = vmatpush2.msra.mxu0 0.0
  %748 = vmatprep.subr.mxu0 0.0
  %749 = vmatpush2.msra.mxu0 0.0
  %750 = vmatprep.subr.mxu0 0.0
  %751 = vmatpush2.msra.mxu0 0.0
  %752 = vmatprep.subr.mxu0 0.0
  %753 = vmatpush2.msra.mxu0 0.0
  %754 = vmatprep.subr.mxu0 0.0
  %755 = vmatpush2.msra.mxu0 0.0
  %756 = vmatprep.subr.mxu0 0.0
  %757 = vmatpush2.msra.mxu0 0.0
  %758 = vmatprep.subr.mxu0 0.0
  %759 = vmatpush2.msra.mxu0 0.0
  %760 = vmatprep.subr.mxu0 0.0
  %761 = vmatpush2.msra.mxu0 0.0
  %762 = vmatprep.subr.mxu0 0.0
  %763 = vmatpush2.msra.mxu0 0.0
  %764 = vmatprep.subr.mxu0 0.0
  %765 = vmatpush2.msra.mxu0 0.0
  %766 = vmatprep.subr.mxu0 0.0
  %767 = vmatpush2.msra.mxu0 0.0
  %768 = vmatprep.subr.mxu0 0.0
  %769 = vmatpush2.msra.mxu0 0.0
  %770 = vmatprep.subr.mxu0 0.0
  %771 = vmatpush2.msra.mxu0 0.0
  %772 = vmatprep.subr.mxu0 0.0
  %773 = vmatpush2.msra.mxu0 0.0
  %774 = vmatprep.subr.mxu0 0.0
  %775 = vmatpush2.msra.mxu0 0.0
  %776 = vmatprep.subr.mxu0 0.0
  %777 = vmatpush2.msra.mxu0 0.0
  %778 = vmatprep.mubr.f32.mxu0 0.0
  %779 = vmatmul.mubr.f32.gmra.mxu0 %v713
  %v780 = vpop.f32.mrf.mxu0
  %v781 = vadd.f32 0.0, %v780
  %v782 = vpop.f32.mrf.mxu0
  %783 = vdwg.mxu0
  %v784 = vadd.f32 %v712, %v781
  %v785 = vmul.f32 %v784, 0.5
  %v786 = vsel %vm223, %v784, %v785
  %v787 = vtanh.pop %v786
  %v788 = vmul.f32 %v787, 0.5
  %v789 = vadd.f32 %v788, 0.5
  %v790 = vsel %vm223, %v787, %v789
  %791 = vrot.lane.b32.xlu0 %v790, 64
  %v792 = vpop.permute.xlu0 %791
  %793 = vrot.lane.b32.xlu0 %v790, 96
  %v794 = vpop.permute.xlu0 %793
  %795 = vrot.lane.b32.xlu0 %v790, 32
  %v796 = vpop.permute.xlu0 %795
  %v797 = vld [vmem:[#allocation5] sm:$0x3]
  %v798 = vmul.f32 %v790, %v797
  %v799 = vmul.f32 %v794, %v796
  %v800 = vadd.f32 %v798, %v799
  %v801 = vtanh.pop %v800
  %v802 = vmul.f32 %v792, %v801
  %803 = vst [vmem:[#allocation5] sm:$0x3] %v800
  %804 = vst [vmem:[#allocation4] sm:$0x3] %v802
  %805 = vst [vmem:[#allocation3 + $0xa] sm:$0x3] %v802
  %v806 = vld [vmem:[#allocation2 + $0xc] sm:$0x3]
  %v807 = vld [vmem:[#allocation4] sm:$0x3]
  %808 = vmatprep.subr.mxu0 0.0
  %809 = vmatpush1.msra.mxu0 %v239
  %810 = vmatprep.subr.mxu0 0.0
  %811 = vmatpush1.msra.mxu0 %v238
  %812 = vmatprep.subr.mxu0 0.0
  %813 = vmatpush1.msra.mxu0 %v237
  %814 = vmatprep.subr.mxu0 0.0
  %815 = vmatpush1.msra.mxu0 %v236
  %816 = vmatprep.subr.mxu0 0.0
  %817 = vmatpush1.msra.mxu0 %v235
  %818 = vmatprep.subr.mxu0 0.0
  %819 = vmatpush1.msra.mxu0 %v234
  %820 = vmatprep.subr.mxu0 0.0
  %821 = vmatpush1.msra.mxu0 %v233
  %822 = vmatprep.subr.mxu0 0.0
  %823 = vmatpush1.msra.mxu0 %v232
  %824 = vmatprep.subr.mxu0 0.0
  %825 = vmatpush1.msra.mxu0 %v231
  %826 = vmatprep.subr.mxu0 0.0
  %827 = vmatpush1.msra.mxu0 %v230
  %828 = vmatprep.subr.mxu0 0.0
  %829 = vmatpush1.msra.mxu0 %v229
  %830 = vmatprep.subr.mxu0 0.0
  %831 = vmatpush1.msra.mxu0 %v228
  %832 = vmatprep.subr.mxu0 0.0
  %833 = vmatpush1.msra.mxu0 %v227
  %834 = vmatprep.subr.mxu0 0.0
  %835 = vmatpush1.msra.mxu0 %v226
  %836 = vmatprep.subr.mxu0 0.0
  %837 = vmatpush1.msra.mxu0 %v225
  %838 = vmatprep.subr.mxu0 0.0
  %839 = vmatpush1.msra.mxu0 %v224
  %840 = vmatprep.subr.mxu0 0.0
  %841 = vmatpush2.msra.mxu0 0.0
  %842 = vmatprep.subr.mxu0 0.0
  %843 = vmatpush2.msra.mxu0 0.0
  %844 = vmatprep.subr.mxu0 0.0
  %845 = vmatpush2.msra.mxu0 0.0
  %846 = vmatprep.subr.mxu0 0.0
  %847 = vmatpush2.msra.mxu0 0.0
  %848 = vmatprep.subr.mxu0 0.0
  %849 = vmatpush2.msra.mxu0 0.0
  %850 = vmatprep.subr.mxu0 0.0
  %851 = vmatpush2.msra.mxu0 0.0
  %852 = vmatprep.subr.mxu0 0.0
  %853 = vmatpush2.msra.mxu0 0.0
  %854 = vmatprep.subr.mxu0 0.0
  %855 = vmatpush2.msra.mxu0 0.0
  %856 = vmatprep.subr.mxu0 0.0
  %857 = vmatpush2.msra.mxu0 0.0
  %858 = vmatprep.subr.mxu0 0.0
  %859 = vmatpush2.msra.mxu0 0.0
  %860 = vmatprep.subr.mxu0 0.0
  %861 = vmatpush2.msra.mxu0 0.0
  %862 = vmatprep.subr.mxu0 0.0
  %863 = vmatpush2.msra.mxu0 0.0
  %864 = vmatprep.subr.mxu0 0.0
  %865 = vmatpush2.msra.mxu0 0.0
  %866 = vmatprep.subr.mxu0 0.0
  %867 = vmatpush2.msra.mxu0 0.0
  %868 = vmatprep.subr.mxu0 0.0
  %869 = vmatpush2.msra.mxu0 0.0
  %870 = vmatprep.subr.mxu0 0.0
  %871 = vmatpush2.msra.mxu0 0.0
  %872 = vmatprep.mubr.f32.mxu0 0.0
  %873 = vmatmul.mubr.f32.gmra.mxu0 %v807
  %v874 = vpop.f32.mrf.mxu0
  %v875 = vadd.f32 0.0, %v874
  %v876 = vpop.f32.mrf.mxu0
  %877 = vdwg.mxu0
  %v878 = vadd.f32 %v806, %v875
  %v879 = vmul.f32 %v878, 0.5
  %v880 = vsel %vm223, %v878, %v879
  %v881 = vtanh.pop %v880
  %v882 = vmul.f32 %v881, 0.5
  %v883 = vadd.f32 %v882, 0.5
  %v884 = vsel %vm223, %v881, %v883
  %885 = vrot.lane.b32.xlu0 %v884, 64
  %v886 = vpop.permute.xlu0 %885
  %887 = vrot.lane.b32.xlu0 %v884, 96
  %v888 = vpop.permute.xlu0 %887
  %889 = vrot.lane.b32.xlu0 %v884, 32
  %v890 = vpop.permute.xlu0 %889
  %v891 = vld [vmem:[#allocation5] sm:$0x3]
  %v892 = vmul.f32 %v884, %v891
  %v893 = vmul.f32 %v888, %v890
  %v894 = vadd.f32 %v892, %v893
  %v895 = vtanh.pop %v894
  %v896 = vmul.f32 %v886, %v895
  %897 = vst [vmem:[#allocation5] sm:$0x3] %v894
  %898 = vst [vmem:[#allocation4] sm:$0x3] %v896
  %899 = vst [vmem:[#allocation3 + $0xc] sm:$0x3] %v896
  %v900 = vld [vmem:[#allocation2 + $0xe] sm:$0x3]
  %v901 = vld [vmem:[#allocation4] sm:$0x3]
  %902 = vmatprep.subr.mxu0 0.0
  %903 = vmatpush1.msra.mxu0 %v239
  %904 = vmatprep.subr.mxu0 0.0
  %905 = vmatpush1.msra.mxu0 %v238
  %906 = vmatprep.subr.mxu0 0.0
  %907 = vmatpush1.msra.mxu0 %v237
  %908 = vmatprep.subr.mxu0 0.0
  %909 = vmatpush1.msra.mxu0 %v236
  %910 = vmatprep.subr.mxu0 0.0
  %911 = vmatpush1.msra.mxu0 %v235
  %912 = vmatprep.subr.mxu0 0.0
  %913 = vmatpush1.msra.mxu0 %v234
  %914 = vmatprep.subr.mxu0 0.0
  %915 = vmatpush1.msra.mxu0 %v233
  %916 = vmatprep.subr.mxu0 0.0
  %917 = vmatpush1.msra.mxu0 %v232
  %918 = vmatprep.subr.mxu0 0.0
  %919 = vmatpush1.msra.mxu0 %v231
  %920 = vmatprep.subr.mxu0 0.0
  %921 = vmatpush1.msra.mxu0 %v230
  %922 = vmatprep.subr.mxu0 0.0
  %923 = vmatpush1.msra.mxu0 %v229
  %924 = vmatprep.subr.mxu0 0.0
  %925 = vmatpush1.msra.mxu0 %v228
  %926 = vmatprep.subr.mxu0 0.0
  %927 = vmatpush1.msra.mxu0 %v227
  %928 = vmatprep.subr.mxu0 0.0
  %929 = vmatpush1.msra.mxu0 %v226
  %930 = vmatprep.subr.mxu0 0.0
  %931 = vmatpush1.msra.mxu0 %v225
  %932 = vmatprep.subr.mxu0 0.0
  %933 = vmatpush1.msra.mxu0 %v224
  %934 = vmatprep.subr.mxu0 0.0
  %935 = vmatpush2.msra.mxu0 0.0
  %936 = vmatprep.subr.mxu0 0.0
  %937 = vmatpush2.msra.mxu0 0.0
  %938 = vmatprep.subr.mxu0 0.0
  %939 = vmatpush2.msra.mxu0 0.0
  %940 = vmatprep.subr.mxu0 0.0
  %941 = vmatpush2.msra.mxu0 0.0
  %942 = vmatprep.subr.mxu0 0.0
  %943 = vmatpush2.msra.mxu0 0.0
  %944 = vmatprep.subr.mxu0 0.0
  %945 = vmatpush2.msra.mxu0 0.0
  %946 = vmatprep.subr.mxu0 0.0
  %947 = vmatpush2.msra.mxu0 0.0
  %948 = vmatprep.subr.mxu0 0.0
  %949 = vmatpush2.msra.mxu0 0.0
  %950 = vmatprep.subr.mxu0 0.0
  %951 = vmatpush2.msra.mxu0 0.0
  %952 = vmatprep.subr.mxu0 0.0
  %953 = vmatpush2.msra.mxu0 0.0
  %954 = vmatprep.subr.mxu0 0.0
  %955 = vmatpush2.msra.mxu0 0.0
  %956 = vmatprep.subr.mxu0 0.0
  %957 = vmatpush2.msra.mxu0 0.0
  %958 = vmatprep.subr.mxu0 0.0
  %959 = vmatpush2.msra.mxu0 0.0
  %960 = vmatprep.subr.mxu0 0.0
  %961 = vmatpush2.msra.mxu0 0.0
  %962 = vmatprep.subr.mxu0 0.0
  %963 = vmatpush2.msra.mxu0 0.0
  %964 = vmatprep.subr.mxu0 0.0
  %965 = vmatpush2.msra.mxu0 0.0
  %966 = vmatprep.mubr.f32.mxu0 0.0
  %967 = vmatmul.mubr.f32.gmra.mxu0 %v901
  %v968 = vpop.f32.mrf.mxu0
  %v969 = vadd.f32 0.0, %v968
  %v970 = vpop.f32.mrf.mxu0
  %971 = vdwg.mxu0
  %v972 = vadd.f32 %v900, %v969
  %v973 = vmul.f32 %v972, 0.5
  %v974 = vsel %vm223, %v972, %v973
  %v975 = vtanh.pop %v974
  %v976 = vmul.f32 %v975, 0.5
  %v977 = vadd.f32 %v976, 0.5
  %v978 = vsel %vm223, %v975, %v977
  %979 = vrot.lane.b32.xlu0 %v978, 64
  %v980 = vpop.permute.xlu0 %979
  %981 = vrot.lane.b32.xlu0 %v978, 96
  %v982 = vpop.permute.xlu0 %981
  %983 = vrot.lane.b32.xlu0 %v978, 32
  %v984 = vpop.permute.xlu0 %983
  %v985 = vld [vmem:[#allocation5] sm:$0x3]
  %v986 = vmul.f32 %v978, %v985
  %v987 = vmul.f32 %v982, %v984
  %v988 = vadd.f32 %v986, %v987
  %v989 = vtanh.pop %v988
  %v990 = vmul.f32 %v980, %v989
  %991 = vst [vmem:[#allocation5] sm:$0x3] %v988
  %992 = vst [vmem:[#allocation4] sm:$0x3] %v990
  %993 = vst [vmem:[#allocation3 + $0xe] sm:$0x3] %v990
  %v994 = vld [vmem:[#allocation3] sm:$0xff]
  %v995 = vld [vmem:[#allocation3 + $0x8] sm:$0xff]
  %s996 = scalar_lea.vmem %s5, 128
  %v997 = vld [vmem:[%s996] sm:$0xff]
  %v998 = vld [vmem:[%s996 + $0x8] sm:$0xff]
  %v999 = vld [vmem:[%s996 + $0x10] sm:$0xff]
  %v1000 = vld [vmem:[%s996 + $0x18] sm:$0xff]
  %v1001 = vld [vmem:[%s996 + $0x20] sm:$0xff]
  %v1002 = vld [vmem:[%s996 + $0x28] sm:$0xff]
  %v1003 = vld [vmem:[%s996 + $0x30] sm:$0xff]
  %v1004 = vld [vmem:[%s996 + $0x38] sm:$0xff]
  %v1005 = vld [vmem:[%s996 + $0x40] sm:$0xff]
  %v1006 = vld [vmem:[%s996 + $0x48] sm:$0xff]
  %v1007 = vld [vmem:[%s996 + $0x50] sm:$0xff]
  %v1008 = vld [vmem:[%s996 + $0x58] sm:$0xff]
  %v1009 = vld [vmem:[%s996 + $0x60] sm:$0xff]
  %v1010 = vld [vmem:[%s996 + $0x68] sm:$0xff]
  %v1011 = vld [vmem:[%s996 + $0x70] sm:$0xff]
  %v1012 = vld [vmem:[%s996 + $0x78] sm:$0xff]
  %v1013 = vld [vmem:[%s6 + $0x1] sm:$0x1]
  %v1014 = vlaneseq
  %v1015 = vshrl.u32 %v1014, 7
  %v1016 = vsub.s32 0, %v1015
  %v1017 = vrot.slane %v1013, %v1016
  %1018 = vmatprep.subr.mxu0 0.0
  %1019 = vmatpush1.msra.mxu0 %v1012
  %1020 = vmatprep.subr.mxu0 0.0
  %1021 = vmatpush1.msra.mxu0 %v1011
  %1022 = vmatprep.subr.mxu0 0.0
  %1023 = vmatpush1.msra.mxu0 %v1010
  %1024 = vmatprep.subr.mxu0 0.0
  %1025 = vmatpush1.msra.mxu0 %v1009
  %1026 = vmatprep.subr.mxu0 0.0
  %1027 = vmatpush1.msra.mxu0 %v1008
  %1028 = vmatprep.subr.mxu0 0.0
  %1029 = vmatpush1.msra.mxu0 %v1007
  %1030 = vmatprep.subr.mxu0 0.0
  %1031 = vmatpush1.msra.mxu0 %v1006
  %1032 = vmatprep.subr.mxu0 0.0
  %1033 = vmatpush1.msra.mxu0 %v1005
  %1034 = vmatprep.subr.mxu0 0.0
  %1035 = vmatpush1.msra.mxu0 %v1004
  %1036 = vmatprep.subr.mxu0 0.0
  %1037 = vmatpush1.msra.mxu0 %v1003
  %1038 = vmatprep.subr.mxu0 0.0
  %1039 = vmatpush1.msra.mxu0 %v1002
  %1040 = vmatprep.subr.mxu0 0.0
  %1041 = vmatpush1.msra.mxu0 %v1001
  %1042 = vmatprep.subr.mxu0 0.0
  %1043 = vmatpush1.msra.mxu0 %v1000
  %1044 = vmatprep.subr.mxu0 0.0
  %1045 = vmatpush1.msra.mxu0 %v999
  %1046 = vmatprep.subr.mxu0 0.0
  %1047 = vmatpush1.msra.mxu0 %v998
  %1048 = vmatprep.subr.mxu0 0.0
  %1049 = vmatpush1.msra.mxu0 %v997
  %1050 = vmatprep.subr.mxu0 0.0
  %1051 = vmatpush2.msra.mxu0 0.0
  %1052 = vmatprep.subr.mxu0 0.0
  %1053 = vmatpush2.msra.mxu0 0.0
  %1054 = vmatprep.subr.mxu0 0.0
  %1055 = vmatpush2.msra.mxu0 0.0
  %1056 = vmatprep.subr.mxu0 0.0
  %1057 = vmatpush2.msra.mxu0 0.0
  %1058 = vmatprep.subr.mxu0 0.0
  %1059 = vmatpush2.msra.mxu0 0.0
  %1060 = vmatprep.subr.mxu0 0.0
  %1061 = vmatpush2.msra.mxu0 0.0
  %1062 = vmatprep.subr.mxu0 0.0
  %1063 = vmatpush2.msra.mxu0 0.0
  %1064 = vmatprep.subr.mxu0 0.0
  %1065 = vmatpush2.msra.mxu0 0.0
  %1066 = vmatprep.subr.mxu0 0.0
  %1067 = vmatpush2.msra.mxu0 0.0
  %1068 = vmatprep.subr.mxu0 0.0
  %1069 = vmatpush2.msra.mxu0 0.0
  %1070 = vmatprep.subr.mxu0 0.0
  %1071 = vmatpush2.msra.mxu0 0.0
  %1072 = vmatprep.subr.mxu0 0.0
  %1073 = vmatpush2.msra.mxu0 0.0
  %1074 = vmatprep.subr.mxu0 0.0
  %1075 = vmatpush2.msra.mxu0 0.0
  %1076 = vmatprep.subr.mxu0 0.0
  %1077 = vmatpush2.msra.mxu0 0.0
  %1078 = vmatprep.subr.mxu0 0.0
  %1079 = vmatpush2.msra.mxu0 0.0
  %1080 = vmatprep.subr.mxu0 0.0
  %1081 = vmatpush2.msra.mxu0 0.0
  %1082 = vmatprep.mubr.f32.mxu0 0.0
  %1083 = vmatmul.mubr.f32.gmra.mxu0 %v994
  %v1084 = vpop.f32.mrf.mxu0
  %v1085 = vadd.f32 %v1017, %v1084
  %v1086 = vpop.f32.mrf.mxu0
  %1087 = vmatprep.mubr.f32.mxu0 0.0
  %1088 = vmatmul.mubr.f32.gmra.mxu0 %v995
  %v1089 = vpop.f32.mrf.mxu0
  %v1090 = vadd.f32 %v1017, %v1089
  %v1091 = vpop.f32.mrf.mxu0
  %1092 = vdwg.mxu0
  %1093 = vst [vmem:[#allocation2] sm:$0xff] %v1085
  %1094 = vst [vmem:[#allocation2 + $0x8] sm:$0xff] %v1090
  %s1095 = scalar_lea.vmem %s5, 256
  %v1096 = vld [vmem:[%s1095] sm:$0xff]
  %v1097 = vld [vmem:[%s1095 + $0x8] sm:$0xff]
  %v1098 = vld [vmem:[%s1095 + $0x10] sm:$0xff]
  %v1099 = vld [vmem:[%s1095 + $0x18] sm:$0xff]
  %v1100 = vld [vmem:[%s1095 + $0x20] sm:$0xff]
  %v1101 = vld [vmem:[%s1095 + $0x28] sm:$0xff]
  %v1102 = vld [vmem:[%s1095 + $0x30] sm:$0xff]
  %v1103 = vld [vmem:[%s1095 + $0x38] sm:$0xff]
  %v1104 = vld [vmem:[%s1095 + $0x40] sm:$0xff]
  %v1105 = vld [vmem:[%s1095 + $0x48] sm:$0xff]
  %v1106 = vld [vmem:[%s1095 + $0x50] sm:$0xff]
  %v1107 = vld [vmem:[%s1095 + $0x58] sm:$0xff]
  %v1108 = vld [vmem:[%s1095 + $0x60] sm:$0xff]
  %v1109 = vld [vmem:[%s1095 + $0x68] sm:$0xff]
  %v1110 = vld [vmem:[%s1095 + $0x70] sm:$0xff]
  %v1111 = vld [vmem:[%s1095 + $0x78] sm:$0xff]
  %1112 = vst [vmem:[#allocation4] sm:$0x3] 0.0
  %1113 = vst [vmem:[#allocation5] sm:$0x3] 0.0
  %v1114 = vld [vmem:[#allocation2] sm:$0x3]
  %v1115 = vld [vmem:[#allocation4] sm:$0x3]
  %1116 = vmatprep.subr.mxu0 0.0
  %1117 = vmatpush1.msra.mxu0 %v1111
  %1118 = vmatprep.subr.mxu0 0.0
  %1119 = vmatpush1.msra.mxu0 %v1110
  %1120 = vmatprep.subr.mxu0 0.0
  %1121 = vmatpush1.msra.mxu0 %v1109
  %1122 = vmatprep.subr.mxu0 0.0
  %1123 = vmatpush1.msra.mxu0 %v1108
  %1124 = vmatprep.subr.mxu0 0.0
  %1125 = vmatpush1.msra.mxu0 %v1107
  %1126 = vmatprep.subr.mxu0 0.0
  %1127 = vmatpush1.msra.mxu0 %v1106
  %1128 = vmatprep.subr.mxu0 0.0
  %1129 = vmatpush1.msra.mxu0 %v1105
  %1130 = vmatprep.subr.mxu0 0.0
  %1131 = vmatpush1.msra.mxu0 %v1104
  %1132 = vmatprep.subr.mxu0 0.0
  %1133 = vmatpush1.msra.mxu0 %v1103
  %1134 = vmatprep.subr.mxu0 0.0
  %1135 = vmatpush1.msra.mxu0 %v1102
  %1136 = vmatprep.subr.mxu0 0.0
  %1137 = vmatpush1.msra.mxu0 %v1101
  %1138 = vmatprep.subr.mxu0 0.0
  %1139 = vmatpush1.msra.mxu0 %v1100
  %1140 = vmatprep.subr.mxu0 0.0
  %1141 = vmatpush1.msra.mxu0 %v1099
  %1142 = vmatprep.subr.mxu0 0.0
  %1143 = vmatpush1.msra.mxu0 %v1098
  %1144 = vmatprep.subr.mxu0 0.0
  %1145 = vmatpush1.msra.mxu0 %v1097
  %1146 = vmatprep.subr.mxu0 0.0
  %1147 = vmatpush1.msra.mxu0 %v1096
  %1148 = vmatprep.subr.mxu0 0.0
  %1149 = vmatpush2.msra.mxu0 0.0
  %1150 = vmatprep.subr.mxu0 0.0
  %1151 = vmatpush2.msra.mxu0 0.0
  %1152 = vmatprep.subr.mxu0 0.0
  %1153 = vmatpush2.msra.mxu0 0.0
  %1154 = vmatprep.subr.mxu0 0.0
  %1155 = vmatpush2.msra.mxu0 0.0
  %1156 = vmatprep.subr.mxu0 0.0
  %1157 = vmatpush2.msra.mxu0 0.0
  %1158 = vmatprep.subr.mxu0 0.0
  %1159 = vmatpush2.msra.mxu0 0.0
  %1160 = vmatprep.subr.mxu0 0.0
  %1161 = vmatpush2.msra.mxu0 0.0
  %1162 = vmatprep.subr.mxu0 0.0
  %1163 = vmatpush2.msra.mxu0 0.0
  %1164 = vmatprep.subr.mxu0 0.0
  %1165 = vmatpush2.msra.mxu0 0.0
  %1166 = vmatprep.subr.mxu0 0.0
  %1167 = vmatpush2.msra.mxu0 0.0
  %1168 = vmatprep.subr.mxu0 0.0
  %1169 = vmatpush2.msra.mxu0 0.0
  %1170 = vmatprep.subr.mxu0 0.0
  %1171 = vmatpush2.msra.mxu0 0.0
  %1172 = vmatprep.subr.mxu0 0.0
  %1173 = vmatpush2.msra.mxu0 0.0
  %1174 = vmatprep.subr.mxu0 0.0
  %1175 = vmatpush2.msra.mxu0 0.0
  %1176 = vmatprep.subr.mxu0 0.0
  %1177 = vmatpush2.msra.mxu0 0.0
  %1178 = vmatprep.subr.mxu0 0.0
  %1179 = vmatpush2.msra.mxu0 0.0
  %1180 = vmatprep.mubr.f32.mxu0 0.0
  %1181 = vmatmul.mubr.f32.gmra.mxu0 %v1115
  %v1182 = vpop.f32.mrf.mxu0
  %v1183 = vadd.f32 0.0, %v1182
  %v1184 = vpop.f32.mrf.mxu0
  %1185 = vdwg.mxu0
  %v1186 = vadd.f32 %v1114, %v1183
  %v1187 = vmul.f32 %v1186, 0.5
  %v1188 = vsel %vm223, %v1186, %v1187
  %v1189 = vtanh.pop %v1188
  %v1190 = vmul.f32 %v1189, 0.5
  %v1191 = vadd.f32 %v1190, 0.5
  %v1192 = vsel %vm223, %v1189, %v1191
  %1193 = vrot.lane.b32.xlu0 %v1192, 64
  %v1194 = vpop.permute.xlu0 %1193
  %1195 = vrot.lane.b32.xlu0 %v1192, 96
  %v1196 = vpop.permute.xlu0 %1195
  %1197 = vrot.lane.b32.xlu0 %v1192, 32
  %v1198 = vpop.permute.xlu0 %1197
  %v1199 = vld [vmem:[#allocation5] sm:$0x3]
  %v1200 = vmul.f32 %v1192, %v1199
  %v1201 = vmul.f32 %v1196, %v1198
  %v1202 = vadd.f32 %v1200, %v1201
  %v1203 = vtanh.pop %v1202
  %v1204 = vmul.f32 %v1194, %v1203
  %1205 = vst [vmem:[#allocation5] sm:$0x3] %v1202
  %1206 = vst [vmem:[#allocation4] sm:$0x3] %v1204
  %1207 = vst [vmem:[#allocation3] sm:$0x3] %v1204
  %v1208 = vld [vmem:[#allocation2 + $0x2] sm:$0x3]
  %v1209 = vld [vmem:[#allocation4] sm:$0x3]
  %1210 = vmatprep.subr.mxu0 0.0
  %1211 = vmatpush1.msra.mxu0 %v1111
  %1212 = vmatprep.subr.mxu0 0.0
  %1213 = vmatpush1.msra.mxu0 %v1110
  %1214 = vmatprep.subr.mxu0 0.0
  %1215 = vmatpush1.msra.mxu0 %v1109
  %1216 = vmatprep.subr.mxu0 0.0
  %1217 = vmatpush1.msra.mxu0 %v1108
  %1218 = vmatprep.subr.mxu0 0.0
  %1219 = vmatpush1.msra.mxu0 %v1107
  %1220 = vmatprep.subr.mxu0 0.0
  %1221 = vmatpush1.msra.mxu0 %v1106
  %1222 = vmatprep.subr.mxu0 0.0
  %1223 = vmatpush1.msra.mxu0 %v1105
  %1224 = vmatprep.subr.mxu0 0.0
  %1225 = vmatpush1.msra.mxu0 %v1104
  %1226 = vmatprep.subr.mxu0 0.0
  %1227 = vmatpush1.msra.mxu0 %v1103
  %1228 = vmatprep.subr.mxu0 0.0
  %1229 = vmatpush1.msra.mxu0 %v1102
  %1230 = vmatprep.subr.mxu0 0.0
  %1231 = vmatpush1.msra.mxu0 %v1101
  %1232 = vmatprep.subr.mxu0 0.0
  %1233 = vmatpush1.msra.mxu0 %v1100
  %1234 = vmatprep.subr.mxu0 0.0
  %1235 = vmatpush1.msra.mxu0 %v1099
  %1236 = vmatprep.subr.mxu0 0.0
  %1237 = vmatpush1.msra.mxu0 %v1098
  %1238 = vmatprep.subr.mxu0 0.0
  %1239 = vmatpush1.msra.mxu0 %v1097
  %1240 = vmatprep.subr.mxu0 0.0
  %1241 = vmatpush1.msra.mxu0 %v1096
  %1242 = vmatprep.subr.mxu0 0.0
  %1243 = vmatpush2.msra.mxu0 0.0
  %1244 = vmatprep.subr.mxu0 0.0
  %1245 = vmatpush2.msra.mxu0 0.0
  %1246 = vmatprep.subr.mxu0 0.0
  %1247 = vmatpush2.msra.mxu0 0.0
  %1248 = vmatprep.subr.mxu0 0.0
  %1249 = vmatpush2.msra.mxu0 0.0
  %1250 = vmatprep.subr.mxu0 0.0
  %1251 = vmatpush2.msra.mxu0 0.0
  %1252 = vmatprep.subr.mxu0 0.0
  %1253 = vmatpush2.msra.mxu0 0.0
  %1254 = vmatprep.subr.mxu0 0.0
  %1255 = vmatpush2.msra.mxu0 0.0
  %1256 = vmatprep.subr.mxu0 0.0
  %1257 = vmatpush2.msra.mxu0 0.0
  %1258 = vmatprep.subr.mxu0 0.0
  %1259 = vmatpush2.msra.mxu0 0.0
  %1260 = vmatprep.subr.mxu0 0.0
  %1261 = vmatpush2.msra.mxu0 0.0
  %1262 = vmatprep.subr.mxu0 0.0
  %1263 = vmatpush2.msra.mxu0 0.0
  %1264 = vmatprep.subr.mxu0 0.0
  %1265 = vmatpush2.msra.mxu0 0.0
  %1266 = vmatprep.subr.mxu0 0.0
  %1267 = vmatpush2.msra.mxu0 0.0
  %1268 = vmatprep.subr.mxu0 0.0
  %1269 = vmatpush2.msra.mxu0 0.0
  %1270 = vmatprep.subr.mxu0 0.0
  %1271 = vmatpush2.msra.mxu0 0.0
  %1272 = vmatprep.subr.mxu0 0.0
  %1273 = vmatpush2.msra.mxu0 0.0
  %1274 = vmatprep.mubr.f32.mxu0 0.0
  %1275 = vmatmul.mubr.f32.gmra.mxu0 %v1209
  %v1276 = vpop.f32.mrf.mxu0
  %v1277 = vadd.f32 0.0, %v1276
  %v1278 = vpop.f32.mrf.mxu0
  %1279 = vdwg.mxu0
  %v1280 = vadd.f32 %v1208, %v1277
  %v1281 = vmul.f32 %v1280, 0.5
  %v1282 = vsel %vm223, %v1280, %v1281
  %v1283 = vtanh.pop %v1282
  %v1284 = vmul.f32 %v1283, 0.5
  %v1285 = vadd.f32 %v1284, 0.5
  %v1286 = vsel %vm223, %v1283, %v1285
  %1287 = vrot.lane.b32.xlu0 %v1286, 64
  %v1288 = vpop.permute.xlu0 %1287
  %1289 = vrot.lane.b32.xlu0 %v1286, 96
  %v1290 = vpop.permute.xlu0 %1289
  %1291 = vrot.lane.b32.xlu0 %v1286, 32
  %v1292 = vpop.permute.xlu0 %1291
  %v1293 = vld [vmem:[#allocation5] sm:$0x3]
  %v1294 = vmul.f32 %v1286, %v1293
  %v1295 = vmul.f32 %v1290, %v1292
  %v1296 = vadd.f32 %v1294, %v1295
  %v1297 = vtanh.pop %v1296
  %v1298 = vmul.f32 %v1288, %v1297
  %1299 = vst [vmem:[#allocation5] sm:$0x3] %v1296
  %1300 = vst [vmem:[#allocation4] sm:$0x3] %v1298
  %1301 = vst [vmem:[#allocation3 + $0x2] sm:$0x3] %v1298
  %v1302 = vld [vmem:[#allocation2 + $0x4] sm:$0x3]
  %v1303 = vld [vmem:[#allocation4] sm:$0x3]
  %1304 = vmatprep.subr.mxu0 0.0
  %1305 = vmatpush1.msra.mxu0 %v1111
  %1306 = vmatprep.subr.mxu0 0.0
  %1307 = vmatpush1.msra.mxu0 %v1110
  %1308 = vmatprep.subr.mxu0 0.0
  %1309 = vmatpush1.msra.mxu0 %v1109
  %1310 = vmatprep.subr.mxu0 0.0
  %1311 = vmatpush1.msra.mxu0 %v1108
  %1312 = vmatprep.subr.mxu0 0.0
  %1313 = vmatpush1.msra.mxu0 %v1107
  %1314 = vmatprep.subr.mxu0 0.0
  %1315 = vmatpush1.msra.mxu0 %v1106
  %1316 = vmatprep.subr.mxu0 0.0
  %1317 = vmatpush1.msra.mxu0 %v1105
  %1318 = vmatprep.subr.mxu0 0.0
  %1319 = vmatpush1.msra.mxu0 %v1104
  %1320 = vmatprep.subr.mxu0 0.0
  %1321 = vmatpush1.msra.mxu0 %v1103
  %1322 = vmatprep.subr.mxu0 0.0
  %1323 = vmatpush1.msra.mxu0 %v1102
  %1324 = vmatprep.subr.mxu0 0.0
  %1325 = vmatpush1.msra.mxu0 %v1101
  %1326 = vmatprep.subr.mxu0 0.0
  %1327 = vmatpush1.msra.mxu0 %v1100
  %1328 = vmatprep.subr.mxu0 0.0
  %1329 = vmatpush1.msra.mxu0 %v1099
  %1330 = vmatprep.subr.mxu0 0.0
  %1331 = vmatpush1.msra.mxu0 %v1098
  %1332 = vmatprep.subr.mxu0 0.0
  %1333 = vmatpush1.msra.mxu0 %v1097
  %1334 = vmatprep.subr.mxu0 0.0
  %1335 = vmatpush1.msra.mxu0 %v1096
  %1336 = vmatprep.subr.mxu0 0.0
  %1337 = vmatpush2.msra.mxu0 0.0
  %1338 = vmatprep.subr.mxu0 0.0
  %1339 = vmatpush2.msra.mxu0 0.0
  %1340 = vmatprep.subr.mxu0 0.0
  %1341 = vmatpush2.msra.mxu0 0.0
  %1342 = vmatprep.subr.mxu0 0.0
  %1343 = vmatpush2.msra.mxu0 0.0
  %1344 = vmatprep.subr.mxu0 0.0
  %1345 = vmatpush2.msra.mxu0 0.0
  %1346 = vmatprep.subr.mxu0 0.0
  %1347 = vmatpush2.msra.mxu0 0.0
  %1348 = vmatprep.subr.mxu0 0.0
  %1349 = vmatpush2.msra.mxu0 0.0
  %1350 = vmatprep.subr.mxu0 0.0
  %1351 = vmatpush2.msra.mxu0 0.0
  %1352 = vmatprep.subr.mxu0 0.0
  %1353 = vmatpush2.msra.mxu0 0.0
  %1354 = vmatprep.subr.mxu0 0.0
  %1355 = vmatpush2.msra.mxu0 0.0
  %1356 = vmatprep.subr.mxu0 0.0
  %1357 = vmatpush2.msra.mxu0 0.0
  %1358 = vmatprep.subr.mxu0 0.0
  %1359 = vmatpush2.msra.mxu0 0.0
  %1360 = vmatprep.subr.mxu0 0.0
  %1361 = vmatpush2.msra.mxu0 0.0
  %1362 = vmatprep.subr.mxu0 0.0
  %1363 = vmatpush2.msra.mxu0 0.0
  %1364 = vmatprep.subr.mxu0 0.0
  %1365 = vmatpush2.msra.mxu0 0.0
  %1366 = vmatprep.subr.mxu0 0.0
  %1367 = vmatpush2.msra.mxu0 0.0
  %1368 = vmatprep.mubr.f32.mxu0 0.0
  %1369 = vmatmul.mubr.f32.gmra.mxu0 %v1303
  %v1370 = vpop.f32.mrf.mxu0
  %v1371 = vadd.f32 0.0, %v1370
  %v1372 = vpop.f32.mrf.mxu0
  %1373 = vdwg.mxu0
  %v1374 = vadd.f32 %v1302, %v1371
  %v1375 = vmul.f32 %v1374, 0.5
  %v1376 = vsel %vm223, %v1374, %v1375
  %v1377 = vtanh.pop %v1376
  %v1378 = vmul.f32 %v1377, 0.5
  %v1379 = vadd.f32 %v1378, 0.5
  %v1380 = vsel %vm223, %v1377, %v1379
  %1381 = vrot.lane.b32.xlu0 %v1380, 64
  %v1382 = vpop.permute.xlu0 %1381
  %1383 = vrot.lane.b32.xlu0 %v1380, 96
  %v1384 = vpop.permute.xlu0 %1383
  %1385 = vrot.lane.b32.xlu0 %v1380, 32
  %v1386 = vpop.permute.xlu0 %1385
  %v1387 = vld [vmem:[#allocation5] sm:$0x3]
  %v1388 = vmul.f32 %v1380, %v1387
  %v1389 = vmul.f32 %v1384, %v1386
  %v1390 = vadd.f32 %v1388, %v1389
  %v1391 = vtanh.pop %v1390
  %v1392 = vmul.f32 %v1382, %v1391
  %1393 = vst [vmem:[#allocation5] sm:$0x3] %v1390
  %1394 = vst [vmem:[#allocation4] sm:$0x3] %v1392
  %1395 = vst [vmem:[#allocation3 + $0x4] sm:$0x3] %v1392
  %v1396 = vld [vmem:[#allocation2 + $0x6] sm:$0x3]
  %v1397 = vld [vmem:[#allocation4] sm:$0x3]
  %1398 = vmatprep.subr.mxu0 0.0
  %1399 = vmatpush1.msra.mxu0 %v1111
  %1400 = vmatprep.subr.mxu0 0.0
  %1401 = vmatpush1.msra.mxu0 %v1110
  %1402 = vmatprep.subr.mxu0 0.0
  %1403 = vmatpush1.msra.mxu0 %v1109
  %1404 = vmatprep.subr.mxu0 0.0
  %1405 = vmatpush1.msra.mxu0 %v1108
  %1406 = vmatprep.subr.mxu0 0.0
  %1407 = vmatpush1.msra.mxu0 %v1107
  %1408 = vmatprep.subr.mxu0 0.0
  %1409 = vmatpush1.msra.mxu0 %v1106
  %1410 = vmatprep.subr.mxu0 0.0
  %1411 = vmatpush1.msra.mxu0 %v1105
  %1412 = vmatprep.subr.mxu0 0.0
  %1413 = vmatpush1.msra.mxu0 %v1104
  %1414 = vmatprep.subr.mxu0 0.0
  %1415 = vmatpush1.msra.mxu0 %v1103
  %1416 = vmatprep.subr.mxu0 0.0
  %1417 = vmatpush1.msra.mxu0 %v1102
  %1418 = vmatprep.subr.mxu0 0.0
  %1419 = vmatpush1.msra.mxu0 %v1101
  %1420 = vmatprep.subr.mxu0 0.0
  %1421 = vmatpush1.msra.mxu0 %v1100
  %1422 = vmatprep.subr.mxu0 0.0
  %1423 = vmatpush1.msra.mxu0 %v1099
  %1424 = vmatprep.subr.mxu0 0.0
  %1425 = vmatpush1.msra.mxu0 %v1098
  %1426 = vmatprep.subr.mxu0 0.0
  %1427 = vmatpush1.msra.mxu0 %v1097
  %1428 = vmatprep.subr.mxu0 0.0
  %1429 = vmatpush1.msra.mxu0 %v1096
  %1430 = vmatprep.subr.mxu0 0.0
  %1431 = vmatpush2.msra.mxu0 0.0
  %1432 = vmatprep.subr.mxu0 0.0
  %1433 = vmatpush2.msra.mxu0 0.0
  %1434 = vmatprep.subr.mxu0 0.0
  %1435 = vmatpush2.msra.mxu0 0.0
  %1436 = vmatprep.subr.mxu0 0.0
  %1437 = vmatpush2.msra.mxu0 0.0
  %1438 = vmatprep.subr.mxu0 0.0
  %1439 = vmatpush2.msra.mxu0 0.0
  %1440 = vmatprep.subr.mxu0 0.0
  %1441 = vmatpush2.msra.mxu0 0.0
  %1442 = vmatprep.subr.mxu0 0.0
  %1443 = vmatpush2.msra.mxu0 0.0
  %1444 = vmatprep.subr.mxu0 0.0
  %1445 = vmatpush2.msra.mxu0 0.0
  %1446 = vmatprep.subr.mxu0 0.0
  %1447 = vmatpush2.msra.mxu0 0.0
  %1448 = vmatprep.subr.mxu0 0.0
  %1449 = vmatpush2.msra.mxu0 0.0
  %1450 = vmatprep.subr.mxu0 0.0
  %1451 = vmatpush2.msra.mxu0 0.0
  %1452 = vmatprep.subr.mxu0 0.0
  %1453 = vmatpush2.msra.mxu0 0.0
  %1454 = vmatprep.subr.mxu0 0.0
  %1455 = vmatpush2.msra.mxu0 0.0
  %1456 = vmatprep.subr.mxu0 0.0
  %1457 = vmatpush2.msra.mxu0 0.0
  %1458 = vmatprep.subr.mxu0 0.0
  %1459 = vmatpush2.msra.mxu0 0.0
  %1460 = vmatprep.subr.mxu0 0.0
  %1461 = vmatpush2.msra.mxu0 0.0
  %1462 = vmatprep.mubr.f32.mxu0 0.0
  %1463 = vmatmul.mubr.f32.gmra.mxu0 %v1397
  %v1464 = vpop.f32.mrf.mxu0
  %v1465 = vadd.f32 0.0, %v1464
  %v1466 = vpop.f32.mrf.mxu0
  %1467 = vdwg.mxu0
  %v1468 = vadd.f32 %v1396, %v1465
  %v1469 = vmul.f32 %v1468, 0.5
  %v1470 = vsel %vm223, %v1468, %v1469
  %v1471 = vtanh.pop %v1470
  %v1472 = vmul.f32 %v1471, 0.5
  %v1473 = vadd.f32 %v1472, 0.5
  %v1474 = vsel %vm223, %v1471, %v1473
  %1475 = vrot.lane.b32.xlu0 %v1474, 64
  %v1476 = vpop.permute.xlu0 %1475
  %1477 = vrot.lane.b32.xlu0 %v1474, 96
  %v1478 = vpop.permute.xlu0 %1477
  %1479 = vrot.lane.b32.xlu0 %v1474, 32
  %v1480 = vpop.permute.xlu0 %1479
  %v1481 = vld [vmem:[#allocation5] sm:$0x3]
  %v1482 = vmul.f32 %v1474, %v1481
  %v1483 = vmul.f32 %v1478, %v1480
  %v1484 = vadd.f32 %v1482, %v1483
  %v1485 = vtanh.pop %v1484
  %v1486 = vmul.f32 %v1476, %v1485
  %1487 = vst [vmem:[#allocation5] sm:$0x3] %v1484
  %1488 = vst [vmem:[#allocation4] sm:$0x3] %v1486
  %1489 = vst [vmem:[#allocation3 + $0x6] sm:$0x3] %v1486
  %v1490 = vld [vmem:[#allocation2 + $0x8] sm:$0x3]
  %v1491 = vld [vmem:[#allocation4] sm:$0x3]
  %1492 = vmatprep.subr.mxu0 0.0
  %1493 = vmatpush1.msra.mxu0 %v1111
  %1494 = vmatprep.subr.mxu0 0.0
  %1495 = vmatpush1.msra.mxu0 %v1110
  %1496 = vmatprep.subr.mxu0 0.0
  %1497 = vmatpush1.msra.mxu0 %v1109
  %1498 = vmatprep.subr.mxu0 0.0
  %1499 = vmatpush1.msra.mxu0 %v1108
  %1500 = vmatprep.subr.mxu0 0.0
  %1501 = vmatpush1.msra.mxu0 %v1107
  %1502 = vmatprep.subr.mxu0 0.0
  %1503 = vmatpush1.msra.mxu0 %v1106
  %1504 = vmatprep.subr.mxu0 0.0
  %1505 = vmatpush1.msra.mxu0 %v1105
  %1506 = vmatprep.subr.mxu0 0.0
  %1507 = vmatpush1.msra.mxu0 %v1104
  %1508 = vmatprep.subr.mxu0 0.0
  %1509 = vmatpush1.msra.mxu0 %v1103
  %1510 = vmatprep.subr.mxu0 0.0
  %1511 = vmatpush1.msra.mxu0 %v1102
  %1512 = vmatprep.subr.mxu0 0.0
  %1513 = vmatpush1.msra.mxu0 %v1101
  %1514 = vmatprep.subr.mxu0 0.0
  %1515 = vmatpush1.msra.mxu0 %v1100
  %1516 = vmatprep.subr.mxu0 0.0
  %1517 = vmatpush1.msra.mxu0 %v1099
  %1518 = vmatprep.subr.mxu0 0.0
  %1519 = vmatpush1.msra.mxu0 %v1098
  %1520 = vmatprep.subr.mxu0 0.0
  %1521 = vmatpush1.msra.mxu0 %v1097
  %1522 = vmatprep.subr.mxu0 0.0
  %1523 = vmatpush1.msra.mxu0 %v1096
  %1524 = vmatprep.subr.mxu0 0.0
  %1525 = vmatpush2.msra.mxu0 0.0
  %1526 = vmatprep.subr.mxu0 0.0
  %1527 = vmatpush2.msra.mxu0 0.0
  %1528 = vmatprep.subr.mxu0 0.0
  %1529 = vmatpush2.msra.mxu0 0.0
  %1530 = vmatprep.subr.mxu0 0.0
  %1531 = vmatpush2.msra.mxu0 0.0
  %1532 = vmatprep.subr.mxu0 0.0
  %1533 = vmatpush2.msra.mxu0 0.0
  %1534 = vmatprep.subr.mxu0 0.0
  %1535 = vmatpush2.msra.mxu0 0.0
  %1536 = vmatprep.subr.mxu0 0.0
  %1537 = vmatpush2.msra.mxu0 0.0
  %1538 = vmatprep.subr.mxu0 0.0
  %1539 = vmatpush2.msra.mxu0 0.0
  %1540 = vmatprep.subr.mxu0 0.0
  %1541 = vmatpush2.msra.mxu0 0.0
  %1542 = vmatprep.subr.mxu0 0.0
  %1543 = vmatpush2.msra.mxu0 0.0
  %1544 = vmatprep.subr.mxu0 0.0
  %1545 = vmatpush2.msra.mxu0 0.0
  %1546 = vmatprep.subr.mxu0 0.0
  %1547 = vmatpush2.msra.mxu0 0.0
  %1548 = vmatprep.subr.mxu0 0.0
  %1549 = vmatpush2.msra.mxu0 0.0
  %1550 = vmatprep.subr.mxu0 0.0
  %1551 = vmatpush2.msra.mxu0 0.0
  %1552 = vmatprep.subr.mxu0 0.0
  %1553 = vmatpush2.msra.mxu0 0.0
  %1554 = vmatprep.subr.mxu0 0.0
  %1555 = vmatpush2.msra.mxu0 0.0
  %1556 = vmatprep.mubr.f32.mxu0 0.0
  %1557 = vmatmul.mubr.f32.gmra.mxu0 %v1491
  %v1558 = vpop.f32.mrf.mxu0
  %v1559 = vadd.f32 0.0, %v1558
  %v1560 = vpop.f32.mrf.mxu0
  %1561 = vdwg.mxu0
  %v1562 = vadd.f32 %v1490, %v1559
  %v1563 = vmul.f32 %v1562, 0.5
  %v1564 = vsel %vm223, %v1562, %v1563
  %v1565 = vtanh.pop %v1564
  %v1566 = vmul.f32 %v1565, 0.5
  %v1567 = vadd.f32 %v1566, 0.5
  %v1568 = vsel %vm223, %v1565, %v1567
  %1569 = vrot.lane.b32.xlu0 %v1568, 64
  %v1570 = vpop.permute.xlu0 %1569
  %1571 = vrot.lane.b32.xlu0 %v1568, 96
  %v1572 = vpop.permute.xlu0 %1571
  %1573 = vrot.lane.b32.xlu0 %v1568, 32
  %v1574 = vpop.permute.xlu0 %1573
  %v1575 = vld [vmem:[#allocation5] sm:$0x3]
  %v1576 = vmul.f32 %v1568, %v1575
  %v1577 = vmul.f32 %v1572, %v1574
  %v1578 = vadd.f32 %v1576, %v1577
  %v1579 = vtanh.pop %v1578
  %v1580 = vmul.f32 %v1570, %v1579
  %1581 = vst [vmem:[#allocation5] sm:$0x3] %v1578
  %1582 = vst [vmem:[#allocation4] sm:$0x3] %v1580
  %1583 = vst [vmem:[#allocation3 + $0x8] sm:$0x3] %v1580
  %v1584 = vld [vmem:[#allocation2 + $0xa] sm:$0x3]
  %v1585 = vld [vmem:[#allocation4] sm:$0x3]
  %1586 = vmatprep.subr.mxu0 0.0
  %1587 = vmatpush1.msra.mxu0 %v1111
  %1588 = vmatprep.subr.mxu0 0.0
  %1589 = vmatpush1.msra.mxu0 %v1110
  %1590 = vmatprep.subr.mxu0 0.0
  %1591 = vmatpush1.msra.mxu0 %v1109
  %1592 = vmatprep.subr.mxu0 0.0
  %1593 = vmatpush1.msra.mxu0 %v1108
  %1594 = vmatprep.subr.mxu0 0.0
  %1595 = vmatpush1.msra.mxu0 %v1107
  %1596 = vmatprep.subr.mxu0 0.0
  %1597 = vmatpush1.msra.mxu0 %v1106
  %1598 = vmatprep.subr.mxu0 0.0
  %1599 = vmatpush1.msra.mxu0 %v1105
  %1600 = vmatprep.subr.mxu0 0.0
  %1601 = vmatpush1.msra.mxu0 %v1104
  %1602 = vmatprep.subr.mxu0 0.0
  %1603 = vmatpush1.msra.mxu0 %v1103
  %1604 = vmatprep.subr.mxu0 0.0
  %1605 = vmatpush1.msra.mxu0 %v1102
  %1606 = vmatprep.subr.mxu0 0.0
  %1607 = vmatpush1.msra.mxu0 %v1101
  %1608 = vmatprep.subr.mxu0 0.0
  %1609 = vmatpush1.msra.mxu0 %v1100
  %1610 = vmatprep.subr.mxu0 0.0
  %1611 = vmatpush1.msra.mxu0 %v1099
  %1612 = vmatprep.subr.mxu0 0.0
  %1613 = vmatpush1.msra.mxu0 %v1098
  %1614 = vmatprep.subr.mxu0 0.0
  %1615 = vmatpush1.msra.mxu0 %v1097
  %1616 = vmatprep.subr.mxu0 0.0
  %1617 = vmatpush1.msra.mxu0 %v1096
  %1618 = vmatprep.subr.mxu0 0.0
  %1619 = vmatpush2.msra.mxu0 0.0
  %1620 = vmatprep.subr.mxu0 0.0
  %1621 = vmatpush2.msra.mxu0 0.0
  %1622 = vmatprep.subr.mxu0 0.0
  %1623 = vmatpush2.msra.mxu0 0.0
  %1624 = vmatprep.subr.mxu0 0.0
  %1625 = vmatpush2.msra.mxu0 0.0
  %1626 = vmatprep.subr.mxu0 0.0
  %1627 = vmatpush2.msra.mxu0 0.0
  %1628 = vmatprep.subr.mxu0 0.0
  %1629 = vmatpush2.msra.mxu0 0.0
  %1630 = vmatprep.subr.mxu0 0.0
  %1631 = vmatpush2.msra.mxu0 0.0
  %1632 = vmatprep.subr.mxu0 0.0
  %1633 = vmatpush2.msra.mxu0 0.0
  %1634 = vmatprep.subr.mxu0 0.0
  %1635 = vmatpush2.msra.mxu0 0.0
  %1636 = vmatprep.subr.mxu0 0.0
  %1637 = vmatpush2.msra.mxu0 0.0
  %1638 = vmatprep.subr.mxu0 0.0
  %1639 = vmatpush2.msra.mxu0 0.0
  %1640 = vmatprep.subr.mxu0 0.0
  %1641 = vmatpush2.msra.mxu0 0.0
  %1642 = vmatprep.subr.mxu0 0.0
  %1643 = vmatpush2.msra.mxu0 0.0
  %1644 = vmatprep.subr.mxu0 0.0
  %1645 = vmatpush2.msra.mxu0 0.0
  %1646 = vmatprep.subr.mxu0 0.0
  %1647 = vmatpush2.msra.mxu0 0.0
  %1648 = vmatprep.subr.mxu0 0.0
  %1649 = vmatpush2.msra.mxu0 0.0
  %1650 = vmatprep.mubr.f32.mxu0 0.0
  %1651 = vmatmul.mubr.f32.gmra.mxu0 %v1585
  %v1652 = vpop.f32.mrf.mxu0
  %v1653 = vadd.f32 0.0, %v1652
  %v1654 = vpop.f32.mrf.mxu0
  %1655 = vdwg.mxu0
  %v1656 = vadd.f32 %v1584, %v1653
  %v1657 = vmul.f32 %v1656, 0.5
  %v1658 = vsel %vm223, %v1656, %v1657
  %v1659 = vtanh.pop %v1658
  %v1660 = vmul.f32 %v1659, 0.5
  %v1661 = vadd.f32 %v1660, 0.5
  %v1662 = vsel %vm223, %v1659, %v1661
  %1663 = vrot.lane.b32.xlu0 %v1662, 64
  %v1664 = vpop.permute.xlu0 %1663
  %1665 = vrot.lane.b32.xlu0 %v1662, 96
  %v1666 = vpop.permute.xlu0 %1665
  %1667 = vrot.lane.b32.xlu0 %v1662, 32
  %v1668 = vpop.permute.xlu0 %1667
  %v1669 = vld [vmem:[#allocation5] sm:$0x3]
  %v1670 = vmul.f32 %v1662, %v1669
  %v1671 = vmul.f32 %v1666, %v1668
  %v1672 = vadd.f32 %v1670, %v1671
  %v1673 = vtanh.pop %v1672
  %v1674 = vmul.f32 %v1664, %v1673
  %1675 = vst [vmem:[#allocation5] sm:$0x3] %v1672
  %1676 = vst [vmem:[#allocation4] sm:$0x3] %v1674
  %1677 = vst [vmem:[#allocation3 + $0xa] sm:$0x3] %v1674
  %v1678 = vld [vmem:[#allocation2 + $0xc] sm:$0x3]
  %v1679 = vld [vmem:[#allocation4] sm:$0x3]
  %1680 = vmatprep.subr.mxu0 0.0
  %1681 = vmatpush1.msra.mxu0 %v1111
  %1682 = vmatprep.subr.mxu0 0.0
  %1683 = vmatpush1.msra.mxu0 %v1110
  %1684 = vmatprep.subr.mxu0 0.0
  %1685 = vmatpush1.msra.mxu0 %v1109
  %1686 = vmatprep.subr.mxu0 0.0
  %1687 = vmatpush1.msra.mxu0 %v1108
  %1688 = vmatprep.subr.mxu0 0.0
  %1689 = vmatpush1.msra.mxu0 %v1107
  %1690 = vmatprep.subr.mxu0 0.0
  %1691 = vmatpush1.msra.mxu0 %v1106
  %1692 = vmatprep.subr.mxu0 0.0
  %1693 = vmatpush1.msra.mxu0 %v1105
  %1694 = vmatprep.subr.mxu0 0.0
  %1695 = vmatpush1.msra.mxu0 %v1104
  %1696 = vmatprep.subr.mxu0 0.0
  %1697 = vmatpush1.msra.mxu0 %v1103
  %1698 = vmatprep.subr.mxu0 0.0
  %1699 = vmatpush1.msra.mxu0 %v1102
  %1700 = vmatprep.subr.mxu0 0.0
  %1701 = vmatpush1.msra.mxu0 %v1101
  %1702 = vmatprep.subr.mxu0 0.0
  %1703 = vmatpush1.msra.mxu0 %v1100
  %1704 = vmatprep.subr.mxu0 0.0
  %1705 = vmatpush1.msra.mxu0 %v1099
  %1706 = vmatprep.subr.mxu0 0.0
  %1707 = vmatpush1.msra.mxu0 %v1098
  %1708 = vmatprep.subr.mxu0 0.0
  %1709 = vmatpush1.msra.mxu0 %v1097
  %1710 = vmatprep.subr.mxu0 0.0
  %1711 = vmatpush1.msra.mxu0 %v1096
  %1712 = vmatprep.subr.mxu0 0.0
  %1713 = vmatpush2.msra.mxu0 0.0
  %1714 = vmatprep.subr.mxu0 0.0
  %1715 = vmatpush2.msra.mxu0 0.0
  %1716 = vmatprep.subr.mxu0 0.0
  %1717 = vmatpush2.msra.mxu0 0.0
  %1718 = vmatprep.subr.mxu0 0.0
  %1719 = vmatpush2.msra.mxu0 0.0
  %1720 = vmatprep.subr.mxu0 0.0
  %1721 = vmatpush2.msra.mxu0 0.0
  %1722 = vmatprep.subr.mxu0 0.0
  %1723 = vmatpush2.msra.mxu0 0.0
  %1724 = vmatprep.subr.mxu0 0.0
  %1725 = vmatpush2.msra.mxu0 0.0
  %1726 = vmatprep.subr.mxu0 0.0
  %1727 = vmatpush2.msra.mxu0 0.0
  %1728 = vmatprep.subr.mxu0 0.0
  %1729 = vmatpush2.msra.mxu0 0.0
  %1730 = vmatprep.subr.mxu0 0.0
  %1731 = vmatpush2.msra.mxu0 0.0
  %1732 = vmatprep.subr.mxu0 0.0
  %1733 = vmatpush2.msra.mxu0 0.0
  %1734 = vmatprep.subr.mxu0 0.0
  %1735 = vmatpush2.msra.mxu0 0.0
  %1736 = vmatprep.subr.mxu0 0.0
  %1737 = vmatpush2.msra.mxu0 0.0
  %1738 = vmatprep.subr.mxu0 0.0
  %1739 = vmatpush2.msra.mxu0 0.0
  %1740 = vmatprep.subr.mxu0 0.0
  %1741 = vmatpush2.msra.mxu0 0.0
  %1742 = vmatprep.subr.mxu0 0.0
  %1743 = vmatpush2.msra.mxu0 0.0
  %1744 = vmatprep.mubr.f32.mxu0 0.0
  %1745 = vmatmul.mubr.f32.gmra.mxu0 %v1679
  %v1746 = vpop.f32.mrf.mxu0
  %v1747 = vadd.f32 0.0, %v1746
  %v1748 = vpop.f32.mrf.mxu0
  %1749 = vdwg.mxu0
  %v1750 = vadd.f32 %v1678, %v1747
  %v1751 = vmul.f32 %v1750, 0.5
  %v1752 = vsel %vm223, %v1750, %v1751
  %v1753 = vtanh.pop %v1752
  %v1754 = vmul.f32 %v1753, 0.5
  %v1755 = vadd.f32 %v1754, 0.5
  %v1756 = vsel %vm223, %v1753, %v1755
  %1757 = vrot.lane.b32.xlu0 %v1756, 64
  %v1758 = vpop.permute.xlu0 %1757
  %1759 = vrot.lane.b32.xlu0 %v1756, 96
  %v1760 = vpop.permute.xlu0 %1759
  %1761 = vrot.lane.b32.xlu0 %v1756, 32
  %v1762 = vpop.permute.xlu0 %1761
  %v1763 = vld [vmem:[#allocation5] sm:$0x3]
  %v1764 = vmul.f32 %v1756, %v1763
  %v1765 = vmul.f32 %v1760, %v1762
  %v1766 = vadd.f32 %v1764, %v1765
  %v1767 = vtanh.pop %v1766
  %v1768 = vmul.f32 %v1758, %v1767
  %1769 = vst [vmem:[#allocation5] sm:$0x3] %v1766
  %1770 = vst [vmem:[#allocation4] sm:$0x3] %v1768
  %1771 = vst [vmem:[#allocation3 + $0xc] sm:$0x3] %v1768
  %v1772 = vld [vmem:[#allocation2 + $0xe] sm:$0x3]
  %v1773 = vld [vmem:[#allocation4] sm:$0x3]
  %1774 = vmatprep.subr.mxu0 0.0
  %1775 = vmatpush1.msra.mxu0 %v1111
  %1776 = vmatprep.subr.mxu0 0.0
  %1777 = vmatpush1.msra.mxu0 %v1110
  %1778 = vmatprep.subr.mxu0 0.0
  %1779 = vmatpush1.msra.mxu0 %v1109
  %1780 = vmatprep.subr.mxu0 0.0
  %1781 = vmatpush1.msra.mxu0 %v1108
  %1782 = vmatprep.subr.mxu0 0.0
  %1783 = vmatpush1.msra.mxu0 %v1107
  %1784 = vmatprep.subr.mxu0 0.0
  %1785 = vmatpush1.msra.mxu0 %v1106
  %1786 = vmatprep.subr.mxu0 0.0
  %1787 = vmatpush1.msra.mxu0 %v1105
  %1788 = vmatprep.subr.mxu0 0.0
  %1789 = vmatpush1.msra.mxu0 %v1104
  %1790 = vmatprep.subr.mxu0 0.0
  %1791 = vmatpush1.msra.mxu0 %v1103
  %1792 = vmatprep.subr.mxu0 0.0
  %1793 = vmatpush1.msra.mxu0 %v1102
  %1794 = vmatprep.subr.mxu0 0.0
  %1795 = vmatpush1.msra.mxu0 %v1101
  %1796 = vmatprep.subr.mxu0 0.0
  %1797 = vmatpush1.msra.mxu0 %v1100
  %1798 = vmatprep.subr.mxu0 0.0
  %1799 = vmatpush1.msra.mxu0 %v1099
  %1800 = vmatprep.subr.mxu0 0.0
  %1801 = vmatpush1.msra.mxu0 %v1098
  %1802 = vmatprep.subr.mxu0 0.0
  %1803 = vmatpush1.msra.mxu0 %v1097
  %1804 = vmatprep.subr.mxu0 0.0
  %1805 = vmatpush1.msra.mxu0 %v1096
  %1806 = vmatprep.subr.mxu0 0.0
  %1807 = vmatpush2.msra.mxu0 0.0
  %1808 = vmatprep.subr.mxu0 0.0
  %1809 = vmatpush2.msra.mxu0 0.0
  %1810 = vmatprep.subr.mxu0 0.0
  %1811 = vmatpush2.msra.mxu0 0.0
  %1812 = vmatprep.subr.mxu0 0.0
  %1813 = vmatpush2.msra.mxu0 0.0
  %1814 = vmatprep.subr.mxu0 0.0
  %1815 = vmatpush2.msra.mxu0 0.0
  %1816 = vmatprep.subr.mxu0 0.0
  %1817 = vmatpush2.msra.mxu0 0.0
  %1818 = vmatprep.subr.mxu0 0.0
  %1819 = vmatpush2.msra.mxu0 0.0
  %1820 = vmatprep.subr.mxu0 0.0
  %1821 = vmatpush2.msra.mxu0 0.0
  %1822 = vmatprep.subr.mxu0 0.0
  %1823 = vmatpush2.msra.mxu0 0.0
  %1824 = vmatprep.subr.mxu0 0.0
  %1825 = vmatpush2.msra.mxu0 0.0
  %1826 = vmatprep.subr.mxu0 0.0
  %1827 = vmatpush2.msra.mxu0 0.0
  %1828 = vmatprep.subr.mxu0 0.0
  %1829 = vmatpush2.msra.mxu0 0.0
  %1830 = vmatprep.subr.mxu0 0.0
  %1831 = vmatpush2.msra.mxu0 0.0
  %1832 = vmatprep.subr.mxu0 0.0
  %1833 = vmatpush2.msra.mxu0 0.0
  %1834 = vmatprep.subr.mxu0 0.0
  %1835 = vmatpush2.msra.mxu0 0.0
  %1836 = vmatprep.subr.mxu0 0.0
  %1837 = vmatpush2.msra.mxu0 0.0
  %1838 = vmatprep.mubr.f32.mxu0 0.0
  %1839 = vmatmul.mubr.f32.gmra.mxu0 %v1773
  %v1840 = vpop.f32.mrf.mxu0
  %v1841 = vadd.f32 0.0, %v1840
  %v1842 = vpop.f32.mrf.mxu0
  %1843 = vdwg.mxu0
  %v1844 = vadd.f32 %v1772, %v1841
  %v1845 = vmul.f32 %v1844, 0.5
  %v1846 = vsel %vm223, %v1844, %v1845
  %v1847 = vtanh.pop %v1846
  %v1848 = vmul.f32 %v1847, 0.5
  %v1849 = vadd.f32 %v1848, 0.5
  %v1850 = vsel %vm223, %v1847, %v1849
  %1851 = vrot.lane.b32.xlu0 %v1850, 64
  %v1852 = vpop.permute.xlu0 %1851
  %1853 = vrot.lane.b32.xlu0 %v1850, 96
  %v1854 = vpop.permute.xlu0 %1853
  %1855 = vrot.lane.b32.xlu0 %v1850, 32
  %v1856 = vpop.permute.xlu0 %1855
  %v1857 = vld [vmem:[#allocation5] sm:$0x3]
  %v1858 = vmul.f32 %v1850, %v1857
  %v1859 = vmul.f32 %v1854, %v1856
  %v1860 = vadd.f32 %v1858, %v1859
  %v1861 = vtanh.pop %v1860
  %v1862 = vmul.f32 %v1852, %v1861
  %1863 = vst [vmem:[#allocation5] sm:$0x3] %v1860
  %1864 = vst [vmem:[#allocation4] sm:$0x3] %v1862
  %1865 = vst [vmem:[#allocation3 + $0xe] sm:$0x3] %v1862
  %v1866 = vld [vmem:[#allocation3] sm:$0xff]
  %v1867 = vld [vmem:[#allocation3 + $0x8] sm:$0xff]
  %v1868 = vld [vmem:[%s7] sm:$0xff]
  %v1869 = vld [vmem:[%s7 + $0x8] sm:$0xff]
  %v1870 = vld [vmem:[%s7 + $0x10] sm:$0xff]
  %v1871 = vld [vmem:[%s7 + $0x18] sm:$0xff]
  %v1872 = vld [vmem:[%s8] sm:$0x1]
  %v1873 = vlaneseq
  %v1874 = vshrl.u32 %v1873, 7
  %v1875 = vsub.s32 0, %v1874
  %v1876 = vrot.slane %v1872, %v1875
  %v1878 = vsel %vm137, %v1866, 0
  %v1881 = vsel %vm137, %v1867, 0
  %1883 = vmatprep.subr.mxu0 0.0
  %1884 = vmatpush1.msra.mxu0 0.0
  %1885 = vmatprep.subr.mxu0 0.0
  %1886 = vmatpush1.msra.mxu0 0.0
  %1887 = vmatprep.subr.mxu0 0.0
  %1888 = vmatpush1.msra.mxu0 0.0
  %1889 = vmatprep.subr.mxu0 0.0
  %1890 = vmatpush1.msra.mxu0 0.0
  %1891 = vmatprep.subr.mxu0 0.0
  %1892 = vmatpush1.msra.mxu0 0.0
  %1893 = vmatprep.subr.mxu0 0.0
  %1894 = vmatpush1.msra.mxu0 0.0
  %1895 = vmatprep.subr.mxu0 0.0
  %1896 = vmatpush1.msra.mxu0 0.0
  %1897 = vmatprep.subr.mxu0 0.0
  %1898 = vmatpush1.msra.mxu0 0.0
  %1899 = vmatprep.subr.mxu0 0.0
  %1900 = vmatpush1.msra.mxu0 0.0
  %1901 = vmatprep.subr.mxu0 0.0
  %1902 = vmatpush1.msra.mxu0 0.0
  %1903 = vmatprep.subr.mxu0 0.0
  %1904 = vmatpush1.msra.mxu0 0.0
  %1905 = vmatprep.subr.mxu0 0.0
  %1906 = vmatpush1.msra.mxu0 0.0
  %1907 = vmatprep.subr.mxu0 0.0
  %1908 = vmatpush1.msra.mxu0 %v1871
  %1909 = vmatprep.subr.mxu0 0.0
  %1910 = vmatpush1.msra.mxu0 %v1870
  %1911 = vmatprep.subr.mxu0 0.0
  %1912 = vmatpush1.msra.mxu0 %v1869
  %1913 = vmatprep.subr.mxu0 0.0
  %1914 = vmatpush1.msra.mxu0 %v1868
  %1915 = vmatprep.subr.mxu0 0.0
  %1916 = vmatpush2.msra.mxu0 0.0
  %1917 = vmatprep.subr.mxu0 0.0
  %1918 = vmatpush2.msra.mxu0 0.0
  %1919 = vmatprep.subr.mxu0 0.0
  %1920 = vmatpush2.msra.mxu0 0.0
  %1921 = vmatprep.subr.mxu0 0.0
  %1922 = vmatpush2.msra.mxu0 0.0
  %1923 = vmatprep.subr.mxu0 0.0
  %1924 = vmatpush2.msra.mxu0 0.0
  %1925 = vmatprep.subr.mxu0 0.0
  %1926 = vmatpush2.msra.mxu0 0.0
  %1927 = vmatprep.subr.mxu0 0.0
  %1928 = vmatpush2.msra.mxu0 0.0
  %1929 = vmatprep.subr.mxu0 0.0
  %1930 = vmatpush2.msra.mxu0 0.0
  %1931 = vmatprep.subr.mxu0 0.0
  %1932 = vmatpush2.msra.mxu0 0.0
  %1933 = vmatprep.subr.mxu0 0.0
  %1934 = vmatpush2.msra.mxu0 0.0
  %1935 = vmatprep.subr.mxu0 0.0
  %1936 = vmatpush2.msra.mxu0 0.0
  %1937 = vmatprep.subr.mxu0 0.0
  %1938 = vmatpush2.msra.mxu0 0.0
  %1939 = vmatprep.subr.mxu0 0.0
  %1940 = vmatpush2.msra.mxu0 0.0
  %1941 = vmatprep.subr.mxu0 0.0
  %1942 = vmatpush2.msra.mxu0 0.0
  %1943 = vmatprep.subr.mxu0 0.0
  %1944 = vmatpush2.msra.mxu0 0.0
  %1945 = vmatprep.subr.mxu0 0.0
  %1946 = vmatpush2.msra.mxu0 0.0
  %1947 = vmatprep.mubr.f32.mxu0 0.0
  %1948 = vmatmul.mubr.f32.gmra.mxu0 %v1878
  %v1949 = vpop.f32.mrf.mxu0
  %v1950 = vadd.f32 %v1876, %v1949
  %v1951 = vpop.f32.mrf.mxu0
  %1952 = vmatprep.mubr.f32.mxu0 0.0
  %1953 = vmatmul.mubr.f32.gmra.mxu0 %v1881
  %v1954 = vpop.f32.mrf.mxu0
  %v1955 = vadd.f32 %v1876, %v1954
  %v1956 = vpop.f32.mrf.mxu0
  %1957 = vdwg.mxu0
  %v1958 = vmul.f32 %v1950, 0.25
  %v1959 = vmul.f32 %v1955, 0.25
  %s1960 = scalar_lea.vmem %s7, 32
  %v1961 = vld [vmem:[%s1960] sm:$0xff]
  %v1962 = vld [vmem:[%s1960 + $0x8] sm:$0xff]
  %v1963 = vld [vmem:[%s1960 + $0x10] sm:$0xff]
  %v1964 = vld [vmem:[%s1960 + $0x18] sm:$0xff]
  %v1965 = vld [vmem:[%s8 + $0x1] sm:$0x1]
  %v1966 = vlaneseq
  %v1967 = vshrl.u32 %v1966, 7
  %v1968 = vsub.s32 0, %v1967
  %v1969 = vrot.slane %v1965, %v1968
  %1970 = vmatprep.subr.mxu0 0.0
  %1971 = vmatpush1.msra.mxu0 0.0
  %1972 = vmatprep.subr.mxu0 0.0
  %1973 = vmatpush1.msra.mxu0 0.0
  %1974 = vmatprep.subr.mxu0 0.0
  %1975 = vmatpush1.msra.mxu0 0.0
  %1976 = vmatprep.subr.mxu0 0.0
  %1977 = vmatpush1.msra.mxu0 0.0
  %1978 = vmatprep.subr.mxu0 0.0
  %1979 = vmatpush1.msra.mxu0 0.0
  %1980 = vmatprep.subr.mxu0 0.0
  %1981 = vmatpush1.msra.mxu0 0.0
  %1982 = vmatprep.subr.mxu0 0.0
  %1983 = vmatpush1.msra.mxu0 0.0
  %1984 = vmatprep.subr.mxu0 0.0
  %1985 = vmatpush1.msra.mxu0 0.0
  %1986 = vmatprep.subr.mxu0 0.0
  %1987 = vmatpush1.msra.mxu0 0.0
  %1988 = vmatprep.subr.mxu0 0.0
  %1989 = vmatpush1.msra.mxu0 0.0
  %1990 = vmatprep.subr.mxu0 0.0
  %1991 = vmatpush1.msra.mxu0 0.0
  %1992 = vmatprep.subr.mxu0 0.0
  %1993 = vmatpush1.msra.mxu0 0.0
  %1994 = vmatprep.subr.mxu0 0.0
  %1995 = vmatpush1.msra.mxu0 %v1964
  %1996 = vmatprep.subr.mxu0 0.0
  %1997 = vmatpush1.msra.mxu0 %v1963
  %1998 = vmatprep.subr.mxu0 0.0
  %1999 = vmatpush1.msra.mxu0 %v1962
  %2000 = vmatprep.subr.mxu0 0.0
  %2001 = vmatpush1.msra.mxu0 %v1961
  %2002 = vmatprep.subr.mxu0 0.0
  %2003 = vmatpush2.msra.mxu0 0.0
  %2004 = vmatprep.subr.mxu0 0.0
  %2005 = vmatpush2.msra.mxu0 0.0
  %2006 = vmatprep.subr.mxu0 0.0
  %2007 = vmatpush2.msra.mxu0 0.0
  %2008 = vmatprep.subr.mxu0 0.0
  %2009 = vmatpush2.msra.mxu0 0.0
  %2010 = vmatprep.subr.mxu0 0.0
  %2011 = vmatpush2.msra.mxu0 0.0
  %2012 = vmatprep.subr.mxu0 0.0
  %2013 = vmatpush2.msra.mxu0 0.0
  %2014 = vmatprep.subr.mxu0 0.0
  %2015 = vmatpush2.msra.mxu0 0.0
  %2016 = vmatprep.subr.mxu0 0.0
  %2017 = vmatpush2.msra.mxu0 0.0
  %2018 = vmatprep.subr.mxu0 0.0
  %2019 = vmatpush2.msra.mxu0 0.0
  %2020 = vmatprep.subr.mxu0 0.0
  %2021 = vmatpush2.msra.mxu0 0.0
  %2022 = vmatprep.subr.mxu0 0.0
  %2023 = vmatpush2.msra.mxu0 0.0
  %2024 = vmatprep.subr.mxu0 0.0
  %2025 = vmatpush2.msra.mxu0 0.0
  %2026 = vmatprep.subr.mxu0 0.0
  %2027 = vmatpush2.msra.mxu0 0.0
  %2028 = vmatprep.subr.mxu0 0.0
  %2029 = vmatpush2.msra.mxu0 0.0
  %2030 = vmatprep.subr.mxu0 0.0
  %2031 = vmatpush2.msra.mxu0 0.0
  %2032 = vmatprep.subr.mxu0 0.0
  %2033 = vmatpush2.msra.mxu0 0.0
  %2034 = vmatprep.mubr.f32.mxu0 0.0
  %2035 = vmatmul.mubr.f32.gmra.mxu0 %v1878
  %v2036 = vpop.f32.mrf.mxu0
  %v2037 = vadd.f32 %v1969, %v2036
  %v2038 = vpop.f32.mrf.mxu0
  %2039 = vmatprep.mubr.f32.mxu0 0.0
  %2040 = vmatmul.mubr.f32.gmra.mxu0 %v1881
  %v2041 = vpop.f32.mrf.mxu0
  %v2042 = vadd.f32 %v1969, %v2041
  %v2043 = vpop.f32.mrf.mxu0
  %2044 = vdwg.mxu0
  %s2045 = scalar_lea.vmem %s7, 64
  %v2046 = vld [vmem:[%s2045] sm:$0xff]
  %v2047 = vld [vmem:[%s2045 + $0x8] sm:$0xff]
  %v2048 = vld [vmem:[%s2045 + $0x10] sm:$0xff]
  %v2049 = vld [vmem:[%s2045 + $0x18] sm:$0xff]
  %v2050 = vld [vmem:[%s8 + $0x2] sm:$0x1]
  %v2051 = vlaneseq
  %v2052 = vshrl.u32 %v2051, 7
  %v2053 = vsub.s32 0, %v2052
  %v2054 = vrot.slane %v2050, %v2053
  %2055 = vmatprep.subr.mxu0 0.0
  %2056 = vmatpush1.msra.mxu0 0.0
  %2057 = vmatprep.subr.mxu0 0.0
  %2058 = vmatpush1.msra.mxu0 0.0
  %2059 = vmatprep.subr.mxu0 0.0
  %2060 = vmatpush1.msra.mxu0 0.0
  %2061 = vmatprep.subr.mxu0 0.0
  %2062 = vmatpush1.msra.mxu0 0.0
  %2063 = vmatprep.subr.mxu0 0.0
  %2064 = vmatpush1.msra.mxu0 0.0
  %2065 = vmatprep.subr.mxu0 0.0
  %2066 = vmatpush1.msra.mxu0 0.0
  %2067 = vmatprep.subr.mxu0 0.0
  %2068 = vmatpush1.msra.mxu0 0.0
  %2069 = vmatprep.subr.mxu0 0.0
  %2070 = vmatpush1.msra.mxu0 0.0
  %2071 = vmatprep.subr.mxu0 0.0
  %2072 = vmatpush1.msra.mxu0 0.0
  %2073 = vmatprep.subr.mxu0 0.0
  %2074 = vmatpush1.msra.mxu0 0.0
  %2075 = vmatprep.subr.mxu0 0.0
  %2076 = vmatpush1.msra.mxu0 0.0
  %2077 = vmatprep.subr.mxu0 0.0
  %2078 = vmatpush1.msra.mxu0 0.0
  %2079 = vmatprep.subr.mxu0 0.0
  %2080 = vmatpush1.msra.mxu0 %v2049
  %2081 = vmatprep.subr.mxu0 0.0
  %2082 = vmatpush1.msra.mxu0 %v2048
  %2083 = vmatprep.subr.mxu0 0.0
  %2084 = vmatpush1.msra.mxu0 %v2047
  %2085 = vmatprep.subr.mxu0 0.0
  %2086 = vmatpush1.msra.mxu0 %v2046
  %2087 = vmatprep.subr.mxu0 0.0
  %2088 = vmatpush2.msra.mxu0 0.0
  %2089 = vmatprep.subr.mxu0 0.0
  %2090 = vmatpush2.msra.mxu0 0.0
  %2091 = vmatprep.subr.mxu0 0.0
  %2092 = vmatpush2.msra.mxu0 0.0
  %2093 = vmatprep.subr.mxu0 0.0
  %2094 = vmatpush2.msra.mxu0 0.0
  %2095 = vmatprep.subr.mxu0 0.0
  %2096 = vmatpush2.msra.mxu0 0.0
  %2097 = vmatprep.subr.mxu0 0.0
  %2098 = vmatpush2.msra.mxu0 0.0
  %2099 = vmatprep.subr.mxu0 0.0
  %2100 = vmatpush2.msra.mxu0 0.0
  %2101 = vmatprep.subr.mxu0 0.0
  %2102 = vmatpush2.msra.mxu0 0.0
  %2103 = vmatprep.subr.mxu0 0.0
  %2104 = vmatpush2.msra.mxu0 0.0
  %2105 = vmatprep.subr.mxu0 0.0
  %2106 = vmatpush2.msra.mxu0 0.0
  %2107 = vmatprep.subr.mxu0 0.0
  %2108 = vmatpush2.msra.mxu0 0.0
  %2109 = vmatprep.subr.mxu0 0.0
  %2110 = vmatpush2.msra.mxu0 0.0
  %2111 = vmatprep.subr.mxu0 0.0
  %2112 = vmatpush2.msra.mxu0 0.0
  %2113 = vmatprep.subr.mxu0 0.0
  %2114 = vmatpush2.msra.mxu0 0.0
  %2115 = vmatprep.subr.mxu0 0.0
  %2116 = vmatpush2.msra.mxu0 0.0
  %2117 = vmatprep.subr.mxu0 0.0
  %2118 = vmatpush2.msra.mxu0 0.0
  %2119 = vmatprep.mubr.f32.mxu0 0.0
  %2120 = vmatmul.mubr.f32.gmra.mxu0 %v1878
  %v2121 = vpop.f32.mrf.mxu0
  %v2122 = vadd.f32 %v2054, %v2121
  %v2123 = vpop.f32.mrf.mxu0
  %2124 = vmatprep.mubr.f32.mxu0 0.0
  %2125 = vmatmul.mubr.f32.gmra.mxu0 %v1881
  %v2126 = vpop.f32.mrf.mxu0
  %v2127 = vadd.f32 %v2054, %v2126
  %v2128 = vpop.f32.mrf.mxu0
  %2129 = vdwg.mxu0
  %v2130 = vld [vmem:[%s1] sm:$0xff]
  %v2131 = vld [vmem:[%s1 + $0x8] sm:$0xff]
  %vm2132 = vcmp.ge.s32.totalorder %v222, 0
  %vm2133 = vcmp.lt.s32.totalorder %v222, 16
  %vm2134 = vmand %vm2132, %vm2133
  %v2135 = vsel %vm2134, 1, 0
  %v2136 = vcvt.s32.f32 %v2135
  %v2137 = vmul.f32 %v1958, %v2136
  %v2138 = vmul.f32 %v1959, %v2136
  %v2140 = vsel %vm137, %v2137, 0
  %v2143 = vsel %vm137, %v2138, 0
  %v2146 = vsel %vm137, %v2037, 0
  %v2149 = vsel %vm137, %v2042, 0
  %2151 = vmatprep.subr.mxu0 0.0
  %2152 = vmatpush1.xpose.msra.mxu0 0.0
  %2153 = vmatprep.subr.mxu0 0.0
  %2154 = vmatpush1.xpose.msra.mxu0 0.0
  %2155 = vmatprep.subr.mxu0 0.0
  %2156 = vmatpush1.xpose.msra.mxu0 0.0
  %2157 = vmatprep.subr.mxu0 0.0
  %2158 = vmatpush1.xpose.msra.mxu0 0.0
  %2159 = vmatprep.subr.mxu0 0.0
  %2160 = vmatpush1.xpose.msra.mxu0 0.0
  %2161 = vmatprep.subr.mxu0 0.0
  %2162 = vmatpush1.xpose.msra.mxu0 0.0
  %2163 = vmatprep.subr.mxu0 0.0
  %2164 = vmatpush1.xpose.msra.mxu0 0.0
  %2165 = vmatprep.subr.mxu0 0.0
  %2166 = vmatpush1.xpose.msra.mxu0 0.0
  %2167 = vmatprep.subr.mxu0 0.0
  %2168 = vmatpush1.xpose.msra.mxu0 0.0
  %2169 = vmatprep.subr.mxu0 0.0
  %2170 = vmatpush1.xpose.msra.mxu0 0.0
  %2171 = vmatprep.subr.mxu0 0.0
  %2172 = vmatpush1.xpose.msra.mxu0 0.0
  %2173 = vmatprep.subr.mxu0 0.0
  %2174 = vmatpush1.xpose.msra.mxu0 0.0
  %2175 = vmatprep.subr.mxu0 0.0
  %2176 = vmatpush1.xpose.msra.mxu0 0.0
  %2177 = vmatprep.subr.mxu0 0.0
  %2178 = vmatpush1.xpose.msra.mxu0 0.0
  %2179 = vmatprep.subr.mxu0 0.0
  %2180 = vmatpush1.xpose.msra.mxu0 %v2149
  %2181 = vmatprep.subr.mxu0 0.0
  %2182 = vmatpush1.xpose.msra.mxu0 %v2146
  %2183 = vmatprep.subr.mxu0 0.0
  %2184 = vmatpush2.xpose.msra.mxu0 0.0
  %2185 = vmatprep.subr.mxu0 0.0
  %2186 = vmatpush2.xpose.msra.mxu0 0.0
  %2187 = vmatprep.subr.mxu0 0.0
  %2188 = vmatpush2.xpose.msra.mxu0 0.0
  %2189 = vmatprep.subr.mxu0 0.0
  %2190 = vmatpush2.xpose.msra.mxu0 0.0
  %2191 = vmatprep.subr.mxu0 0.0
  %2192 = vmatpush2.xpose.msra.mxu0 0.0
  %2193 = vmatprep.subr.mxu0 0.0
  %2194 = vmatpush2.xpose.msra.mxu0 0.0
  %2195 = vmatprep.subr.mxu0 0.0
  %2196 = vmatpush2.xpose.msra.mxu0 0.0
  %2197 = vmatprep.subr.mxu0 0.0
  %2198 = vmatpush2.xpose.msra.mxu0 0.0
  %2199 = vmatprep.subr.mxu0 0.0
  %2200 = vmatpush2.xpose.msra.mxu0 0.0
  %2201 = vmatprep.subr.mxu0 0.0
  %2202 = vmatpush2.xpose.msra.mxu0 0.0
  %2203 = vmatprep.subr.mxu0 0.0
  %2204 = vmatpush2.xpose.msra.mxu0 0.0
  %2205 = vmatprep.subr.mxu0 0.0
  %2206 = vmatpush2.xpose.msra.mxu0 0.0
  %2207 = vmatprep.subr.mxu0 0.0
  %2208 = vmatpush2.xpose.msra.mxu0 0.0
  %2209 = vmatprep.subr.mxu0 0.0
  %2210 = vmatpush2.xpose.msra.mxu0 0.0
  %2211 = vmatprep.subr.mxu0 0.0
  %2212 = vmatpush2.xpose.msra.mxu0 0.0
  %2213 = vmatprep.subr.mxu0 0.0
  %2214 = vmatpush2.xpose.msra.mxu0 0.0
  %2215 = vmatprep.mubr.f32.mxu0 0.0
  %2216 = vmatmul.mubr.f32.gmra.mxu0 %v2140
  %v2217 = vpop.f32.mrf.mxu0
  %v2218 = vadd.f32 %v2130, %v2217
  %v2219 = vpop.f32.mrf.mxu0
  %2220 = vmatprep.mubr.f32.mxu0 0.0
  %2221 = vmatmul.mubr.f32.gmra.mxu0 %v2143
  %v2222 = vpop.f32.mrf.mxu0
  %v2223 = vadd.f32 %v2131, %v2222
  %v2224 = vpop.f32.mrf.mxu0
  %2225 = vdwg.mxu0
  %vm2226 = vcmask 130048
  %v2227 = vsel %vm2226, %v2218, -inf
  %2228 = vmax.xlane.f32.xlu0 %v2227
  %v2229 = vpop.xlane.xlu0 %2228
  %v2230 = vsel %vm2226, %v2223, -inf
  %2231 = vmax.xlane.f32.xlu0 %v2230
  %v2232 = vpop.xlane.xlu0 %2231
  %v2233 = vsub.f32 %v2218, %v2229
  %v2234 = vsub.f32 %v2223, %v2232
  %v2235 = vmul.f32 %v2233, 1.442695
  %v2236 = vpow.pop %v2235
  %v2237 = vmul.f32 %v2234, 1.442695
  %v2238 = vpow.pop %v2237
  %v2239 = vsel %vm2226, %v2236, 0.0
  %2240 = vadd.xlane.f32.xlu0 %v2239
  %v2241 = vpop.xlane.xlu0 %2240
  %v2242 = vsel %vm2226, %v2238, 0.0
  %2243 = vadd.xlane.f32.xlu0 %v2242
  %v2244 = vpop.xlane.xlu0 %2243
  %v2245 = vrcp.pop %v2241
  %v2246 = vrcp.pop %v2244
  %v2247 = vmul.f32 %v2236, %v2245
  %v2248 = vmul.f32 %v2238, %v2246
  %v2249 = vmul.f32 %v2122, %v2136
  %v2250 = vmul.f32 %v2127, %v2136
  %vm2251 = vcmp.ge.s32.totalorder %v222, 16
  %vm2252 = vcmp.lt.s32.totalorder %v222, 32
  %vm2253 = vmand %vm2251, %vm2252
  %v2254 = vsel %vm2253, 1, 0
  %v2255 = vcvt.s32.f32 %v2254
  %v2256 = vmul.f32 %v1958, %v2255
  %v2257 = vmul.f32 %v1959, %v2255
  %v2259 = vsel %vm137, %v2256, 0
  %v2262 = vsel %vm137, %v2257, 0
  %2264 = vmatprep.subr.mxu0 0.0
  %2265 = vmatpush1.xpose.msra.mxu0 0.0
  %2266 = vmatprep.subr.mxu0 0.0
  %2267 = vmatpush1.xpose.msra.mxu0 0.0
  %2268 = vmatprep.subr.mxu0 0.0
  %2269 = vmatpush1.xpose.msra.mxu0 0.0
  %2270 = vmatprep.subr.mxu0 0.0
  %2271 = vmatpush1.xpose.msra.mxu0 0.0
  %2272 = vmatprep.subr.mxu0 0.0
  %2273 = vmatpush1.xpose.msra.mxu0 0.0
  %2274 = vmatprep.subr.mxu0 0.0
  %2275 = vmatpush1.xpose.msra.mxu0 0.0
  %2276 = vmatprep.subr.mxu0 0.0
  %2277 = vmatpush1.xpose.msra.mxu0 0.0
  %2278 = vmatprep.subr.mxu0 0.0
  %2279 = vmatpush1.xpose.msra.mxu0 0.0
  %2280 = vmatprep.subr.mxu0 0.0
  %2281 = vmatpush1.xpose.msra.mxu0 0.0
  %2282 = vmatprep.subr.mxu0 0.0
  %2283 = vmatpush1.xpose.msra.mxu0 0.0
  %2284 = vmatprep.subr.mxu0 0.0
  %2285 = vmatpush1.xpose.msra.mxu0 0.0
  %2286 = vmatprep.subr.mxu0 0.0
  %2287 = vmatpush1.xpose.msra.mxu0 0.0
  %2288 = vmatprep.subr.mxu0 0.0
  %2289 = vmatpush1.xpose.msra.mxu0 0.0
  %2290 = vmatprep.subr.mxu0 0.0
  %2291 = vmatpush1.xpose.msra.mxu0 0.0
  %2292 = vmatprep.subr.mxu0 0.0
  %2293 = vmatpush1.xpose.msra.mxu0 %v2149
  %2294 = vmatprep.subr.mxu0 0.0
  %2295 = vmatpush1.xpose.msra.mxu0 %v2146
  %2296 = vmatprep.subr.mxu0 0.0
  %2297 = vmatpush2.xpose.msra.mxu0 0.0
  %2298 = vmatprep.subr.mxu0 0.0
  %2299 = vmatpush2.xpose.msra.mxu0 0.0
  %2300 = vmatprep.subr.mxu0 0.0
  %2301 = vmatpush2.xpose.msra.mxu0 0.0
  %2302 = vmatprep.subr.mxu0 0.0
  %2303 = vmatpush2.xpose.msra.mxu0 0.0
  %2304 = vmatprep.subr.mxu0 0.0
  %2305 = vmatpush2.xpose.msra.mxu0 0.0
  %2306 = vmatprep.subr.mxu0 0.0
  %2307 = vmatpush2.xpose.msra.mxu0 0.0
  %2308 = vmatprep.subr.mxu0 0.0
  %2309 = vmatpush2.xpose.msra.mxu0 0.0
  %2310 = vmatprep.subr.mxu0 0.0
  %2311 = vmatpush2.xpose.msra.mxu0 0.0
  %2312 = vmatprep.subr.mxu0 0.0
  %2313 = vmatpush2.xpose.msra.mxu0 0.0
  %2314 = vmatprep.subr.mxu0 0.0
  %2315 = vmatpush2.xpose.msra.mxu0 0.0
  %2316 = vmatprep.subr.mxu0 0.0
  %2317 = vmatpush2.xpose.msra.mxu0 0.0
  %2318 = vmatprep.subr.mxu0 0.0
  %2319 = vmatpush2.xpose.msra.mxu0 0.0
  %2320 = vmatprep.subr.mxu0 0.0
  %2321 = vmatpush2.xpose.msra.mxu0 0.0
  %2322 = vmatprep.subr.mxu0 0.0
  %2323 = vmatpush2.xpose.msra.mxu0 0.0
  %2324 = vmatprep.subr.mxu0 0.0
  %2325 = vmatpush2.xpose.msra.mxu0 0.0
  %2326 = vmatprep.subr.mxu0 0.0
  %2327 = vmatpush2.xpose.msra.mxu0 0.0
  %2328 = vmatprep.mubr.f32.mxu0 0.0
  %2329 = vmatmul.mubr.f32.gmra.mxu0 %v2259
  %v2330 = vpop.f32.mrf.mxu0
  %v2331 = vadd.f32 %v2130, %v2330
  %v2332 = vpop.f32.mrf.mxu0
  %2333 = vmatprep.mubr.f32.mxu0 0.0
  %2334 = vmatmul.mubr.f32.gmra.mxu0 %v2262
  %v2335 = vpop.f32.mrf.mxu0
  %v2336 = vadd.f32 %v2131, %v2335
  %v2337 = vpop.f32.mrf.mxu0
  %2338 = vdwg.mxu0
  %v2339 = vsel %vm2226, %v2331, -inf
  %2340 = vmax.xlane.f32.xlu0 %v2339
  %v2341 = vpop.xlane.xlu0 %2340
  %v2342 = vsel %vm2226, %v2336, -inf
  %2343 = vmax.xlane.f32.xlu0 %v2342
  %v2344 = vpop.xlane.xlu0 %2343
  %v2345 = vsub.f32 %v2331, %v2341
  %v2346 = vsub.f32 %v2336, %v2344
  %v2347 = vmul.f32 %v2345, 1.442695
  %v2348 = vpow.pop %v2347
  %v2349 = vmul.f32 %v2346, 1.442695
  %v2350 = vpow.pop %v2349
  %v2351 = vsel %vm2226, %v2348, 0.0
  %2352 = vadd.xlane.f32.xlu0 %v2351
  %v2353 = vpop.xlane.xlu0 %2352
  %v2354 = vsel %vm2226, %v2350, 0.0
  %2355 = vadd.xlane.f32.xlu0 %v2354
  %v2356 = vpop.xlane.xlu0 %2355
  %v2357 = vrcp.pop %v2353
  %v2358 = vrcp.pop %v2356
  %v2359 = vmul.f32 %v2348, %v2357
  %v2360 = vmul.f32 %v2350, %v2358
  %v2361 = vmul.f32 %v2122, %v2255
  %v2362 = vmul.f32 %v2127, %v2255
  %v2364 = vsel %vm2226, %v2359, 0
  %v2367 = vsel %vm2226, %v2360, 0
  %2369 = vmatprep.subr.mxu0 0.0
  %2370 = vmatpush1.msra.mxu0 0.0
  %2371 = vmatprep.subr.mxu0 0.0
  %2372 = vmatpush1.msra.mxu0 0.0
  %2373 = vmatprep.subr.mxu0 0.0
  %2374 = vmatpush1.msra.mxu0 0.0
  %2375 = vmatprep.subr.mxu0 0.0
  %2376 = vmatpush1.msra.mxu0 0.0
  %2377 = vmatprep.subr.mxu0 0.0
  %2378 = vmatpush1.msra.mxu0 0.0
  %2379 = vmatprep.subr.mxu0 0.0
  %2380 = vmatpush1.msra.mxu0 0.0
  %2381 = vmatprep.subr.mxu0 0.0
  %2382 = vmatpush1.msra.mxu0 0.0
  %2383 = vmatprep.subr.mxu0 0.0
  %2384 = vmatpush1.msra.mxu0 0.0
  %2385 = vmatprep.subr.mxu0 0.0
  %2386 = vmatpush1.msra.mxu0 0.0
  %2387 = vmatprep.subr.mxu0 0.0
  %2388 = vmatpush1.msra.mxu0 0.0
  %2389 = vmatprep.subr.mxu0 0.0
  %2390 = vmatpush1.msra.mxu0 0.0
  %2391 = vmatprep.subr.mxu0 0.0
  %2392 = vmatpush1.msra.mxu0 0.0
  %2393 = vmatprep.subr.mxu0 0.0
  %2394 = vmatpush1.msra.mxu0 0.0
  %2395 = vmatprep.subr.mxu0 0.0
  %2396 = vmatpush1.msra.mxu0 0.0
  %2397 = vmatprep.subr.mxu0 0.0
  %2398 = vmatpush1.msra.mxu0 %v2362
  %2399 = vmatprep.subr.mxu0 0.0
  %2400 = vmatpush1.msra.mxu0 %v2361
  %2401 = vmatprep.subr.mxu0 0.0
  %2402 = vmatpush2.msra.mxu0 0.0
  %2403 = vmatprep.subr.mxu0 0.0
  %2404 = vmatpush2.msra.mxu0 0.0
  %2405 = vmatprep.subr.mxu0 0.0
  %2406 = vmatpush2.msra.mxu0 0.0
  %2407 = vmatprep.subr.mxu0 0.0
  %2408 = vmatpush2.msra.mxu0 0.0
  %2409 = vmatprep.subr.mxu0 0.0
  %2410 = vmatpush2.msra.mxu0 0.0
  %2411 = vmatprep.subr.mxu0 0.0
  %2412 = vmatpush2.msra.mxu0 0.0
  %2413 = vmatprep.subr.mxu0 0.0
  %2414 = vmatpush2.msra.mxu0 0.0
  %2415 = vmatprep.subr.mxu0 0.0
  %2416 = vmatpush2.msra.mxu0 0.0
  %2417 = vmatprep.subr.mxu0 0.0
  %2418 = vmatpush2.msra.mxu0 0.0
  %2419 = vmatprep.subr.mxu0 0.0
  %2420 = vmatpush2.msra.mxu0 0.0
  %2421 = vmatprep.subr.mxu0 0.0
  %2422 = vmatpush2.msra.mxu0 0.0
  %2423 = vmatprep.subr.mxu0 0.0
  %2424 = vmatpush2.msra.mxu0 0.0
  %2425 = vmatprep.subr.mxu0 0.0
  %2426 = vmatpush2.msra.mxu0 0.0
  %2427 = vmatprep.subr.mxu0 0.0
  %2428 = vmatpush2.msra.mxu0 0.0
  %2429 = vmatprep.subr.mxu0 0.0
  %2430 = vmatpush2.msra.mxu0 0.0
  %2431 = vmatprep.subr.mxu0 0.0
  %2432 = vmatpush2.msra.mxu0 0.0
  %2433 = vmatprep.mubr.f32.mxu0 0.0
  %2434 = vmatmul.mubr.f32.gmra.mxu0 %v2364
  %v2435 = vpop.f32.mrf.mxu0
  %v2436 = vadd.f32 0.0, %v2435
  %v2437 = vpop.f32.mrf.mxu0
  %2438 = vmatprep.mubr.f32.mxu0 0.0
  %2439 = vmatmul.mubr.f32.gmra.mxu0 %v2367
  %v2440 = vpop.f32.mrf.mxu0
  %v2441 = vadd.f32 0.0, %v2440
  %v2442 = vpop.f32.mrf.mxu0
  %2443 = vdwg.mxu0
  %v2445 = vsel %vm2226, %v2247, 0
  %v2448 = vsel %vm2226, %v2248, 0
  %2450 = vmatprep.subr.mxu0 0.0
  %2451 = vmatpush1.msra.mxu0 0.0
  %2452 = vmatprep.subr.mxu0 0.0
  %2453 = vmatpush1.msra.mxu0 0.0
  %2454 = vmatprep.subr.mxu0 0.0
  %2455 = vmatpush1.msra.mxu0 0.0
  %2456 = vmatprep.subr.mxu0 0.0
  %2457 = vmatpush1.msra.mxu0 0.0
  %2458 = vmatprep.subr.mxu0 0.0
  %2459 = vmatpush1.msra.mxu0 0.0
  %2460 = vmatprep.subr.mxu0 0.0
  %2461 = vmatpush1.msra.mxu0 0.0
  %2462 = vmatprep.subr.mxu0 0.0
  %2463 = vmatpush1.msra.mxu0 0.0
  %2464 = vmatprep.subr.mxu0 0.0
  %2465 = vmatpush1.msra.mxu0 0.0
  %2466 = vmatprep.subr.mxu0 0.0
  %2467 = vmatpush1.msra.mxu0 0.0
  %2468 = vmatprep.subr.mxu0 0.0
  %2469 = vmatpush1.msra.mxu0 0.0
  %2470 = vmatprep.subr.mxu0 0.0
  %2471 = vmatpush1.msra.mxu0 0.0
  %2472 = vmatprep.subr.mxu0 0.0
  %2473 = vmatpush1.msra.mxu0 0.0
  %2474 = vmatprep.subr.mxu0 0.0
  %2475 = vmatpush1.msra.mxu0 0.0
  %2476 = vmatprep.subr.mxu0 0.0
  %2477 = vmatpush1.msra.mxu0 0.0
  %2478 = vmatprep.subr.mxu0 0.0
  %2479 = vmatpush1.msra.mxu0 %v2250
  %2480 = vmatprep.subr.mxu0 0.0
  %2481 = vmatpush1.msra.mxu0 %v2249
  %2482 = vmatprep.subr.mxu0 0.0
  %2483 = vmatpush2.msra.mxu0 0.0
  %2484 = vmatprep.subr.mxu0 0.0
  %2485 = vmatpush2.msra.mxu0 0.0
  %2486 = vmatprep.subr.mxu0 0.0
  %2487 = vmatpush2.msra.mxu0 0.0
  %2488 = vmatprep.subr.mxu0 0.0
  %2489 = vmatpush2.msra.mxu0 0.0
  %2490 = vmatprep.subr.mxu0 0.0
  %2491 = vmatpush2.msra.mxu0 0.0
  %2492 = vmatprep.subr.mxu0 0.0
  %2493 = vmatpush2.msra.mxu0 0.0
  %2494 = vmatprep.subr.mxu0 0.0
  %2495 = vmatpush2.msra.mxu0 0.0
  %2496 = vmatprep.subr.mxu0 0.0
  %2497 = vmatpush2.msra.mxu0 0.0
  %2498 = vmatprep.subr.mxu0 0.0
  %2499 = vmatpush2.msra.mxu0 0.0
  %2500 = vmatprep.subr.mxu0 0.0
  %2501 = vmatpush2.msra.mxu0 0.0
  %2502 = vmatprep.subr.mxu0 0.0
  %2503 = vmatpush2.msra.mxu0 0.0
  %2504 = vmatprep.subr.mxu0 0.0
  %2505 = vmatpush2.msra.mxu0 0.0
  %2506 = vmatprep.subr.mxu0 0.0
  %2507 = vmatpush2.msra.mxu0 0.0
  %2508 = vmatprep.subr.mxu0 0.0
  %2509 = vmatpush2.msra.mxu0 0.0
  %2510 = vmatprep.subr.mxu0 0.0
  %2511 = vmatpush2.msra.mxu0 0.0
  %2512 = vmatprep.subr.mxu0 0.0
  %2513 = vmatpush2.msra.mxu0 0.0
  %2514 = vmatprep.mubr.f32.mxu0 0.0
  %2515 = vmatmul.mubr.f32.gmra.mxu0 %v2445
  %v2516 = vpop.f32.mrf.mxu0
  %v2517 = vadd.f32 %v2436, %v2516
  %v2518 = vpop.f32.mrf.mxu0
  %2519 = vmatprep.mubr.f32.mxu0 0.0
  %2520 = vmatmul.mubr.f32.gmra.mxu0 %v2448
  %v2521 = vpop.f32.mrf.mxu0
  %v2522 = vadd.f32 %v2441, %v2521
  %v2523 = vpop.f32.mrf.mxu0
  %2524 = vdwg.mxu0
  %s2525 = scalar_lea.vmem %s7, 96
  %v2526 = vld [vmem:[%s2525] sm:$0xff]
  %v2527 = vld [vmem:[%s2525 + $0x8] sm:$0xff]
  %v2528 = vld [vmem:[%s2525 + $0x10] sm:$0xff]
  %v2529 = vld [vmem:[%s2525 + $0x18] sm:$0xff]
  %v2530 = vld [vmem:[%s8 + $0x3] sm:$0x1]
  %v2531 = vlaneseq
  %v2532 = vshrl.u32 %v2531, 7
  %v2533 = vsub.s32 0, %v2532
  %v2534 = vrot.slane %v2530, %v2533
  %v2536 = vsel %vm137, %v2517, 0
  %v2539 = vsel %vm137, %v2522, 0
  %2541 = vmatprep.subr.mxu0 0.0
  %2542 = vmatpush1.msra.mxu0 0.0
  %2543 = vmatprep.subr.mxu0 0.0
  %2544 = vmatpush1.msra.mxu0 0.0
  %2545 = vmatprep.subr.mxu0 0.0
  %2546 = vmatpush1.msra.mxu0 0.0
  %2547 = vmatprep.subr.mxu0 0.0
  %2548 = vmatpush1.msra.mxu0 0.0
  %2549 = vmatprep.subr.mxu0 0.0
  %2550 = vmatpush1.msra.mxu0 0.0
  %2551 = vmatprep.subr.mxu0 0.0
  %2552 = vmatpush1.msra.mxu0 0.0
  %2553 = vmatprep.subr.mxu0 0.0
  %2554 = vmatpush1.msra.mxu0 0.0
  %2555 = vmatprep.subr.mxu0 0.0
  %2556 = vmatpush1.msra.mxu0 0.0
  %2557 = vmatprep.subr.mxu0 0.0
  %2558 = vmatpush1.msra.mxu0 0.0
  %2559 = vmatprep.subr.mxu0 0.0
  %2560 = vmatpush1.msra.mxu0 0.0
  %2561 = vmatprep.subr.mxu0 0.0
  %2562 = vmatpush1.msra.mxu0 0.0
  %2563 = vmatprep.subr.mxu0 0.0
  %2564 = vmatpush1.msra.mxu0 0.0
  %2565 = vmatprep.subr.mxu0 0.0
  %2566 = vmatpush1.msra.mxu0 %v2529
  %2567 = vmatprep.subr.mxu0 0.0
  %2568 = vmatpush1.msra.mxu0 %v2528
  %2569 = vmatprep.subr.mxu0 0.0
  %2570 = vmatpush1.msra.mxu0 %v2527
  %2571 = vmatprep.subr.mxu0 0.0
  %2572 = vmatpush1.msra.mxu0 %v2526
  %2573 = vmatprep.subr.mxu0 0.0
  %2574 = vmatpush2.msra.mxu0 0.0
  %2575 = vmatprep.subr.mxu0 0.0
  %2576 = vmatpush2.msra.mxu0 0.0
  %2577 = vmatprep.subr.mxu0 0.0
  %2578 = vmatpush2.msra.mxu0 0.0
  %2579 = vmatprep.subr.mxu0 0.0
  %2580 = vmatpush2.msra.mxu0 0.0
  %2581 = vmatprep.subr.mxu0 0.0
  %2582 = vmatpush2.msra.mxu0 0.0
  %2583 = vmatprep.subr.mxu0 0.0
  %2584 = vmatpush2.msra.mxu0 0.0
  %2585 = vmatprep.subr.mxu0 0.0
  %2586 = vmatpush2.msra.mxu0 0.0
  %2587 = vmatprep.subr.mxu0 0.0
  %2588 = vmatpush2.msra.mxu0 0.0
  %2589 = vmatprep.subr.mxu0 0.0
  %2590 = vmatpush2.msra.mxu0 0.0
  %2591 = vmatprep.subr.mxu0 0.0
  %2592 = vmatpush2.msra.mxu0 0.0
  %2593 = vmatprep.subr.mxu0 0.0
  %2594 = vmatpush2.msra.mxu0 0.0
  %2595 = vmatprep.subr.mxu0 0.0
  %2596 = vmatpush2.msra.mxu0 0.0
  %2597 = vmatprep.subr.mxu0 0.0
  %2598 = vmatpush2.msra.mxu0 0.0
  %2599 = vmatprep.subr.mxu0 0.0
  %2600 = vmatpush2.msra.mxu0 0.0
  %2601 = vmatprep.subr.mxu0 0.0
  %2602 = vmatpush2.msra.mxu0 0.0
  %2603 = vmatprep.subr.mxu0 0.0
  %2604 = vmatpush2.msra.mxu0 0.0
  %2605 = vmatprep.mubr.f32.mxu0 0.0
  %2606 = vmatmul.mubr.f32.gmra.mxu0 %v2536
  %v2607 = vpop.f32.mrf.mxu0
  %v2608 = vadd.f32 %v2534, %v2607
  %v2609 = vpop.f32.mrf.mxu0
  %2610 = vmatprep.mubr.f32.mxu0 0.0
  %2611 = vmatmul.mubr.f32.gmra.mxu0 %v2539
  %v2612 = vpop.f32.mrf.mxu0
  %v2613 = vadd.f32 %v2534, %v2612
  %v2614 = vpop.f32.mrf.mxu0
  %2615 = vdwg.mxu0
  %v2616 = vadd.f32 %v2608, %v1866
  %v2617 = vadd.f32 %v2613, %v1867
  %v2618 = vld [vmem:[%s8 + $0x4] sm:$0x1]
  %v2619 = vld [vmem:[%s8 + $0x5] sm:$0x1]
  %v2620 = vsel %vm137, %v2616, 0.0
  %2621 = vadd.xlane.f32.xlu0 %v2620
  %v2622 = vpop.xlane.xlu0 %2621
  %v2623 = vsel %vm137, %v2617, 0.0
  %2624 = vadd.xlane.f32.xlu0 %v2623
  %v2625 = vpop.xlane.xlu0 %2624
  %v2626 = vrcp.pop 32.0
  %v2627 = vmul.f32 %v2622, %v2626
  %v2628 = vmul.f32 %v2625, %v2626
  %v2629 = vsub.f32 %v2616, %v2627
  %v2630 = vsub.f32 %v2617, %v2628
  %v2631 = vmul.f32 %v2629, %v2629
  %v2632 = vmul.f32 %v2630, %v2630
  %v2633 = vsel %vm137, %v2631, 0.0
  %2634 = vadd.xlane.f32.xlu0 %v2633
  %v2635 = vpop.xlane.xlu0 %2634
  %v2636 = vsel %vm137, %v2632, 0.0
  %2637 = vadd.xlane.f32.xlu0 %v2636
  %v2638 = vpop.xlane.xlu0 %2637
  %v2639 = vmul.f32 %v2635, %v2626
  %v2640 = vmul.f32 %v2638, %v2626
  %v2641 = vadd.f32 %v2639, 1e-12
  %v2642 = vadd.f32 %v2640, 1e-12
  %v2643 = vrsqrt.pop %v2641
  %v2644 = vrsqrt.pop %v2642
  %v2645 = vmul.f32 %v2629, %v2643
  %v2646 = vmul.f32 %v2630, %v2644
  %v2647 = vlaneseq
  %v2648 = vshrl.u32 %v2647, 7
  %v2649 = vsub.s32 0, %v2648
  %v2650 = vrot.slane %v2618, %v2649
  %v2651 = vmul.f32 %v2645, %v2650
  %v2652 = vmul.f32 %v2646, %v2650
  %v2653 = vlaneseq
  %v2654 = vshrl.u32 %v2653, 7
  %v2655 = vsub.s32 0, %v2654
  %v2656 = vrot.slane %v2619, %v2655
  %v2657 = vadd.f32 %v2651, %v2656
  %v2658 = vadd.f32 %v2652, %v2656
  %s2659 = scalar_lea.vmem %s7, 128
  %v2660 = vld [vmem:[%s2659] sm:$0xff]
  %v2661 = vld [vmem:[%s2659 + $0x8] sm:$0xff]
  %v2662 = vld [vmem:[%s2659 + $0x10] sm:$0xff]
  %v2663 = vld [vmem:[%s2659 + $0x18] sm:$0xff]
  %v2664 = vld [vmem:[%s8 + $0x6] sm:$0x1]
  %v2665 = vlaneseq
  %v2666 = vshrl.u32 %v2665, 7
  %v2667 = vsub.s32 0, %v2666
  %v2668 = vrot.slane %v2664, %v2667
  %v2670 = vsel %vm137, %v2657, 0
  %v2673 = vsel %vm137, %v2658, 0
  %2675 = vmatprep.subr.mxu0 0.0
  %2676 = vmatpush1.msra.mxu0 0.0
  %2677 = vmatprep.subr.mxu0 0.0
  %2678 = vmatpush1.msra.mxu0 0.0
  %2679 = vmatprep.subr.mxu0 0.0
  %2680 = vmatpush1.msra.mxu0 0.0
  %2681 = vmatprep.subr.mxu0 0.0
  %2682 = vmatpush1.msra.mxu0 0.0
  %2683 = vmatprep.subr.mxu0 0.0
  %2684 = vmatpush1.msra.mxu0 0.0
  %2685 = vmatprep.subr.mxu0 0.0
  %2686 = vmatpush1.msra.mxu0 0.0
  %2687 = vmatprep.subr.mxu0 0.0
  %2688 = vmatpush1.msra.mxu0 0.0
  %2689 = vmatprep.subr.mxu0 0.0
  %2690 = vmatpush1.msra.mxu0 0.0
  %2691 = vmatprep.subr.mxu0 0.0
  %2692 = vmatpush1.msra.mxu0 0.0
  %2693 = vmatprep.subr.mxu0 0.0
  %2694 = vmatpush1.msra.mxu0 0.0
  %2695 = vmatprep.subr.mxu0 0.0
  %2696 = vmatpush1.msra.mxu0 0.0
  %2697 = vmatprep.subr.mxu0 0.0
  %2698 = vmatpush1.msra.mxu0 0.0
  %2699 = vmatprep.subr.mxu0 0.0
  %2700 = vmatpush1.msra.mxu0 %v2663
  %2701 = vmatprep.subr.mxu0 0.0
  %2702 = vmatpush1.msra.mxu0 %v2662
  %2703 = vmatprep.subr.mxu0 0.0
  %2704 = vmatpush1.msra.mxu0 %v2661
  %2705 = vmatprep.subr.mxu0 0.0
  %2706 = vmatpush1.msra.mxu0 %v2660
  %2707 = vmatprep.subr.mxu0 0.0
  %2708 = vmatpush2.msra.mxu0 0.0
  %2709 = vmatprep.subr.mxu0 0.0
  %2710 = vmatpush2.msra.mxu0 0.0
  %2711 = vmatprep.subr.mxu0 0.0
  %2712 = vmatpush2.msra.mxu0 0.0
  %2713 = vmatprep.subr.mxu0 0.0
  %2714 = vmatpush2.msra.mxu0 0.0
  %2715 = vmatprep.subr.mxu0 0.0
  %2716 = vmatpush2.msra.mxu0 0.0
  %2717 = vmatprep.subr.mxu0 0.0
  %2718 = vmatpush2.msra.mxu0 0.0
  %2719 = vmatprep.subr.mxu0 0.0
  %2720 = vmatpush2.msra.mxu0 0.0
  %2721 = vmatprep.subr.mxu0 0.0
  %2722 = vmatpush2.msra.mxu0 0.0
  %2723 = vmatprep.subr.mxu0 0.0
  %2724 = vmatpush2.msra.mxu0 0.0
  %2725 = vmatprep.subr.mxu0 0.0
  %2726 = vmatpush2.msra.mxu0 0.0
  %2727 = vmatprep.subr.mxu0 0.0
  %2728 = vmatpush2.msra.mxu0 0.0
  %2729 = vmatprep.subr.mxu0 0.0
  %2730 = vmatpush2.msra.mxu0 0.0
  %2731 = vmatprep.subr.mxu0 0.0
  %2732 = vmatpush2.msra.mxu0 0.0
  %2733 = vmatprep.subr.mxu0 0.0
  %2734 = vmatpush2.msra.mxu0 0.0
  %2735 = vmatprep.subr.mxu0 0.0
  %2736 = vmatpush2.msra.mxu0 0.0
  %2737 = vmatprep.subr.mxu0 0.0
  %2738 = vmatpush2.msra.mxu0 0.0
  %2739 = vmatprep.mubr.f32.mxu0 0.0
  %2740 = vmatmul.mubr.f32.gmra.mxu0 %v2670
  %v2741 = vpop.f32.mrf.mxu0
  %v2742 = vadd.f32 %v2668, %v2741
  %v2743 = vpop.f32.mrf.mxu0
  %2744 = vmatprep.mubr.f32.mxu0 0.0
  %2745 = vmatmul.mubr.f32.gmra.mxu0 %v2673
  %v2746 = vpop.f32.mrf.mxu0
  %v2747 = vadd.f32 %v2668, %v2746
  %v2748 = vpop.f32.mrf.mxu0
  %2749 = vdwg.mxu0
  %v2750 = vmul.f32 %v2742, 0.5
  %v2751 = vmul.f32 %v2747, 0.5
  %v2752 = vmul.f32 %v2742, 0.70710677
  %v2753 = vmul.f32 %v2747, 0.70710677
  %v2754 = verf.f32.pop %v2752
  %v2755 = verf.f32.pop %v2753
  %v2756 = vadd.f32 %v2754, 1.0
  %v2757 = vadd.f32 %v2755, 1.0
  %v2758 = vmul.f32 %v2750, %v2756
  %v2759 = vmul.f32 %v2751, %v2757
  %s2760 = scalar_lea.vmem %s7, 160
  %v2761 = vld [vmem:[%s2760] sm:$0xff]
  %v2762 = vld [vmem:[%s2760 + $0x8] sm:$0xff]
  %v2763 = vld [vmem:[%s2760 + $0x10] sm:$0xff]
  %v2764 = vld [vmem:[%s2760 + $0x18] sm:$0xff]
  %v2765 = vld [vmem:[%s8 + $0x7] sm:$0x1]
  %v2766 = vlaneseq
  %v2767 = vshrl.u32 %v2766, 7
  %v2768 = vsub.s32 0, %v2767
  %v2769 = vrot.slane %v2765, %v2768
  %v2771 = vsel %vm137, %v2758, 0
  %v2774 = vsel %vm137, %v2759, 0
  %2776 = vmatprep.subr.mxu0 0.0
  %2777 = vmatpush1.msra.mxu0 0.0
  %2778 = vmatprep.subr.mxu0 0.0
  %2779 = vmatpush1.msra.mxu0 0.0
  %2780 = vmatprep.subr.mxu0 0.0
  %2781 = vmatpush1.msra.mxu0 0.0
  %2782 = vmatprep.subr.mxu0 0.0
  %2783 = vmatpush1.msra.mxu0 0.0
  %2784 = vmatprep.subr.mxu0 0.0
  %2785 = vmatpush1.msra.mxu0 0.0
  %2786 = vmatprep.subr.mxu0 0.0
  %2787 = vmatpush1.msra.mxu0 0.0
  %2788 = vmatprep.subr.mxu0 0.0
  %2789 = vmatpush1.msra.mxu0 0.0
  %2790 = vmatprep.subr.mxu0 0.0
  %2791 = vmatpush1.msra.mxu0 0.0
  %2792 = vmatprep.subr.mxu0 0.0
  %2793 = vmatpush1.msra.mxu0 0.0
  %2794 = vmatprep.subr.mxu0 0.0
  %2795 = vmatpush1.msra.mxu0 0.0
  %2796 = vmatprep.subr.mxu0 0.0
  %2797 = vmatpush1.msra.mxu0 0.0
  %2798 = vmatprep.subr.mxu0 0.0
  %2799 = vmatpush1.msra.mxu0 0.0
  %2800 = vmatprep.subr.mxu0 0.0
  %2801 = vmatpush1.msra.mxu0 %v2764
  %2802 = vmatprep.subr.mxu0 0.0
  %2803 = vmatpush1.msra.mxu0 %v2763
  %2804 = vmatprep.subr.mxu0 0.0
  %2805 = vmatpush1.msra.mxu0 %v2762
  %2806 = vmatprep.subr.mxu0 0.0
  %2807 = vmatpush1.msra.mxu0 %v2761
  %2808 = vmatprep.subr.mxu0 0.0
  %2809 = vmatpush2.msra.mxu0 0.0
  %2810 = vmatprep.subr.mxu0 0.0
  %2811 = vmatpush2.msra.mxu0 0.0
  %2812 = vmatprep.subr.mxu0 0.0
  %2813 = vmatpush2.msra.mxu0 0.0
  %2814 = vmatprep.subr.mxu0 0.0
  %2815 = vmatpush2.msra.mxu0 0.0
  %2816 = vmatprep.subr.mxu0 0.0
  %2817 = vmatpush2.msra.mxu0 0.0
  %2818 = vmatprep.subr.mxu0 0.0
  %2819 = vmatpush2.msra.mxu0 0.0
  %2820 = vmatprep.subr.mxu0 0.0
  %2821 = vmatpush2.msra.mxu0 0.0
  %2822 = vmatprep.subr.mxu0 0.0
  %2823 = vmatpush2.msra.mxu0 0.0
  %2824 = vmatprep.subr.mxu0 0.0
  %2825 = vmatpush2.msra.mxu0 0.0
  %2826 = vmatprep.subr.mxu0 0.0
  %2827 = vmatpush2.msra.mxu0 0.0
  %2828 = vmatprep.subr.mxu0 0.0
  %2829 = vmatpush2.msra.mxu0 0.0
  %2830 = vmatprep.subr.mxu0 0.0
  %2831 = vmatpush2.msra.mxu0 0.0
  %2832 = vmatprep.subr.mxu0 0.0
  %2833 = vmatpush2.msra.mxu0 0.0
  %2834 = vmatprep.subr.mxu0 0.0
  %2835 = vmatpush2.msra.mxu0 0.0
  %2836 = vmatprep.subr.mxu0 0.0
  %2837 = vmatpush2.msra.mxu0 0.0
  %2838 = vmatprep.subr.mxu0 0.0
  %2839 = vmatpush2.msra.mxu0 0.0
  %2840 = vmatprep.mubr.f32.mxu0 0.0
  %2841 = vmatmul.mubr.f32.gmra.mxu0 %v2771
  %v2842 = vpop.f32.mrf.mxu0
  %v2843 = vadd.f32 %v2769, %v2842
  %v2844 = vpop.f32.mrf.mxu0
  %2845 = vmatprep.mubr.f32.mxu0 0.0
  %2846 = vmatmul.mubr.f32.gmra.mxu0 %v2774
  %v2847 = vpop.f32.mrf.mxu0
  %v2848 = vadd.f32 %v2769, %v2847
  %v2849 = vpop.f32.mrf.mxu0
  %2850 = vdwg.mxu0
  %v2851 = vadd.f32 %v2843, %v2657
  %v2852 = vadd.f32 %v2848, %v2658
  %v2853 = vld [vmem:[%s8 + $0x8] sm:$0x1]
  %v2854 = vld [vmem:[%s8 + $0x9] sm:$0x1]
  %v2855 = vsel %vm137, %v2851, 0.0
  %2856 = vadd.xlane.f32.xlu0 %v2855
  %v2857 = vpop.xlane.xlu0 %2856
  %v2858 = vsel %vm137, %v2852, 0.0
  %2859 = vadd.xlane.f32.xlu0 %v2858
  %v2860 = vpop.xlane.xlu0 %2859
  %v2861 = vmul.f32 %v2857, %v2626
  %v2862 = vmul.f32 %v2860, %v2626
  %v2863 = vsub.f32 %v2851, %v2861
  %v2864 = vsub.f32 %v2852, %v2862
  %v2865 = vmul.f32 %v2863, %v2863
  %v2866 = vmul.f32 %v2864, %v2864
  %v2867 = vsel %vm137, %v2865, 0.0
  %2868 = vadd.xlane.f32.xlu0 %v2867
  %v2869 = vpop.xlane.xlu0 %2868
  %v2870 = vsel %vm137, %v2866, 0.0
  %2871 = vadd.xlane.f32.xlu0 %v2870
  %v2872 = vpop.xlane.xlu0 %2871
  %v2873 = vmul.f32 %v2869, %v2626
  %v2874 = vmul.f32 %v2872, %v2626
  %v2875 = vadd.f32 %v2873, 1e-12
  %v2876 = vadd.f32 %v2874, 1e-12
  %v2877 = vrsqrt.pop %v2875
  %v2878 = vrsqrt.pop %v2876
  %v2879 = vmul.f32 %v2863, %v2877
  %v2880 = vmul.f32 %v2864, %v2878
  %v2881 = vlaneseq
  %v2882 = vshrl.u32 %v2881, 7
  %v2883 = vsub.s32 0, %v2882
  %v2884 = vrot.slane %v2853, %v2883
  %v2885 = vmul.f32 %v2879, %v2884
  %v2886 = vmul.f32 %v2880, %v2884
  %v2887 = vlaneseq
  %v2888 = vshrl.u32 %v2887, 7
  %v2889 = vsub.s32 0, %v2888
  %v2890 = vrot.slane %v2854, %v2889
  %v2891 = vadd.f32 %v2885, %v2890
  %v2892 = vadd.f32 %v2886, %v2890
  %v2893 = vld [vmem:[%s8 + $0xa] sm:$0x1]
  %v2894 = vld [vmem:[%s8 + $0xb] sm:$0x1]
  %2896 = vset.pattern.permute.xlu0 0
  %2897 = vperm.xlu0 %2896, %v2894
  %v2898 = vpop.permute.xlu0 %2897
  %v2901 = vsel %vm137, %v2893, 0
  %v2904 = vsel %vm137, %v2891, 0
  %v2907 = vsel %vm137, %v2892, 0
  %2909 = vmatprep.subr.mxu0 0.0
  %2910 = vmatpush1.xpose.msra.mxu0 0.0
  %2911 = vmatprep.subr.mxu0 0.0
  %2912 = vmatpush1.xpose.msra.mxu0 0.0
  %2913 = vmatprep.subr.mxu0 0.0
  %2914 = vmatpush1.xpose.msra.mxu0 0.0
  %2915 = vmatprep.subr.mxu0 0.0
  %2916 = vmatpush1.xpose.msra.mxu0 0.0
  %2917 = vmatprep.subr.mxu0 0.0
  %2918 = vmatpush1.xpose.msra.mxu0 0.0
  %2919 = vmatprep.subr.mxu0 0.0
  %2920 = vmatpush1.xpose.msra.mxu0 0.0
  %2921 = vmatprep.subr.mxu0 0.0
  %2922 = vmatpush1.xpose.msra.mxu0 0.0
  %2923 = vmatprep.subr.mxu0 0.0
  %2924 = vmatpush1.xpose.msra.mxu0 0.0
  %2925 = vmatprep.subr.mxu0 0.0
  %2926 = vmatpush1.xpose.msra.mxu0 0.0
  %2927 = vmatprep.subr.mxu0 0.0
  %2928 = vmatpush1.xpose.msra.mxu0 0.0
  %2929 = vmatprep.subr.mxu0 0.0
  %2930 = vmatpush1.xpose.msra.mxu0 0.0
  %2931 = vmatprep.subr.mxu0 0.0
  %2932 = vmatpush1.xpose.msra.mxu0 0.0
  %2933 = vmatprep.subr.mxu0 0.0
  %2934 = vmatpush1.xpose.msra.mxu0 0.0
  %2935 = vmatprep.subr.mxu0 0.0
  %2936 = vmatpush1.xpose.msra.mxu0 0.0
  %2937 = vmatprep.subr.mxu0 0.0
  %2938 = vmatpush1.xpose.msra.mxu0 %v2907
  %2939 = vmatprep.subr.mxu0 0.0
  %2940 = vmatpush1.xpose.msra.mxu0 %v2904
  %2941 = vmatprep.subr.mxu0 0.0
  %2942 = vmatpush2.xpose.msra.mxu0 0.0
  %2943 = vmatprep.subr.mxu0 0.0
  %2944 = vmatpush2.xpose.msra.mxu0 0.0
  %2945 = vmatprep.subr.mxu0 0.0
  %2946 = vmatpush2.xpose.msra.mxu0 0.0
  %2947 = vmatprep.subr.mxu0 0.0
  %2948 = vmatpush2.xpose.msra.mxu0 0.0
  %2949 = vmatprep.subr.mxu0 0.0
  %2950 = vmatpush2.xpose.msra.mxu0 0.0
  %2951 = vmatprep.subr.mxu0 0.0
  %2952 = vmatpush2.xpose.msra.mxu0 0.0
  %2953 = vmatprep.subr.mxu0 0.0
  %2954 = vmatpush2.xpose.msra.mxu0 0.0
  %2955 = vmatprep.subr.mxu0 0.0
  %2956 = vmatpush2.xpose.msra.mxu0 0.0
  %2957 = vmatprep.subr.mxu0 0.0
  %2958 = vmatpush2.xpose.msra.mxu0 0.0
  %2959 = vmatprep.subr.mxu0 0.0
  %2960 = vmatpush2.xpose.msra.mxu0 0.0
  %2961 = vmatprep.subr.mxu0 0.0
  %2962 = vmatpush2.xpose.msra.mxu0 0.0
  %2963 = vmatprep.subr.mxu0 0.0
  %2964 = vmatpush2.xpose.msra.mxu0 0.0
  %2965 = vmatprep.subr.mxu0 0.0
  %2966 = vmatpush2.xpose.msra.mxu0 0.0
  %2967 = vmatprep.subr.mxu0 0.0
  %2968 = vmatpush2.xpose.msra.mxu0 0.0
  %2969 = vmatprep.subr.mxu0 0.0
  %2970 = vmatpush2.xpose.msra.mxu0 0.0
  %2971 = vmatprep.subr.mxu0 0.0
  %2972 = vmatpush2.xpose.msra.mxu0 0.0
  %2973 = vmatprep.mubr.f32.mxu0 0.0
  %2974 = vmatmul.mubr.f32.gmra.mxu0 %v2901
  %v2975 = vpop.f32.mrf.mxu0
  %v2976 = vadd.f32 %v2898, %v2975
  %v2977 = vpop.f32.mrf.mxu0
  %2978 = vdwg.mxu0
  %vm2979 = vcmask 122880
  %2980 = vst.msk [vmem:[%s9] sm:$0x1] %vm2979, %v2976
  // Predicated region
  $region38: #{lstmattn_forward.1} parent=0 // pred_check
    _
  $region39: #{lstmattn_forward.1} parent=0 // pred_check_branch
    %2982 = sbr.rel (0) target = $region41
  $region40: #{lstmattn_forward.1} parent=0 // pred_region
    _
  $region41: #{lstmattn_forward.1} parent=0 // pred_fallthru
    _
  // Predicated region
  $region42: #{lstmattn_forward.1} parent=0 // pred_check
    _
  $region43: #{lstmattn_forward.1} parent=0 // pred_check_branch
    %2984 = sbr.rel (0) target = $region45
  $region44: #{lstmattn_forward.1} parent=0 // pred_region
    _
  $region45: #{lstmattn_forward.1} parent=0 // pred_fallthru
    _

</llo_original>
